<compile_context>
chip_gen: v6e
topology: v6e:2x2x1
jax: 0.10.0
libtpu: 0.0.40
codegen_flags: <defaults>
</compile_context>

<pallas_src>
import functools

import jax
import jax.numpy as jnp
import numpy as np
from jax.experimental import pallas as pl
from jax.experimental.pallas import tpu as pltpu

EPS = 1e-5


def _conv3x3_cm(x_cm, w_ref, mask_ref, W):
    """3x3 stride-1 'same' conv of one image in channel-major layout.

    x_cm:     (Cin, H*W) f32, flat spatial index on the lane axis.
    w_ref:    (9, Cout, Cin) ref, w_ref[dy*3+dx, co, ci] == w_hwio[dy, dx, ci, co].
    mask_ref: (9, 1, H*W) f32 ref of 0/1 boundary masks per tap.
    Returns   (Cout, H*W) f32.
    """
    Cin, HW = x_cm.shape
    Cout = w_ref.shape[1]
    acc = jnp.zeros((Cout, HW), jnp.float32)
    for dy in range(3):
        for dx in range(3):
            t = dy * 3 + dx
            off = (dy - 1) * W + (dx - 1)
            if off == 0:
                sh = x_cm                      # centre tap: no shift, no mask
            else:
                # shifted[p] = x[p + off] (cyclic); out-of-image taps zeroed.
                sh = pltpu.roll(x_cm, (-off) % HW, axis=1) * mask_ref[t]
            wt = w_ref[t]                      # (Cout, Cin)
            # Tiny channel contraction on the VPU: Cin broadcast FMAs keep the
            # (Cout, HW) accumulator lane-dense (no MXU, no im2col relayouts).
            for ci in range(Cin):
                acc = acc + wt[:, ci:ci + 1] * sh[ci:ci + 1, :]
    return acc


def _batch_stats(accs, count):
    """Single-pass per-channel mean / inv-std over a list of (C, HW) images."""
    s1 = accs[0].sum(axis=1, keepdims=True)
    s2 = (accs[0] * accs[0]).sum(axis=1, keepdims=True)
    for a in accs[1:]:
        s1 = s1 + a.sum(axis=1, keepdims=True)
        s2 = s2 + (a * a).sum(axis=1, keepdims=True)
    mu = s1 * (1.0 / count)
    var = s2 * (1.0 / count) - mu * mu         # E[x^2] - mu^2  (one pass)
    return mu, jax.lax.rsqrt(var + EPS)


def _basic_block_kernel(x_ref, mask_ref, w1_ref, w2_ref,
                        g1_ref, b1_ref, g2_ref, b2_ref, o_ref, *, W):
    N, C, HW = x_ref.shape
    count = float(N * HW)

    xs = [x_ref[n] for n in range(N)]          # (C, HW) per image; also residual

    # conv1 -> BN1 (training-mode batch stats) -> ReLU
    a1 = [_conv3x3_cm(xs[n], w1_ref, mask_ref, W) for n in range(N)]
    mu1, inv1 = _batch_stats(a1, count)
    scale1 = g1_ref[...] * inv1                # (C, 1)
    shift1 = b1_ref[...] - mu1 * scale1
    h = [jnp.maximum(a * scale1 + shift1, 0.0) for a in a1]

    # conv2 -> BN2 -> + identity -> ReLU
    a2 = [_conv3x3_cm(h[n], w2_ref, mask_ref, W) for n in range(N)]
    mu2, inv2 = _batch_stats(a2, count)
    scale2 = g2_ref[...] * inv2
    shift2 = b2_ref[...] - mu2 * scale2
    for n in range(N):
        o_ref[n] = (jnp.maximum(a2[n] * scale2 + shift2 + xs[n], 0.0)
                    ).astype(o_ref.dtype)


def _boundary_masks(H, W):
    """(9, 1, H*W) 0/1 masks: tap (dy,dx) valid iff (y+dy-1, x+dx-1) in image."""
    yy, xx = np.meshgrid(np.arange(H), np.arange(W), indexing="ij")
    m = np.zeros((9, 1, H * W), np.float32)
    for dy in range(3):
        for dx in range(3):
            oy, ox = dy - 1, dx - 1
            valid = ((yy + oy >= 0) & (yy + oy < H) &
                     (xx + ox >= 0) & (xx + ox < W))
            m[dy * 3 + dx, 0, :] = valid.reshape(-1)
    return m


@functools.partial(jax.jit, static_argnames=("tag",))
def basic_block_forward(x_nchw, params, tag="clean"):
    """x_nchw: (N, Cin, H, W) float32 (PyTorch layout). Returns (N, Cout, H, W)."""
    w1, w2 = params["conv1_w"], params["conv2_w"]      # (3,3,Cin,Cout) HWIO
    if tag == "clean":
        g1, b1 = params["clean_bn1_g"], params["clean_bn1_b"]
        g2, b2 = params["clean_bn2_g"], params["clean_bn2_b"]
    else:
        g1, b1 = params["adv_bn1_g"], params["adv_bn1_b"]
        g2, b2 = params["adv_bn2_g"], params["adv_bn2_b"]

    N, Cin, H, W = x_nchw.shape
    Cout = w1.shape[-1]
    # stride=1 / downsample=None module config: identity add needs Cin == Cout.
    assert Cin == Cout, "BasicBlock with downsample=None requires Cin == Cout"

    x_flat = x_nchw.reshape(N, Cin, H * W)             # free reshape of NCHW
    w1t = jnp.transpose(w1, (0, 1, 3, 2)).reshape(9, Cout, Cin)
    w2t = jnp.transpose(w2, (0, 1, 3, 2)).reshape(9, Cout, Cout)
    masks = jnp.asarray(_boundary_masks(H, W))          # compile-time constant

    out_flat = pl.pallas_call(
        functools.partial(_basic_block_kernel, W=W),
        out_shape=jax.ShapeDtypeStruct((N, Cout, H * W), x_nchw.dtype),
    )(x_flat, masks, w1t, w2t,
      g1.reshape(Cout, 1), b1.reshape(Cout, 1),
      g2.reshape(Cout, 1), b2.reshape(Cout, 1))

    return out_flat.reshape(N, Cout, H, W)


def basic_block_reference(x_nchw, params, tag="clean"):
    """Pure-JAX reference matching PyTorch BasicBlock.forward (train-mode BN)."""
    w1, w2 = params["conv1_w"], params["conv2_w"]
    if tag == "clean":
        g1, b1 = params["clean_bn1_g"], params["clean_bn1_b"]
        g2, b2 = params["clean_bn2_g"], params["clean_bn2_b"]
    else:
        g1, b1 = params["adv_bn1_g"], params["adv_bn1_b"]
        g2, b2 = params["adv_bn2_g"], params["adv_bn2_b"]

    xn = jnp.transpose(x_nchw, (0, 2, 3, 1))

    def conv(a, w):
        return jax.lax.conv_general_dilated(
            a, w, window_strides=(1, 1), padding=((1, 1), (1, 1)),
            dimension_numbers=("NHWC", "HWIO", "NHWC"))

    def bn(a, g, b):
        mu = jnp.mean(a, axis=(0, 1, 2), keepdims=True)
        var = jnp.mean((a - mu) ** 2, axis=(0, 1, 2), keepdims=True)
        return (a - mu) * jax.lax.rsqrt(var + EPS) * g + b

    h = jax.nn.relu(bn(conv(xn, w1), g1, b1))
    o = bn(conv(h, w2), g2, b2) + xn
    return jnp.transpose(jax.nn.relu(o), (0, 3, 1, 2))


if __name__ == "__main__":
    key = jax.random.PRNGKey(0)
    N, C, H, W = 2, 4, 16, 16           # inplanes = planes = 4, stride = 1
    ks = jax.random.split(key, 11)

    x = jax.random.normal(ks[0], (N, C, H, W), jnp.float32)
    params = {
        "conv1_w": 0.1 * jax.random.normal(ks[1], (3, 3, C, C), jnp.float32),
        "conv2_w": 0.1 * jax.random.normal(ks[2], (3, 3, C, C), jnp.float32),
        "clean_bn1_g": 1.0 + 0.1 * jax.random.normal(ks[3], (C,), jnp.float32),
        "clean_bn1_b": 0.1 * jax.random.normal(ks[4], (C,), jnp.float32),
        "clean_bn2_g": 1.0 + 0.1 * jax.random.normal(ks[5], (C,), jnp.float32),
        "clean_bn2_b": 0.1 * jax.random.normal(ks[6], (C,), jnp.float32),
        "adv_bn1_g": 1.0 + 0.1 * jax.random.normal(ks[7], (C,), jnp.float32),
        "adv_bn1_b": 0.1 * jax.random.normal(ks[8], (C,), jnp.float32),
        "adv_bn2_g": 1.0 + 0.1 * jax.random.normal(ks[9], (C,), jnp.float32),
        "adv_bn2_b": 0.1 * jax.random.normal(ks[10], (C,), jnp.float32),
    }

    out = jax.block_until_ready(basic_block_forward(x, params, tag="clean"))
    ref = jax.block_until_ready(basic_block_reference(x, params, tag="clean"))

    assert out.shape == (N, C, H, W) and out.dtype == jnp.float32
    np.testing.assert_allclose(np.asarray(out), np.asarray(ref),
                               atol=2e-4, rtol=2e-4)
    print("KERNEL_OK")
</pallas_src>

<mosaic_0001>
module attributes {stable_mosaic.version = 11 : i64} {
  func.func @_basic_block_kernel(%arg0: memref<2x4x256xf32, #tpu.memory_space<vmem>>, %arg1: memref<9x1x256xf32, #tpu.memory_space<vmem>>, %arg2: memref<9x4x4xf32, #tpu.memory_space<vmem>>, %arg3: memref<9x4x4xf32, #tpu.memory_space<vmem>>, %arg4: memref<4x1xf32, #tpu.memory_space<vmem>>, %arg5: memref<4x1xf32, #tpu.memory_space<vmem>>, %arg6: memref<4x1xf32, #tpu.memory_space<vmem>>, %arg7: memref<4x1xf32, #tpu.memory_space<vmem>>, %arg8: memref<2x4x256xf32, #tpu.memory_space<vmem>>) attributes {dimension_semantics = [], scalar_prefetch = 0 : i64, scratch_operands = 0 : i64, tpu.core_type = #tpu.core_type<tc>} {
    %c0 = arith.constant 0 : index
    %c0_0 = arith.constant 0 : index
    %c0_1 = arith.constant 0 : index
    %0 = vector.load %arg0[%c0, %c0_0, %c0_1] : memref<2x4x256xf32, #tpu.memory_space<vmem>>, vector<1x4x256xf32>
    %1 = vector.shape_cast %0 : vector<1x4x256xf32> to vector<4x256xf32>
    %c1 = arith.constant 1 : index
    %c0_2 = arith.constant 0 : index
    %c0_3 = arith.constant 0 : index
    %2 = vector.load %arg0[%c1, %c0_2, %c0_3] : memref<2x4x256xf32, #tpu.memory_space<vmem>>, vector<1x4x256xf32>
    %3 = vector.shape_cast %2 : vector<1x4x256xf32> to vector<4x256xf32>
    %cst = arith.constant 0.000000e+00 : f32
    %4 = vector.broadcast %cst : f32 to vector<4x256xf32>
    %c17_i32 = arith.constant 17 : i32
    %5 = tpu.dynamic_rotate %1 by %c17_i32 dim 1 : vector<4x256xf32>, i32 -> vector<4x256xf32>
    %c0_4 = arith.constant 0 : index
    %c0_5 = arith.constant 0 : index
    %c0_6 = arith.constant 0 : index
    %6 = vector.load %arg1[%c0_4, %c0_5, %c0_6] : memref<9x1x256xf32, #tpu.memory_space<vmem>>, vector<1x1x256xf32>
    %7 = vector.shape_cast %6 : vector<1x1x256xf32> to vector<1x256xf32>
    %8 = vector.broadcast %7 : vector<1x256xf32> to vector<4x256xf32>
    %9 = arith.mulf %5, %8 : vector<4x256xf32>
    %c0_7 = arith.constant 0 : index
    %c0_8 = arith.constant 0 : index
    %c0_9 = arith.constant 0 : index
    %10 = vector.load %arg2[%c0_7, %c0_8, %c0_9] : memref<9x4x4xf32, #tpu.memory_space<vmem>>, vector<1x4x4xf32>
    %11 = vector.shape_cast %10 : vector<1x4x4xf32> to vector<4x4xf32>
    %12 = vector.extract_strided_slice %11 {offsets = [0, 0], sizes = [4, 1], strides = [1, 1]} : vector<4x4xf32> to vector<4x1xf32>
    %13 = vector.extract_strided_slice %9 {offsets = [0, 0], sizes = [1, 256], strides = [1, 1]} : vector<4x256xf32> to vector<1x256xf32>
    %14 = vector.broadcast %12 : vector<4x1xf32> to vector<4x256xf32>
    %15 = vector.broadcast %13 : vector<1x256xf32> to vector<4x256xf32>
    %16 = arith.mulf %14, %15 : vector<4x256xf32>
    %17 = arith.addf %4, %16 : vector<4x256xf32>
    %18 = vector.extract_strided_slice %11 {offsets = [0, 1], sizes = [4, 1], strides = [1, 1]} : vector<4x4xf32> to vector<4x1xf32>
    %19 = vector.extract_strided_slice %9 {offsets = [1, 0], sizes = [1, 256], strides = [1, 1]} : vector<4x256xf32> to vector<1x256xf32>
    %20 = vector.broadcast %18 : vector<4x1xf32> to vector<4x256xf32>
    %21 = vector.broadcast %19 : vector<1x256xf32> to vector<4x256xf32>
    %22 = arith.mulf %20, %21 : vector<4x256xf32>
    %23 = arith.addf %17, %22 : vector<4x256xf32>
    %24 = vector.extract_strided_slice %11 {offsets = [0, 2], sizes = [4, 1], strides = [1, 1]} : vector<4x4xf32> to vector<4x1xf32>
    %25 = vector.extract_strided_slice %9 {offsets = [2, 0], sizes = [1, 256], strides = [1, 1]} : vector<4x256xf32> to vector<1x256xf32>
    %26 = vector.broadcast %24 : vector<4x1xf32> to vector<4x256xf32>
    %27 = vector.broadcast %25 : vector<1x256xf32> to vector<4x256xf32>
    %28 = arith.mulf %26, %27 : vector<4x256xf32>
    %29 = arith.addf %23, %28 : vector<4x256xf32>
    %30 = vector.extract_strided_slice %11 {offsets = [0, 3], sizes = [4, 1], strides = [1, 1]} : vector<4x4xf32> to vector<4x1xf32>
    %31 = vector.extract_strided_slice %9 {offsets = [3, 0], sizes = [1, 256], strides = [1, 1]} : vector<4x256xf32> to vector<1x256xf32>
    %32 = vector.broadcast %30 : vector<4x1xf32> to vector<4x256xf32>
    %33 = vector.broadcast %31 : vector<1x256xf32> to vector<4x256xf32>
    %34 = arith.mulf %32, %33 : vector<4x256xf32>
    %35 = arith.addf %29, %34 : vector<4x256xf32>
    %c16_i32 = arith.constant 16 : i32
    %36 = tpu.dynamic_rotate %1 by %c16_i32 dim 1 : vector<4x256xf32>, i32 -> vector<4x256xf32>
    %c1_10 = arith.constant 1 : index
    %c0_11 = arith.constant 0 : index
    %c0_12 = arith.constant 0 : index
    %37 = vector.load %arg1[%c1_10, %c0_11, %c0_12] : memref<9x1x256xf32, #tpu.memory_space<vmem>>, vector<1x1x256xf32>
    %38 = vector.shape_cast %37 : vector<1x1x256xf32> to vector<1x256xf32>
    %39 = vector.broadcast %38 : vector<1x256xf32> to vector<4x256xf32>
    %40 = arith.mulf %36, %39 : vector<4x256xf32>
    %c1_13 = arith.constant 1 : index
    %c0_14 = arith.constant 0 : index
    %c0_15 = arith.constant 0 : index
    %41 = vector.load %arg2[%c1_13, %c0_14, %c0_15] : memref<9x4x4xf32, #tpu.memory_space<vmem>>, vector<1x4x4xf32>
    %42 = vector.shape_cast %41 : vector<1x4x4xf32> to vector<4x4xf32>
    %43 = vector.extract_strided_slice %42 {offsets = [0, 0], sizes = [4, 1], strides = [1, 1]} : vector<4x4xf32> to vector<4x1xf32>
    %44 = vector.extract_strided_slice %40 {offsets = [0, 0], sizes = [1, 256], strides = [1, 1]} : vector<4x256xf32> to vector<1x256xf32>
    %45 = vector.broadcast %43 : vector<4x1xf32> to vector<4x256xf32>
    %46 = vector.broadcast %44 : vector<1x256xf32> to vector<4x256xf32>
    %47 = arith.mulf %45, %46 : vector<4x256xf32>
    %48 = arith.addf %35, %47 : vector<4x256xf32>
    %49 = vector.extract_strided_slice %42 {offsets = [0, 1], sizes = [4, 1], strides = [1, 1]} : vector<4x4xf32> to vector<4x1xf32>
    %50 = vector.extract_strided_slice %40 {offsets = [1, 0], sizes = [1, 256], strides = [1, 1]} : vector<4x256xf32> to vector<1x256xf32>
    %51 = vector.broadcast %49 : vector<4x1xf32> to vector<4x256xf32>
    %52 = vector.broadcast %50 : vector<1x256xf32> to vector<4x256xf32>
    %53 = arith.mulf %51, %52 : vector<4x256xf32>
    %54 = arith.addf %48, %53 : vector<4x256xf32>
    %55 = vector.extract_strided_slice %42 {offsets = [0, 2], sizes = [4, 1], strides = [1, 1]} : vector<4x4xf32> to vector<4x1xf32>
    %56 = vector.extract_strided_slice %40 {offsets = [2, 0], sizes = [1, 256], strides = [1, 1]} : vector<4x256xf32> to vector<1x256xf32>
    %57 = vector.broadcast %55 : vector<4x1xf32> to vector<4x256xf32>
    %58 = vector.broadcast %56 : vector<1x256xf32> to vector<4x256xf32>
    %59 = arith.mulf %57, %58 : vector<4x256xf32>
    %60 = arith.addf %54, %59 : vector<4x256xf32>
    %61 = vector.extract_strided_slice %42 {offsets = [0, 3], sizes = [4, 1], strides = [1, 1]} : vector<4x4xf32> to vector<4x1xf32>
    %62 = vector.extract_strided_slice %40 {offsets = [3, 0], sizes = [1, 256], strides = [1, 1]} : vector<4x256xf32> to vector<1x256xf32>
    %63 = vector.broadcast %61 : vector<4x1xf32> to vector<4x256xf32>
    %64 = vector.broadcast %62 : vector<1x256xf32> to vector<4x256xf32>
    %65 = arith.mulf %63, %64 : vector<4x256xf32>
    %66 = arith.addf %60, %65 : vector<4x256xf32>
    %c15_i32 = arith.constant 15 : i32
    %67 = tpu.dynamic_rotate %1 by %c15_i32 dim 1 : vector<4x256xf32>, i32 -> vector<4x256xf32>
    %c2 = arith.constant 2 : index
    %c0_16 = arith.constant 0 : index
    %c0_17 = arith.constant 0 : index
    %68 = vector.load %arg1[%c2, %c0_16, %c0_17] : memref<9x1x256xf32, #tpu.memory_space<vmem>>, vector<1x1x256xf32>
    %69 = vector.shape_cast %68 : vector<1x1x256xf32> to vector<1x256xf32>
    %70 = vector.broadcast %69 : vector<1x256xf32> to vector<4x256xf32>
    %71 = arith.mulf %67, %70 : vector<4x256xf32>
    %c2_18 = arith.constant 2 : index
    %c0_19 = arith.constant 0 : index
    %c0_20 = arith.constant 0 : index
    %72 = vector.load %arg2[%c2_18, %c0_19, %c0_20] : memref<9x4x4xf32, #tpu.memory_space<vmem>>, vector<1x4x4xf32>
    %73 = vector.shape_cast %72 : vector<1x4x4xf32> to vector<4x4xf32>
    %74 = vector.extract_strided_slice %73 {offsets = [0, 0], sizes = [4, 1], strides = [1, 1]} : vector<4x4xf32> to vector<4x1xf32>
    %75 = vector.extract_strided_slice %71 {offsets = [0, 0], sizes = [1, 256], strides = [1, 1]} : vector<4x256xf32> to vector<1x256xf32>
    %76 = vector.broadcast %74 : vector<4x1xf32> to vector<4x256xf32>
    %77 = vector.broadcast %75 : vector<1x256xf32> to vector<4x256xf32>
    %78 = arith.mulf %76, %77 : vector<4x256xf32>
    %79 = arith.addf %66, %78 : vector<4x256xf32>
    %80 = vector.extract_strided_slice %73 {offsets = [0, 1], sizes = [4, 1], strides = [1, 1]} : vector<4x4xf32> to vector<4x1xf32>
    %81 = vector.extract_strided_slice %71 {offsets = [1, 0], sizes = [1, 256], strides = [1, 1]} : vector<4x256xf32> to vector<1x256xf32>
    %82 = vector.broadcast %80 : vector<4x1xf32> to vector<4x256xf32>
    %83 = vector.broadcast %81 : vector<1x256xf32> to vector<4x256xf32>
    %84 = arith.mulf %82, %83 : vector<4x256xf32>
    %85 = arith.addf %79, %84 : vector<4x256xf32>
    %86 = vector.extract_strided_slice %73 {offsets = [0, 2], sizes = [4, 1], strides = [1, 1]} : vector<4x4xf32> to vector<4x1xf32>
    %87 = vector.extract_strided_slice %71 {offsets = [2, 0], sizes = [1, 256], strides = [1, 1]} : vector<4x256xf32> to vector<1x256xf32>
    %88 = vector.broadcast %86 : vector<4x1xf32> to vector<4x256xf32>
    %89 = vector.broadcast %87 : vector<1x256xf32> to vector<4x256xf32>
    %90 = arith.mulf %88, %89 : vector<4x256xf32>
    %91 = arith.addf %85, %90 : vector<4x256xf32>
    %92 = vector.extract_strided_slice %73 {offsets = [0, 3], sizes = [4, 1], strides = [1, 1]} : vector<4x4xf32> to vector<4x1xf32>
    %93 = vector.extract_strided_slice %71 {offsets = [3, 0], sizes = [1, 256], strides = [1, 1]} : vector<4x256xf32> to vector<1x256xf32>
    %94 = vector.broadcast %92 : vector<4x1xf32> to vector<4x256xf32>
    %95 = vector.broadcast %93 : vector<1x256xf32> to vector<4x256xf32>
    %96 = arith.mulf %94, %95 : vector<4x256xf32>
    %97 = arith.addf %91, %96 : vector<4x256xf32>
    %c1_i32 = arith.constant 1 : i32
    %98 = tpu.dynamic_rotate %1 by %c1_i32 dim 1 : vector<4x256xf32>, i32 -> vector<4x256xf32>
    %c3 = arith.constant 3 : index
    %c0_21 = arith.constant 0 : index
    %c0_22 = arith.constant 0 : index
    %99 = vector.load %arg1[%c3, %c0_21, %c0_22] : memref<9x1x256xf32, #tpu.memory_space<vmem>>, vector<1x1x256xf32>
    %100 = vector.shape_cast %99 : vector<1x1x256xf32> to vector<1x256xf32>
    %101 = vector.broadcast %100 : vector<1x256xf32> to vector<4x256xf32>
    %102 = arith.mulf %98, %101 : vector<4x256xf32>
    %c3_23 = arith.constant 3 : index
    %c0_24 = arith.constant 0 : index
    %c0_25 = arith.constant 0 : index
    %103 = vector.load %arg2[%c3_23, %c0_24, %c0_25] : memref<9x4x4xf32, #tpu.memory_space<vmem>>, vector<1x4x4xf32>
    %104 = vector.shape_cast %103 : vector<1x4x4xf32> to vector<4x4xf32>
    %105 = vector.extract_strided_slice %104 {offsets = [0, 0], sizes = [4, 1], strides = [1, 1]} : vector<4x4xf32> to vector<4x1xf32>
    %106 = vector.extract_strided_slice %102 {offsets = [0, 0], sizes = [1, 256], strides = [1, 1]} : vector<4x256xf32> to vector<1x256xf32>
    %107 = vector.broadcast %105 : vector<4x1xf32> to vector<4x256xf32>
    %108 = vector.broadcast %106 : vector<1x256xf32> to vector<4x256xf32>
    %109 = arith.mulf %107, %108 : vector<4x256xf32>
    %110 = arith.addf %97, %109 : vector<4x256xf32>
    %111 = vector.extract_strided_slice %104 {offsets = [0, 1], sizes = [4, 1], strides = [1, 1]} : vector<4x4xf32> to vector<4x1xf32>
    %112 = vector.extract_strided_slice %102 {offsets = [1, 0], sizes = [1, 256], strides = [1, 1]} : vector<4x256xf32> to vector<1x256xf32>
    %113 = vector.broadcast %111 : vector<4x1xf32> to vector<4x256xf32>
    %114 = vector.broadcast %112 : vector<1x256xf32> to vector<4x256xf32>
    %115 = arith.mulf %113, %114 : vector<4x256xf32>
    %116 = arith.addf %110, %115 : vector<4x256xf32>
    %117 = vector.extract_strided_slice %104 {offsets = [0, 2], sizes = [4, 1], strides = [1, 1]} : vector<4x4xf32> to vector<4x1xf32>
    %118 = vector.extract_strided_slice %102 {offsets = [2, 0], sizes = [1, 256], strides = [1, 1]} : vector<4x256xf32> to vector<1x256xf32>
    %119 = vector.broadcast %117 : vector<4x1xf32> to vector<4x256xf32>
    %120 = vector.broadcast %118 : vector<1x256xf32> to vector<4x256xf32>
    %121 = arith.mulf %119, %120 : vector<4x256xf32>
    %122 = arith.addf %116, %121 : vector<4x256xf32>
    %123 = vector.extract_strided_slice %104 {offsets = [0, 3], sizes = [4, 1], strides = [1, 1]} : vector<4x4xf32> to vector<4x1xf32>
    %124 = vector.extract_strided_slice %102 {offsets = [3, 0], sizes = [1, 256], strides = [1, 1]} : vector<4x256xf32> to vector<1x256xf32>
    %125 = vector.broadcast %123 : vector<4x1xf32> to vector<4x256xf32>
    %126 = vector.broadcast %124 : vector<1x256xf32> to vector<4x256xf32>
    %127 = arith.mulf %125, %126 : vector<4x256xf32>
    %128 = arith.addf %122, %127 : vector<4x256xf32>
    %c4 = arith.constant 4 : index
    %c0_26 = arith.constant 0 : index
    %c0_27 = arith.constant 0 : index
    %129 = vector.load %arg2[%c4, %c0_26, %c0_27] : memref<9x4x4xf32, #tpu.memory_space<vmem>>, vector<1x4x4xf32>
    %130 = vector.shape_cast %129 : vector<1x4x4xf32> to vector<4x4xf32>
    %131 = vector.extract_strided_slice %130 {offsets = [0, 0], sizes = [4, 1], strides = [1, 1]} : vector<4x4xf32> to vector<4x1xf32>
    %132 = vector.extract_strided_slice %1 {offsets = [0, 0], sizes = [1, 256], strides = [1, 1]} : vector<4x256xf32> to vector<1x256xf32>
    %133 = vector.broadcast %131 : vector<4x1xf32> to vector<4x256xf32>
    %134 = vector.broadcast %132 : vector<1x256xf32> to vector<4x256xf32>
    %135 = arith.mulf %133, %134 : vector<4x256xf32>
    %136 = arith.addf %128, %135 : vector<4x256xf32>
    %137 = vector.extract_strided_slice %130 {offsets = [0, 1], sizes = [4, 1], strides = [1, 1]} : vector<4x4xf32> to vector<4x1xf32>
    %138 = vector.extract_strided_slice %1 {offsets = [1, 0], sizes = [1, 256], strides = [1, 1]} : vector<4x256xf32> to vector<1x256xf32>
    %139 = vector.broadcast %137 : vector<4x1xf32> to vector<4x256xf32>
    %140 = vector.broadcast %138 : vector<1x256xf32> to vector<4x256xf32>
    %141 = arith.mulf %139, %140 : vector<4x256xf32>
    %142 = arith.addf %136, %141 : vector<4x256xf32>
    %143 = vector.extract_strided_slice %130 {offsets = [0, 2], sizes = [4, 1], strides = [1, 1]} : vector<4x4xf32> to vector<4x1xf32>
    %144 = vector.extract_strided_slice %1 {offsets = [2, 0], sizes = [1, 256], strides = [1, 1]} : vector<4x256xf32> to vector<1x256xf32>
    %145 = vector.broadcast %143 : vector<4x1xf32> to vector<4x256xf32>
    %146 = vector.broadcast %144 : vector<1x256xf32> to vector<4x256xf32>
    %147 = arith.mulf %145, %146 : vector<4x256xf32>
    %148 = arith.addf %142, %147 : vector<4x256xf32>
    %149 = vector.extract_strided_slice %130 {offsets = [0, 3], sizes = [4, 1], strides = [1, 1]} : vector<4x4xf32> to vector<4x1xf32>
    %150 = vector.extract_strided_slice %1 {offsets = [3, 0], sizes = [1, 256], strides = [1, 1]} : vector<4x256xf32> to vector<1x256xf32>
    %151 = vector.broadcast %149 : vector<4x1xf32> to vector<4x256xf32>
    %152 = vector.broadcast %150 : vector<1x256xf32> to vector<4x256xf32>
    %153 = arith.mulf %151, %152 : vector<4x256xf32>
    %154 = arith.addf %148, %153 : vector<4x256xf32>
    %c255_i32 = arith.constant 255 : i32
    %155 = tpu.dynamic_rotate %1 by %c255_i32 dim 1 : vector<4x256xf32>, i32 -> vector<4x256xf32>
    %c5 = arith.constant 5 : index
    %c0_28 = arith.constant 0 : index
    %c0_29 = arith.constant 0 : index
    %156 = vector.load %arg1[%c5, %c0_28, %c0_29] : memref<9x1x256xf32, #tpu.memory_space<vmem>>, vector<1x1x256xf32>
    %157 = vector.shape_cast %156 : vector<1x1x256xf32> to vector<1x256xf32>
    %158 = vector.broadcast %157 : vector<1x256xf32> to vector<4x256xf32>
    %159 = arith.mulf %155, %158 : vector<4x256xf32>
    %c5_30 = arith.constant 5 : index
    %c0_31 = arith.constant 0 : index
    %c0_32 = arith.constant 0 : index
    %160 = vector.load %arg2[%c5_30, %c0_31, %c0_32] : memref<9x4x4xf32, #tpu.memory_space<vmem>>, vector<1x4x4xf32>
    %161 = vector.shape_cast %160 : vector<1x4x4xf32> to vector<4x4xf32>
    %162 = vector.extract_strided_slice %161 {offsets = [0, 0], sizes = [4, 1], strides = [1, 1]} : vector<4x4xf32> to vector<4x1xf32>
    %163 = vector.extract_strided_slice %159 {offsets = [0, 0], sizes = [1, 256], strides = [1, 1]} : vector<4x256xf32> to vector<1x256xf32>
    %164 = vector.broadcast %162 : vector<4x1xf32> to vector<4x256xf32>
    %165 = vector.broadcast %163 : vector<1x256xf32> to vector<4x256xf32>
    %166 = arith.mulf %164, %165 : vector<4x256xf32>
    %167 = arith.addf %154, %166 : vector<4x256xf32>
    %168 = vector.extract_strided_slice %161 {offsets = [0, 1], sizes = [4, 1], strides = [1, 1]} : vector<4x4xf32> to vector<4x1xf32>
    %169 = vector.extract_strided_slice %159 {offsets = [1, 0], sizes = [1, 256], strides = [1, 1]} : vector<4x256xf32> to vector<1x256xf32>
    %170 = vector.broadcast %168 : vector<4x1xf32> to vector<4x256xf32>
    %171 = vector.broadcast %169 : vector<1x256xf32> to vector<4x256xf32>
    %172 = arith.mulf %170, %171 : vector<4x256xf32>
    %173 = arith.addf %167, %172 : vector<4x256xf32>
    %174 = vector.extract_strided_slice %161 {offsets = [0, 2], sizes = [4, 1], strides = [1, 1]} : vector<4x4xf32> to vector<4x1xf32>
    %175 = vector.extract_strided_slice %159 {offsets = [2, 0], sizes = [1, 256], strides = [1, 1]} : vector<4x256xf32> to vector<1x256xf32>
    %176 = vector.broadcast %174 : vector<4x1xf32> to vector<4x256xf32>
    %177 = vector.broadcast %175 : vector<1x256xf32> to vector<4x256xf32>
    %178 = arith.mulf %176, %177 : vector<4x256xf32>
    %179 = arith.addf %173, %178 : vector<4x256xf32>
    %180 = vector.extract_strided_slice %161 {offsets = [0, 3], sizes = [4, 1], strides = [1, 1]} : vector<4x4xf32> to vector<4x1xf32>
    %181 = vector.extract_strided_slice %159 {offsets = [3, 0], sizes = [1, 256], strides = [1, 1]} : vector<4x256xf32> to vector<1x256xf32>
    %182 = vector.broadcast %180 : vector<4x1xf32> to vector<4x256xf32>
    %183 = vector.broadcast %181 : vector<1x256xf32> to vector<4x256xf32>
    %184 = arith.mulf %182, %183 : vector<4x256xf32>
    %185 = arith.addf %179, %184 : vector<4x256xf32>
    %c241_i32 = arith.constant 241 : i32
    %186 = tpu.dynamic_rotate %1 by %c241_i32 dim 1 : vector<4x256xf32>, i32 -> vector<4x256xf32>
    %c6 = arith.constant 6 : index
    %c0_33 = arith.constant 0 : index
    %c0_34 = arith.constant 0 : index
    %187 = vector.load %arg1[%c6, %c0_33, %c0_34] : memref<9x1x256xf32, #tpu.memory_space<vmem>>, vector<1x1x256xf32>
    %188 = vector.shape_cast %187 : vector<1x1x256xf32> to vector<1x256xf32>
    %189 = vector.broadcast %188 : vector<1x256xf32> to vector<4x256xf32>
    %190 = arith.mulf %186, %189 : vector<4x256xf32>
    %c6_35 = arith.constant 6 : index
    %c0_36 = arith.constant 0 : index
    %c0_37 = arith.constant 0 : index
    %191 = vector.load %arg2[%c6_35, %c0_36, %c0_37] : memref<9x4x4xf32, #tpu.memory_space<vmem>>, vector<1x4x4xf32>
    %192 = vector.shape_cast %191 : vector<1x4x4xf32> to vector<4x4xf32>
    %193 = vector.extract_strided_slice %192 {offsets = [0, 0], sizes = [4, 1], strides = [1, 1]} : vector<4x4xf32> to vector<4x1xf32>
    %194 = vector.extract_strided_slice %190 {offsets = [0, 0], sizes = [1, 256], strides = [1, 1]} : vector<4x256xf32> to vector<1x256xf32>
    %195 = vector.broadcast %193 : vector<4x1xf32> to vector<4x256xf32>
    %196 = vector.broadcast %194 : vector<1x256xf32> to vector<4x256xf32>
    %197 = arith.mulf %195, %196 : vector<4x256xf32>
    %198 = arith.addf %185, %197 : vector<4x256xf32>
    %199 = vector.extract_strided_slice %192 {offsets = [0, 1], sizes = [4, 1], strides = [1, 1]} : vector<4x4xf32> to vector<4x1xf32>
    %200 = vector.extract_strided_slice %190 {offsets = [1, 0], sizes = [1, 256], strides = [1, 1]} : vector<4x256xf32> to vector<1x256xf32>
    %201 = vector.broadcast %199 : vector<4x1xf32> to vector<4x256xf32>
    %202 = vector.broadcast %200 : vector<1x256xf32> to vector<4x256xf32>
    %203 = arith.mulf %201, %202 : vector<4x256xf32>
    %204 = arith.addf %198, %203 : vector<4x256xf32>
    %205 = vector.extract_strided_slice %192 {offsets = [0, 2], sizes = [4, 1], strides = [1, 1]} : vector<4x4xf32> to vector<4x1xf32>
    %206 = vector.extract_strided_slice %190 {offsets = [2, 0], sizes = [1, 256], strides = [1, 1]} : vector<4x256xf32> to vector<1x256xf32>
    %207 = vector.broadcast %205 : vector<4x1xf32> to vector<4x256xf32>
    %208 = vector.broadcast %206 : vector<1x256xf32> to vector<4x256xf32>
    %209 = arith.mulf %207, %208 : vector<4x256xf32>
    %210 = arith.addf %204, %209 : vector<4x256xf32>
    %211 = vector.extract_strided_slice %192 {offsets = [0, 3], sizes = [4, 1], strides = [1, 1]} : vector<4x4xf32> to vector<4x1xf32>
    %212 = vector.extract_strided_slice %190 {offsets = [3, 0], sizes = [1, 256], strides = [1, 1]} : vector<4x256xf32> to vector<1x256xf32>
    %213 = vector.broadcast %211 : vector<4x1xf32> to vector<4x256xf32>
    %214 = vector.broadcast %212 : vector<1x256xf32> to vector<4x256xf32>
    %215 = arith.mulf %213, %214 : vector<4x256xf32>
    %216 = arith.addf %210, %215 : vector<4x256xf32>
    %c240_i32 = arith.constant 240 : i32
    %217 = tpu.dynamic_rotate %1 by %c240_i32 dim 1 : vector<4x256xf32>, i32 -> vector<4x256xf32>
    %c7 = arith.constant 7 : index
    %c0_38 = arith.constant 0 : index
    %c0_39 = arith.constant 0 : index
    %218 = vector.load %arg1[%c7, %c0_38, %c0_39] : memref<9x1x256xf32, #tpu.memory_space<vmem>>, vector<1x1x256xf32>
    %219 = vector.shape_cast %218 : vector<1x1x256xf32> to vector<1x256xf32>
    %220 = vector.broadcast %219 : vector<1x256xf32> to vector<4x256xf32>
    %221 = arith.mulf %217, %220 : vector<4x256xf32>
    %c7_40 = arith.constant 7 : index
    %c0_41 = arith.constant 0 : index
    %c0_42 = arith.constant 0 : index
    %222 = vector.load %arg2[%c7_40, %c0_41, %c0_42] : memref<9x4x4xf32, #tpu.memory_space<vmem>>, vector<1x4x4xf32>
    %223 = vector.shape_cast %222 : vector<1x4x4xf32> to vector<4x4xf32>
    %224 = vector.extract_strided_slice %223 {offsets = [0, 0], sizes = [4, 1], strides = [1, 1]} : vector<4x4xf32> to vector<4x1xf32>
    %225 = vector.extract_strided_slice %221 {offsets = [0, 0], sizes = [1, 256], strides = [1, 1]} : vector<4x256xf32> to vector<1x256xf32>
    %226 = vector.broadcast %224 : vector<4x1xf32> to vector<4x256xf32>
    %227 = vector.broadcast %225 : vector<1x256xf32> to vector<4x256xf32>
    %228 = arith.mulf %226, %227 : vector<4x256xf32>
    %229 = arith.addf %216, %228 : vector<4x256xf32>
    %230 = vector.extract_strided_slice %223 {offsets = [0, 1], sizes = [4, 1], strides = [1, 1]} : vector<4x4xf32> to vector<4x1xf32>
    %231 = vector.extract_strided_slice %221 {offsets = [1, 0], sizes = [1, 256], strides = [1, 1]} : vector<4x256xf32> to vector<1x256xf32>
    %232 = vector.broadcast %230 : vector<4x1xf32> to vector<4x256xf32>
    %233 = vector.broadcast %231 : vector<1x256xf32> to vector<4x256xf32>
    %234 = arith.mulf %232, %233 : vector<4x256xf32>
    %235 = arith.addf %229, %234 : vector<4x256xf32>
    %236 = vector.extract_strided_slice %223 {offsets = [0, 2], sizes = [4, 1], strides = [1, 1]} : vector<4x4xf32> to vector<4x1xf32>
    %237 = vector.extract_strided_slice %221 {offsets = [2, 0], sizes = [1, 256], strides = [1, 1]} : vector<4x256xf32> to vector<1x256xf32>
    %238 = vector.broadcast %236 : vector<4x1xf32> to vector<4x256xf32>
    %239 = vector.broadcast %237 : vector<1x256xf32> to vector<4x256xf32>
    %240 = arith.mulf %238, %239 : vector<4x256xf32>
    %241 = arith.addf %235, %240 : vector<4x256xf32>
    %242 = vector.extract_strided_slice %223 {offsets = [0, 3], sizes = [4, 1], strides = [1, 1]} : vector<4x4xf32> to vector<4x1xf32>
    %243 = vector.extract_strided_slice %221 {offsets = [3, 0], sizes = [1, 256], strides = [1, 1]} : vector<4x256xf32> to vector<1x256xf32>
    %244 = vector.broadcast %242 : vector<4x1xf32> to vector<4x256xf32>
    %245 = vector.broadcast %243 : vector<1x256xf32> to vector<4x256xf32>
    %246 = arith.mulf %244, %245 : vector<4x256xf32>
    %247 = arith.addf %241, %246 : vector<4x256xf32>
    %c239_i32 = arith.constant 239 : i32
    %248 = tpu.dynamic_rotate %1 by %c239_i32 dim 1 : vector<4x256xf32>, i32 -> vector<4x256xf32>
    %c8 = arith.constant 8 : index
    %c0_43 = arith.constant 0 : index
    %c0_44 = arith.constant 0 : index
    %249 = vector.load %arg1[%c8, %c0_43, %c0_44] : memref<9x1x256xf32, #tpu.memory_space<vmem>>, vector<1x1x256xf32>
    %250 = vector.shape_cast %249 : vector<1x1x256xf32> to vector<1x256xf32>
    %251 = vector.broadcast %250 : vector<1x256xf32> to vector<4x256xf32>
    %252 = arith.mulf %248, %251 : vector<4x256xf32>
    %c8_45 = arith.constant 8 : index
    %c0_46 = arith.constant 0 : index
    %c0_47 = arith.constant 0 : index
    %253 = vector.load %arg2[%c8_45, %c0_46, %c0_47] : memref<9x4x4xf32, #tpu.memory_space<vmem>>, vector<1x4x4xf32>
    %254 = vector.shape_cast %253 : vector<1x4x4xf32> to vector<4x4xf32>
    %255 = vector.extract_strided_slice %254 {offsets = [0, 0], sizes = [4, 1], strides = [1, 1]} : vector<4x4xf32> to vector<4x1xf32>
    %256 = vector.extract_strided_slice %252 {offsets = [0, 0], sizes = [1, 256], strides = [1, 1]} : vector<4x256xf32> to vector<1x256xf32>
    %257 = vector.broadcast %255 : vector<4x1xf32> to vector<4x256xf32>
    %258 = vector.broadcast %256 : vector<1x256xf32> to vector<4x256xf32>
    %259 = arith.mulf %257, %258 : vector<4x256xf32>
    %260 = arith.addf %247, %259 : vector<4x256xf32>
    %261 = vector.extract_strided_slice %254 {offsets = [0, 1], sizes = [4, 1], strides = [1, 1]} : vector<4x4xf32> to vector<4x1xf32>
    %262 = vector.extract_strided_slice %252 {offsets = [1, 0], sizes = [1, 256], strides = [1, 1]} : vector<4x256xf32> to vector<1x256xf32>
    %263 = vector.broadcast %261 : vector<4x1xf32> to vector<4x256xf32>
    %264 = vector.broadcast %262 : vector<1x256xf32> to vector<4x256xf32>
    %265 = arith.mulf %263, %264 : vector<4x256xf32>
    %266 = arith.addf %260, %265 : vector<4x256xf32>
    %267 = vector.extract_strided_slice %254 {offsets = [0, 2], sizes = [4, 1], strides = [1, 1]} : vector<4x4xf32> to vector<4x1xf32>
    %268 = vector.extract_strided_slice %252 {offsets = [2, 0], sizes = [1, 256], strides = [1, 1]} : vector<4x256xf32> to vector<1x256xf32>
    %269 = vector.broadcast %267 : vector<4x1xf32> to vector<4x256xf32>
    %270 = vector.broadcast %268 : vector<1x256xf32> to vector<4x256xf32>
    %271 = arith.mulf %269, %270 : vector<4x256xf32>
    %272 = arith.addf %266, %271 : vector<4x256xf32>
    %273 = vector.extract_strided_slice %254 {offsets = [0, 3], sizes = [4, 1], strides = [1, 1]} : vector<4x4xf32> to vector<4x1xf32>
    %274 = vector.extract_strided_slice %252 {offsets = [3, 0], sizes = [1, 256], strides = [1, 1]} : vector<4x256xf32> to vector<1x256xf32>
    %275 = vector.broadcast %273 : vector<4x1xf32> to vector<4x256xf32>
    %276 = vector.broadcast %274 : vector<1x256xf32> to vector<4x256xf32>
    %277 = arith.mulf %275, %276 : vector<4x256xf32>
    %278 = arith.addf %272, %277 : vector<4x256xf32>
    %cst_48 = arith.constant 0.000000e+00 : f32
    %279 = vector.broadcast %cst_48 : f32 to vector<4x256xf32>
    %c17_i32_49 = arith.constant 17 : i32
    %280 = tpu.dynamic_rotate %3 by %c17_i32_49 dim 1 : vector<4x256xf32>, i32 -> vector<4x256xf32>
    %c0_50 = arith.constant 0 : index
    %c0_51 = arith.constant 0 : index
    %c0_52 = arith.constant 0 : index
    %281 = vector.load %arg1[%c0_50, %c0_51, %c0_52] : memref<9x1x256xf32, #tpu.memory_space<vmem>>, vector<1x1x256xf32>
    %282 = vector.shape_cast %281 : vector<1x1x256xf32> to vector<1x256xf32>
    %283 = vector.broadcast %282 : vector<1x256xf32> to vector<4x256xf32>
    %284 = arith.mulf %280, %283 : vector<4x256xf32>
    %c0_53 = arith.constant 0 : index
    %c0_54 = arith.constant 0 : index
    %c0_55 = arith.constant 0 : index
    %285 = vector.load %arg2[%c0_53, %c0_54, %c0_55] : memref<9x4x4xf32, #tpu.memory_space<vmem>>, vector<1x4x4xf32>
    %286 = vector.shape_cast %285 : vector<1x4x4xf32> to vector<4x4xf32>
    %287 = vector.extract_strided_slice %286 {offsets = [0, 0], sizes = [4, 1], strides = [1, 1]} : vector<4x4xf32> to vector<4x1xf32>
    %288 = vector.extract_strided_slice %284 {offsets = [0, 0], sizes = [1, 256], strides = [1, 1]} : vector<4x256xf32> to vector<1x256xf32>
    %289 = vector.broadcast %287 : vector<4x1xf32> to vector<4x256xf32>
    %290 = vector.broadcast %288 : vector<1x256xf32> to vector<4x256xf32>
    %291 = arith.mulf %289, %290 : vector<4x256xf32>
    %292 = arith.addf %279, %291 : vector<4x256xf32>
    %293 = vector.extract_strided_slice %286 {offsets = [0, 1], sizes = [4, 1], strides = [1, 1]} : vector<4x4xf32> to vector<4x1xf32>
    %294 = vector.extract_strided_slice %284 {offsets = [1, 0], sizes = [1, 256], strides = [1, 1]} : vector<4x256xf32> to vector<1x256xf32>
    %295 = vector.broadcast %293 : vector<4x1xf32> to vector<4x256xf32>
    %296 = vector.broadcast %294 : vector<1x256xf32> to vector<4x256xf32>
    %297 = arith.mulf %295, %296 : vector<4x256xf32>
    %298 = arith.addf %292, %297 : vector<4x256xf32>
    %299 = vector.extract_strided_slice %286 {offsets = [0, 2], sizes = [4, 1], strides = [1, 1]} : vector<4x4xf32> to vector<4x1xf32>
    %300 = vector.extract_strided_slice %284 {offsets = [2, 0], sizes = [1, 256], strides = [1, 1]} : vector<4x256xf32> to vector<1x256xf32>
    %301 = vector.broadcast %299 : vector<4x1xf32> to vector<4x256xf32>
    %302 = vector.broadcast %300 : vector<1x256xf32> to vector<4x256xf32>
    %303 = arith.mulf %301, %302 : vector<4x256xf32>
    %304 = arith.addf %298, %303 : vector<4x256xf32>
    %305 = vector.extract_strided_slice %286 {offsets = [0, 3], sizes = [4, 1], strides = [1, 1]} : vector<4x4xf32> to vector<4x1xf32>
    %306 = vector.extract_strided_slice %284 {offsets = [3, 0], sizes = [1, 256], strides = [1, 1]} : vector<4x256xf32> to vector<1x256xf32>
    %307 = vector.broadcast %305 : vector<4x1xf32> to vector<4x256xf32>
    %308 = vector.broadcast %306 : vector<1x256xf32> to vector<4x256xf32>
    %309 = arith.mulf %307, %308 : vector<4x256xf32>
    %310 = arith.addf %304, %309 : vector<4x256xf32>
    %c16_i32_56 = arith.constant 16 : i32
    %311 = tpu.dynamic_rotate %3 by %c16_i32_56 dim 1 : vector<4x256xf32>, i32 -> vector<4x256xf32>
    %c1_57 = arith.constant 1 : index
    %c0_58 = arith.constant 0 : index
    %c0_59 = arith.constant 0 : index
    %312 = vector.load %arg1[%c1_57, %c0_58, %c0_59] : memref<9x1x256xf32, #tpu.memory_space<vmem>>, vector<1x1x256xf32>
    %313 = vector.shape_cast %312 : vector<1x1x256xf32> to vector<1x256xf32>
    %314 = vector.broadcast %313 : vector<1x256xf32> to vector<4x256xf32>
    %315 = arith.mulf %311, %314 : vector<4x256xf32>
    %c1_60 = arith.constant 1 : index
    %c0_61 = arith.constant 0 : index
    %c0_62 = arith.constant 0 : index
    %316 = vector.load %arg2[%c1_60, %c0_61, %c0_62] : memref<9x4x4xf32, #tpu.memory_space<vmem>>, vector<1x4x4xf32>
    %317 = vector.shape_cast %316 : vector<1x4x4xf32> to vector<4x4xf32>
    %318 = vector.extract_strided_slice %317 {offsets = [0, 0], sizes = [4, 1], strides = [1, 1]} : vector<4x4xf32> to vector<4x1xf32>
    %319 = vector.extract_strided_slice %315 {offsets = [0, 0], sizes = [1, 256], strides = [1, 1]} : vector<4x256xf32> to vector<1x256xf32>
    %320 = vector.broadcast %318 : vector<4x1xf32> to vector<4x256xf32>
    %321 = vector.broadcast %319 : vector<1x256xf32> to vector<4x256xf32>
    %322 = arith.mulf %320, %321 : vector<4x256xf32>
    %323 = arith.addf %310, %322 : vector<4x256xf32>
    %324 = vector.extract_strided_slice %317 {offsets = [0, 1], sizes = [4, 1], strides = [1, 1]} : vector<4x4xf32> to vector<4x1xf32>
    %325 = vector.extract_strided_slice %315 {offsets = [1, 0], sizes = [1, 256], strides = [1, 1]} : vector<4x256xf32> to vector<1x256xf32>
    %326 = vector.broadcast %324 : vector<4x1xf32> to vector<4x256xf32>
    %327 = vector.broadcast %325 : vector<1x256xf32> to vector<4x256xf32>
    %328 = arith.mulf %326, %327 : vector<4x256xf32>
    %329 = arith.addf %323, %328 : vector<4x256xf32>
    %330 = vector.extract_strided_slice %317 {offsets = [0, 2], sizes = [4, 1], strides = [1, 1]} : vector<4x4xf32> to vector<4x1xf32>
    %331 = vector.extract_strided_slice %315 {offsets = [2, 0], sizes = [1, 256], strides = [1, 1]} : vector<4x256xf32> to vector<1x256xf32>
    %332 = vector.broadcast %330 : vector<4x1xf32> to vector<4x256xf32>
    %333 = vector.broadcast %331 : vector<1x256xf32> to vector<4x256xf32>
    %334 = arith.mulf %332, %333 : vector<4x256xf32>
    %335 = arith.addf %329, %334 : vector<4x256xf32>
    %336 = vector.extract_strided_slice %317 {offsets = [0, 3], sizes = [4, 1], strides = [1, 1]} : vector<4x4xf32> to vector<4x1xf32>
    %337 = vector.extract_strided_slice %315 {offsets = [3, 0], sizes = [1, 256], strides = [1, 1]} : vector<4x256xf32> to vector<1x256xf32>
    %338 = vector.broadcast %336 : vector<4x1xf32> to vector<4x256xf32>
    %339 = vector.broadcast %337 : vector<1x256xf32> to vector<4x256xf32>
    %340 = arith.mulf %338, %339 : vector<4x256xf32>
    %341 = arith.addf %335, %340 : vector<4x256xf32>
    %c15_i32_63 = arith.constant 15 : i32
    %342 = tpu.dynamic_rotate %3 by %c15_i32_63 dim 1 : vector<4x256xf32>, i32 -> vector<4x256xf32>
    %c2_64 = arith.constant 2 : index
    %c0_65 = arith.constant 0 : index
    %c0_66 = arith.constant 0 : index
    %343 = vector.load %arg1[%c2_64, %c0_65, %c0_66] : memref<9x1x256xf32, #tpu.memory_space<vmem>>, vector<1x1x256xf32>
    %344 = vector.shape_cast %343 : vector<1x1x256xf32> to vector<1x256xf32>
    %345 = vector.broadcast %344 : vector<1x256xf32> to vector<4x256xf32>
    %346 = arith.mulf %342, %345 : vector<4x256xf32>
    %c2_67 = arith.constant 2 : index
    %c0_68 = arith.constant 0 : index
    %c0_69 = arith.constant 0 : index
    %347 = vector.load %arg2[%c2_67, %c0_68, %c0_69] : memref<9x4x4xf32, #tpu.memory_space<vmem>>, vector<1x4x4xf32>
    %348 = vector.shape_cast %347 : vector<1x4x4xf32> to vector<4x4xf32>
    %349 = vector.extract_strided_slice %348 {offsets = [0, 0], sizes = [4, 1], strides = [1, 1]} : vector<4x4xf32> to vector<4x1xf32>
    %350 = vector.extract_strided_slice %346 {offsets = [0, 0], sizes = [1, 256], strides = [1, 1]} : vector<4x256xf32> to vector<1x256xf32>
    %351 = vector.broadcast %349 : vector<4x1xf32> to vector<4x256xf32>
    %352 = vector.broadcast %350 : vector<1x256xf32> to vector<4x256xf32>
    %353 = arith.mulf %351, %352 : vector<4x256xf32>
    %354 = arith.addf %341, %353 : vector<4x256xf32>
    %355 = vector.extract_strided_slice %348 {offsets = [0, 1], sizes = [4, 1], strides = [1, 1]} : vector<4x4xf32> to vector<4x1xf32>
    %356 = vector.extract_strided_slice %346 {offsets = [1, 0], sizes = [1, 256], strides = [1, 1]} : vector<4x256xf32> to vector<1x256xf32>
    %357 = vector.broadcast %355 : vector<4x1xf32> to vector<4x256xf32>
    %358 = vector.broadcast %356 : vector<1x256xf32> to vector<4x256xf32>
    %359 = arith.mulf %357, %358 : vector<4x256xf32>
    %360 = arith.addf %354, %359 : vector<4x256xf32>
    %361 = vector.extract_strided_slice %348 {offsets = [0, 2], sizes = [4, 1], strides = [1, 1]} : vector<4x4xf32> to vector<4x1xf32>
    %362 = vector.extract_strided_slice %346 {offsets = [2, 0], sizes = [1, 256], strides = [1, 1]} : vector<4x256xf32> to vector<1x256xf32>
    %363 = vector.broadcast %361 : vector<4x1xf32> to vector<4x256xf32>
    %364 = vector.broadcast %362 : vector<1x256xf32> to vector<4x256xf32>
    %365 = arith.mulf %363, %364 : vector<4x256xf32>
    %366 = arith.addf %360, %365 : vector<4x256xf32>
    %367 = vector.extract_strided_slice %348 {offsets = [0, 3], sizes = [4, 1], strides = [1, 1]} : vector<4x4xf32> to vector<4x1xf32>
    %368 = vector.extract_strided_slice %346 {offsets = [3, 0], sizes = [1, 256], strides = [1, 1]} : vector<4x256xf32> to vector<1x256xf32>
    %369 = vector.broadcast %367 : vector<4x1xf32> to vector<4x256xf32>
    %370 = vector.broadcast %368 : vector<1x256xf32> to vector<4x256xf32>
    %371 = arith.mulf %369, %370 : vector<4x256xf32>
    %372 = arith.addf %366, %371 : vector<4x256xf32>
    %c1_i32_70 = arith.constant 1 : i32
    %373 = tpu.dynamic_rotate %3 by %c1_i32_70 dim 1 : vector<4x256xf32>, i32 -> vector<4x256xf32>
    %c3_71 = arith.constant 3 : index
    %c0_72 = arith.constant 0 : index
    %c0_73 = arith.constant 0 : index
    %374 = vector.load %arg1[%c3_71, %c0_72, %c0_73] : memref<9x1x256xf32, #tpu.memory_space<vmem>>, vector<1x1x256xf32>
    %375 = vector.shape_cast %374 : vector<1x1x256xf32> to vector<1x256xf32>
    %376 = vector.broadcast %375 : vector<1x256xf32> to vector<4x256xf32>
    %377 = arith.mulf %373, %376 : vector<4x256xf32>
    %c3_74 = arith.constant 3 : index
    %c0_75 = arith.constant 0 : index
    %c0_76 = arith.constant 0 : index
    %378 = vector.load %arg2[%c3_74, %c0_75, %c0_76] : memref<9x4x4xf32, #tpu.memory_space<vmem>>, vector<1x4x4xf32>
    %379 = vector.shape_cast %378 : vector<1x4x4xf32> to vector<4x4xf32>
    %380 = vector.extract_strided_slice %379 {offsets = [0, 0], sizes = [4, 1], strides = [1, 1]} : vector<4x4xf32> to vector<4x1xf32>
    %381 = vector.extract_strided_slice %377 {offsets = [0, 0], sizes = [1, 256], strides = [1, 1]} : vector<4x256xf32> to vector<1x256xf32>
    %382 = vector.broadcast %380 : vector<4x1xf32> to vector<4x256xf32>
    %383 = vector.broadcast %381 : vector<1x256xf32> to vector<4x256xf32>
    %384 = arith.mulf %382, %383 : vector<4x256xf32>
    %385 = arith.addf %372, %384 : vector<4x256xf32>
    %386 = vector.extract_strided_slice %379 {offsets = [0, 1], sizes = [4, 1], strides = [1, 1]} : vector<4x4xf32> to vector<4x1xf32>
    %387 = vector.extract_strided_slice %377 {offsets = [1, 0], sizes = [1, 256], strides = [1, 1]} : vector<4x256xf32> to vector<1x256xf32>
    %388 = vector.broadcast %386 : vector<4x1xf32> to vector<4x256xf32>
    %389 = vector.broadcast %387 : vector<1x256xf32> to vector<4x256xf32>
    %390 = arith.mulf %388, %389 : vector<4x256xf32>
    %391 = arith.addf %385, %390 : vector<4x256xf32>
    %392 = vector.extract_strided_slice %379 {offsets = [0, 2], sizes = [4, 1], strides = [1, 1]} : vector<4x4xf32> to vector<4x1xf32>
    %393 = vector.extract_strided_slice %377 {offsets = [2, 0], sizes = [1, 256], strides = [1, 1]} : vector<4x256xf32> to vector<1x256xf32>
    %394 = vector.broadcast %392 : vector<4x1xf32> to vector<4x256xf32>
    %395 = vector.broadcast %393 : vector<1x256xf32> to vector<4x256xf32>
    %396 = arith.mulf %394, %395 : vector<4x256xf32>
    %397 = arith.addf %391, %396 : vector<4x256xf32>
    %398 = vector.extract_strided_slice %379 {offsets = [0, 3], sizes = [4, 1], strides = [1, 1]} : vector<4x4xf32> to vector<4x1xf32>
    %399 = vector.extract_strided_slice %377 {offsets = [3, 0], sizes = [1, 256], strides = [1, 1]} : vector<4x256xf32> to vector<1x256xf32>
    %400 = vector.broadcast %398 : vector<4x1xf32> to vector<4x256xf32>
    %401 = vector.broadcast %399 : vector<1x256xf32> to vector<4x256xf32>
    %402 = arith.mulf %400, %401 : vector<4x256xf32>
    %403 = arith.addf %397, %402 : vector<4x256xf32>
    %c4_77 = arith.constant 4 : index
    %c0_78 = arith.constant 0 : index
    %c0_79 = arith.constant 0 : index
    %404 = vector.load %arg2[%c4_77, %c0_78, %c0_79] : memref<9x4x4xf32, #tpu.memory_space<vmem>>, vector<1x4x4xf32>
    %405 = vector.shape_cast %404 : vector<1x4x4xf32> to vector<4x4xf32>
    %406 = vector.extract_strided_slice %405 {offsets = [0, 0], sizes = [4, 1], strides = [1, 1]} : vector<4x4xf32> to vector<4x1xf32>
    %407 = vector.extract_strided_slice %3 {offsets = [0, 0], sizes = [1, 256], strides = [1, 1]} : vector<4x256xf32> to vector<1x256xf32>
    %408 = vector.broadcast %406 : vector<4x1xf32> to vector<4x256xf32>
    %409 = vector.broadcast %407 : vector<1x256xf32> to vector<4x256xf32>
    %410 = arith.mulf %408, %409 : vector<4x256xf32>
    %411 = arith.addf %403, %410 : vector<4x256xf32>
    %412 = vector.extract_strided_slice %405 {offsets = [0, 1], sizes = [4, 1], strides = [1, 1]} : vector<4x4xf32> to vector<4x1xf32>
    %413 = vector.extract_strided_slice %3 {offsets = [1, 0], sizes = [1, 256], strides = [1, 1]} : vector<4x256xf32> to vector<1x256xf32>
    %414 = vector.broadcast %412 : vector<4x1xf32> to vector<4x256xf32>
    %415 = vector.broadcast %413 : vector<1x256xf32> to vector<4x256xf32>
    %416 = arith.mulf %414, %415 : vector<4x256xf32>
    %417 = arith.addf %411, %416 : vector<4x256xf32>
    %418 = vector.extract_strided_slice %405 {offsets = [0, 2], sizes = [4, 1], strides = [1, 1]} : vector<4x4xf32> to vector<4x1xf32>
    %419 = vector.extract_strided_slice %3 {offsets = [2, 0], sizes = [1, 256], strides = [1, 1]} : vector<4x256xf32> to vector<1x256xf32>
    %420 = vector.broadcast %418 : vector<4x1xf32> to vector<4x256xf32>
    %421 = vector.broadcast %419 : vector<1x256xf32> to vector<4x256xf32>
    %422 = arith.mulf %420, %421 : vector<4x256xf32>
    %423 = arith.addf %417, %422 : vector<4x256xf32>
    %424 = vector.extract_strided_slice %405 {offsets = [0, 3], sizes = [4, 1], strides = [1, 1]} : vector<4x4xf32> to vector<4x1xf32>
    %425 = vector.extract_strided_slice %3 {offsets = [3, 0], sizes = [1, 256], strides = [1, 1]} : vector<4x256xf32> to vector<1x256xf32>
    %426 = vector.broadcast %424 : vector<4x1xf32> to vector<4x256xf32>
    %427 = vector.broadcast %425 : vector<1x256xf32> to vector<4x256xf32>
    %428 = arith.mulf %426, %427 : vector<4x256xf32>
    %429 = arith.addf %423, %428 : vector<4x256xf32>
    %c255_i32_80 = arith.constant 255 : i32
    %430 = tpu.dynamic_rotate %3 by %c255_i32_80 dim 1 : vector<4x256xf32>, i32 -> vector<4x256xf32>
    %c5_81 = arith.constant 5 : index
    %c0_82 = arith.constant 0 : index
    %c0_83 = arith.constant 0 : index
    %431 = vector.load %arg1[%c5_81, %c0_82, %c0_83] : memref<9x1x256xf32, #tpu.memory_space<vmem>>, vector<1x1x256xf32>
    %432 = vector.shape_cast %431 : vector<1x1x256xf32> to vector<1x256xf32>
    %433 = vector.broadcast %432 : vector<1x256xf32> to vector<4x256xf32>
    %434 = arith.mulf %430, %433 : vector<4x256xf32>
    %c5_84 = arith.constant 5 : index
    %c0_85 = arith.constant 0 : index
    %c0_86 = arith.constant 0 : index
    %435 = vector.load %arg2[%c5_84, %c0_85, %c0_86] : memref<9x4x4xf32, #tpu.memory_space<vmem>>, vector<1x4x4xf32>
    %436 = vector.shape_cast %435 : vector<1x4x4xf32> to vector<4x4xf32>
    %437 = vector.extract_strided_slice %436 {offsets = [0, 0], sizes = [4, 1], strides = [1, 1]} : vector<4x4xf32> to vector<4x1xf32>
    %438 = vector.extract_strided_slice %434 {offsets = [0, 0], sizes = [1, 256], strides = [1, 1]} : vector<4x256xf32> to vector<1x256xf32>
    %439 = vector.broadcast %437 : vector<4x1xf32> to vector<4x256xf32>
    %440 = vector.broadcast %438 : vector<1x256xf32> to vector<4x256xf32>
    %441 = arith.mulf %439, %440 : vector<4x256xf32>
    %442 = arith.addf %429, %441 : vector<4x256xf32>
    %443 = vector.extract_strided_slice %436 {offsets = [0, 1], sizes = [4, 1], strides = [1, 1]} : vector<4x4xf32> to vector<4x1xf32>
    %444 = vector.extract_strided_slice %434 {offsets = [1, 0], sizes = [1, 256], strides = [1, 1]} : vector<4x256xf32> to vector<1x256xf32>
    %445 = vector.broadcast %443 : vector<4x1xf32> to vector<4x256xf32>
    %446 = vector.broadcast %444 : vector<1x256xf32> to vector<4x256xf32>
    %447 = arith.mulf %445, %446 : vector<4x256xf32>
    %448 = arith.addf %442, %447 : vector<4x256xf32>
    %449 = vector.extract_strided_slice %436 {offsets = [0, 2], sizes = [4, 1], strides = [1, 1]} : vector<4x4xf32> to vector<4x1xf32>
    %450 = vector.extract_strided_slice %434 {offsets = [2, 0], sizes = [1, 256], strides = [1, 1]} : vector<4x256xf32> to vector<1x256xf32>
    %451 = vector.broadcast %449 : vector<4x1xf32> to vector<4x256xf32>
    %452 = vector.broadcast %450 : vector<1x256xf32> to vector<4x256xf32>
    %453 = arith.mulf %451, %452 : vector<4x256xf32>
    %454 = arith.addf %448, %453 : vector<4x256xf32>
    %455 = vector.extract_strided_slice %436 {offsets = [0, 3], sizes = [4, 1], strides = [1, 1]} : vector<4x4xf32> to vector<4x1xf32>
    %456 = vector.extract_strided_slice %434 {offsets = [3, 0], sizes = [1, 256], strides = [1, 1]} : vector<4x256xf32> to vector<1x256xf32>
    %457 = vector.broadcast %455 : vector<4x1xf32> to vector<4x256xf32>
    %458 = vector.broadcast %456 : vector<1x256xf32> to vector<4x256xf32>
    %459 = arith.mulf %457, %458 : vector<4x256xf32>
    %460 = arith.addf %454, %459 : vector<4x256xf32>
    %c241_i32_87 = arith.constant 241 : i32
    %461 = tpu.dynamic_rotate %3 by %c241_i32_87 dim 1 : vector<4x256xf32>, i32 -> vector<4x256xf32>
    %c6_88 = arith.constant 6 : index
    %c0_89 = arith.constant 0 : index
    %c0_90 = arith.constant 0 : index
    %462 = vector.load %arg1[%c6_88, %c0_89, %c0_90] : memref<9x1x256xf32, #tpu.memory_space<vmem>>, vector<1x1x256xf32>
    %463 = vector.shape_cast %462 : vector<1x1x256xf32> to vector<1x256xf32>
    %464 = vector.broadcast %463 : vector<1x256xf32> to vector<4x256xf32>
    %465 = arith.mulf %461, %464 : vector<4x256xf32>
    %c6_91 = arith.constant 6 : index
    %c0_92 = arith.constant 0 : index
    %c0_93 = arith.constant 0 : index
    %466 = vector.load %arg2[%c6_91, %c0_92, %c0_93] : memref<9x4x4xf32, #tpu.memory_space<vmem>>, vector<1x4x4xf32>
    %467 = vector.shape_cast %466 : vector<1x4x4xf32> to vector<4x4xf32>
    %468 = vector.extract_strided_slice %467 {offsets = [0, 0], sizes = [4, 1], strides = [1, 1]} : vector<4x4xf32> to vector<4x1xf32>
    %469 = vector.extract_strided_slice %465 {offsets = [0, 0], sizes = [1, 256], strides = [1, 1]} : vector<4x256xf32> to vector<1x256xf32>
    %470 = vector.broadcast %468 : vector<4x1xf32> to vector<4x256xf32>
    %471 = vector.broadcast %469 : vector<1x256xf32> to vector<4x256xf32>
    %472 = arith.mulf %470, %471 : vector<4x256xf32>
    %473 = arith.addf %460, %472 : vector<4x256xf32>
    %474 = vector.extract_strided_slice %467 {offsets = [0, 1], sizes = [4, 1], strides = [1, 1]} : vector<4x4xf32> to vector<4x1xf32>
    %475 = vector.extract_strided_slice %465 {offsets = [1, 0], sizes = [1, 256], strides = [1, 1]} : vector<4x256xf32> to vector<1x256xf32>
    %476 = vector.broadcast %474 : vector<4x1xf32> to vector<4x256xf32>
    %477 = vector.broadcast %475 : vector<1x256xf32> to vector<4x256xf32>
    %478 = arith.mulf %476, %477 : vector<4x256xf32>
    %479 = arith.addf %473, %478 : vector<4x256xf32>
    %480 = vector.extract_strided_slice %467 {offsets = [0, 2], sizes = [4, 1], strides = [1, 1]} : vector<4x4xf32> to vector<4x1xf32>
    %481 = vector.extract_strided_slice %465 {offsets = [2, 0], sizes = [1, 256], strides = [1, 1]} : vector<4x256xf32> to vector<1x256xf32>
    %482 = vector.broadcast %480 : vector<4x1xf32> to vector<4x256xf32>
    %483 = vector.broadcast %481 : vector<1x256xf32> to vector<4x256xf32>
    %484 = arith.mulf %482, %483 : vector<4x256xf32>
    %485 = arith.addf %479, %484 : vector<4x256xf32>
    %486 = vector.extract_strided_slice %467 {offsets = [0, 3], sizes = [4, 1], strides = [1, 1]} : vector<4x4xf32> to vector<4x1xf32>
    %487 = vector.extract_strided_slice %465 {offsets = [3, 0], sizes = [1, 256], strides = [1, 1]} : vector<4x256xf32> to vector<1x256xf32>
    %488 = vector.broadcast %486 : vector<4x1xf32> to vector<4x256xf32>
    %489 = vector.broadcast %487 : vector<1x256xf32> to vector<4x256xf32>
    %490 = arith.mulf %488, %489 : vector<4x256xf32>
    %491 = arith.addf %485, %490 : vector<4x256xf32>
    %c240_i32_94 = arith.constant 240 : i32
    %492 = tpu.dynamic_rotate %3 by %c240_i32_94 dim 1 : vector<4x256xf32>, i32 -> vector<4x256xf32>
    %c7_95 = arith.constant 7 : index
    %c0_96 = arith.constant 0 : index
    %c0_97 = arith.constant 0 : index
    %493 = vector.load %arg1[%c7_95, %c0_96, %c0_97] : memref<9x1x256xf32, #tpu.memory_space<vmem>>, vector<1x1x256xf32>
    %494 = vector.shape_cast %493 : vector<1x1x256xf32> to vector<1x256xf32>
    %495 = vector.broadcast %494 : vector<1x256xf32> to vector<4x256xf32>
    %496 = arith.mulf %492, %495 : vector<4x256xf32>
    %c7_98 = arith.constant 7 : index
    %c0_99 = arith.constant 0 : index
    %c0_100 = arith.constant 0 : index
    %497 = vector.load %arg2[%c7_98, %c0_99, %c0_100] : memref<9x4x4xf32, #tpu.memory_space<vmem>>, vector<1x4x4xf32>
    %498 = vector.shape_cast %497 : vector<1x4x4xf32> to vector<4x4xf32>
    %499 = vector.extract_strided_slice %498 {offsets = [0, 0], sizes = [4, 1], strides = [1, 1]} : vector<4x4xf32> to vector<4x1xf32>
    %500 = vector.extract_strided_slice %496 {offsets = [0, 0], sizes = [1, 256], strides = [1, 1]} : vector<4x256xf32> to vector<1x256xf32>
    %501 = vector.broadcast %499 : vector<4x1xf32> to vector<4x256xf32>
    %502 = vector.broadcast %500 : vector<1x256xf32> to vector<4x256xf32>
    %503 = arith.mulf %501, %502 : vector<4x256xf32>
    %504 = arith.addf %491, %503 : vector<4x256xf32>
    %505 = vector.extract_strided_slice %498 {offsets = [0, 1], sizes = [4, 1], strides = [1, 1]} : vector<4x4xf32> to vector<4x1xf32>
    %506 = vector.extract_strided_slice %496 {offsets = [1, 0], sizes = [1, 256], strides = [1, 1]} : vector<4x256xf32> to vector<1x256xf32>
    %507 = vector.broadcast %505 : vector<4x1xf32> to vector<4x256xf32>
    %508 = vector.broadcast %506 : vector<1x256xf32> to vector<4x256xf32>
    %509 = arith.mulf %507, %508 : vector<4x256xf32>
    %510 = arith.addf %504, %509 : vector<4x256xf32>
    %511 = vector.extract_strided_slice %498 {offsets = [0, 2], sizes = [4, 1], strides = [1, 1]} : vector<4x4xf32> to vector<4x1xf32>
    %512 = vector.extract_strided_slice %496 {offsets = [2, 0], sizes = [1, 256], strides = [1, 1]} : vector<4x256xf32> to vector<1x256xf32>
    %513 = vector.broadcast %511 : vector<4x1xf32> to vector<4x256xf32>
    %514 = vector.broadcast %512 : vector<1x256xf32> to vector<4x256xf32>
    %515 = arith.mulf %513, %514 : vector<4x256xf32>
    %516 = arith.addf %510, %515 : vector<4x256xf32>
    %517 = vector.extract_strided_slice %498 {offsets = [0, 3], sizes = [4, 1], strides = [1, 1]} : vector<4x4xf32> to vector<4x1xf32>
    %518 = vector.extract_strided_slice %496 {offsets = [3, 0], sizes = [1, 256], strides = [1, 1]} : vector<4x256xf32> to vector<1x256xf32>
    %519 = vector.broadcast %517 : vector<4x1xf32> to vector<4x256xf32>
    %520 = vector.broadcast %518 : vector<1x256xf32> to vector<4x256xf32>
    %521 = arith.mulf %519, %520 : vector<4x256xf32>
    %522 = arith.addf %516, %521 : vector<4x256xf32>
    %c239_i32_101 = arith.constant 239 : i32
    %523 = tpu.dynamic_rotate %3 by %c239_i32_101 dim 1 : vector<4x256xf32>, i32 -> vector<4x256xf32>
    %c8_102 = arith.constant 8 : index
    %c0_103 = arith.constant 0 : index
    %c0_104 = arith.constant 0 : index
    %524 = vector.load %arg1[%c8_102, %c0_103, %c0_104] : memref<9x1x256xf32, #tpu.memory_space<vmem>>, vector<1x1x256xf32>
    %525 = vector.shape_cast %524 : vector<1x1x256xf32> to vector<1x256xf32>
    %526 = vector.broadcast %525 : vector<1x256xf32> to vector<4x256xf32>
    %527 = arith.mulf %523, %526 : vector<4x256xf32>
    %c8_105 = arith.constant 8 : index
    %c0_106 = arith.constant 0 : index
    %c0_107 = arith.constant 0 : index
    %528 = vector.load %arg2[%c8_105, %c0_106, %c0_107] : memref<9x4x4xf32, #tpu.memory_space<vmem>>, vector<1x4x4xf32>
    %529 = vector.shape_cast %528 : vector<1x4x4xf32> to vector<4x4xf32>
    %530 = vector.extract_strided_slice %529 {offsets = [0, 0], sizes = [4, 1], strides = [1, 1]} : vector<4x4xf32> to vector<4x1xf32>
    %531 = vector.extract_strided_slice %527 {offsets = [0, 0], sizes = [1, 256], strides = [1, 1]} : vector<4x256xf32> to vector<1x256xf32>
    %532 = vector.broadcast %530 : vector<4x1xf32> to vector<4x256xf32>
    %533 = vector.broadcast %531 : vector<1x256xf32> to vector<4x256xf32>
    %534 = arith.mulf %532, %533 : vector<4x256xf32>
    %535 = arith.addf %522, %534 : vector<4x256xf32>
    %536 = vector.extract_strided_slice %529 {offsets = [0, 1], sizes = [4, 1], strides = [1, 1]} : vector<4x4xf32> to vector<4x1xf32>
    %537 = vector.extract_strided_slice %527 {offsets = [1, 0], sizes = [1, 256], strides = [1, 1]} : vector<4x256xf32> to vector<1x256xf32>
    %538 = vector.broadcast %536 : vector<4x1xf32> to vector<4x256xf32>
    %539 = vector.broadcast %537 : vector<1x256xf32> to vector<4x256xf32>
    %540 = arith.mulf %538, %539 : vector<4x256xf32>
    %541 = arith.addf %535, %540 : vector<4x256xf32>
    %542 = vector.extract_strided_slice %529 {offsets = [0, 2], sizes = [4, 1], strides = [1, 1]} : vector<4x4xf32> to vector<4x1xf32>
    %543 = vector.extract_strided_slice %527 {offsets = [2, 0], sizes = [1, 256], strides = [1, 1]} : vector<4x256xf32> to vector<1x256xf32>
    %544 = vector.broadcast %542 : vector<4x1xf32> to vector<4x256xf32>
    %545 = vector.broadcast %543 : vector<1x256xf32> to vector<4x256xf32>
    %546 = arith.mulf %544, %545 : vector<4x256xf32>
    %547 = arith.addf %541, %546 : vector<4x256xf32>
    %548 = vector.extract_strided_slice %529 {offsets = [0, 3], sizes = [4, 1], strides = [1, 1]} : vector<4x4xf32> to vector<4x1xf32>
    %549 = vector.extract_strided_slice %527 {offsets = [3, 0], sizes = [1, 256], strides = [1, 1]} : vector<4x256xf32> to vector<1x256xf32>
    %550 = vector.broadcast %548 : vector<4x1xf32> to vector<4x256xf32>
    %551 = vector.broadcast %549 : vector<1x256xf32> to vector<4x256xf32>
    %552 = arith.mulf %550, %551 : vector<4x256xf32>
    %553 = arith.addf %547, %552 : vector<4x256xf32>
    %cst_108 = arith.constant dense<0.000000e+00> : vector<4xf32>
    %554 = vector.multi_reduction <add>, %278, %cst_108 [1] : vector<4x256xf32> to vector<4xf32>
    %555 = vector.shape_cast %554 : vector<4xf32> to vector<4x1xf32>
    %556 = arith.mulf %278, %278 : vector<4x256xf32>
    %cst_109 = arith.constant dense<0.000000e+00> : vector<4xf32>
    %557 = vector.multi_reduction <add>, %556, %cst_109 [1] : vector<4x256xf32> to vector<4xf32>
    %558 = vector.shape_cast %557 : vector<4xf32> to vector<4x1xf32>
    %cst_110 = arith.constant dense<0.000000e+00> : vector<4xf32>
    %559 = vector.multi_reduction <add>, %553, %cst_110 [1] : vector<4x256xf32> to vector<4xf32>
    %560 = vector.shape_cast %559 : vector<4xf32> to vector<4x1xf32>
    %561 = arith.addf %555, %560 : vector<4x1xf32>
    %562 = arith.mulf %553, %553 : vector<4x256xf32>
    %cst_111 = arith.constant dense<0.000000e+00> : vector<4xf32>
    %563 = vector.multi_reduction <add>, %562, %cst_111 [1] : vector<4x256xf32> to vector<4xf32>
    %564 = vector.shape_cast %563 : vector<4xf32> to vector<4x1xf32>
    %565 = arith.addf %558, %564 : vector<4x1xf32>
    %cst_112 = arith.constant 0.001953125 : f32
    %566 = vector.broadcast %cst_112 : f32 to vector<4x1xf32>
    %567 = arith.mulf %561, %566 : vector<4x1xf32>
    %cst_113 = arith.constant 0.001953125 : f32
    %568 = vector.broadcast %cst_113 : f32 to vector<4x1xf32>
    %569 = arith.mulf %565, %568 : vector<4x1xf32>
    %570 = arith.mulf %567, %567 : vector<4x1xf32>
    %571 = arith.subf %569, %570 : vector<4x1xf32>
    %cst_114 = arith.constant 9.99999974E-6 : f32
    %572 = vector.broadcast %cst_114 : f32 to vector<4x1xf32>
    %573 = arith.addf %571, %572 : vector<4x1xf32>
    %574 = math.rsqrt %573 : vector<4x1xf32>
    %c0_115 = arith.constant 0 : index
    %c0_116 = arith.constant 0 : index
    %575 = vector.load %arg4[%c0_115, %c0_116] : memref<4x1xf32, #tpu.memory_space<vmem>>, vector<4x1xf32>
    %576 = arith.mulf %575, %574 : vector<4x1xf32>
    %c0_117 = arith.constant 0 : index
    %c0_118 = arith.constant 0 : index
    %577 = vector.load %arg5[%c0_117, %c0_118] : memref<4x1xf32, #tpu.memory_space<vmem>>, vector<4x1xf32>
    %578 = arith.mulf %567, %576 : vector<4x1xf32>
    %579 = arith.subf %577, %578 : vector<4x1xf32>
    %580 = vector.broadcast %576 : vector<4x1xf32> to vector<4x256xf32>
    %581 = arith.mulf %278, %580 : vector<4x256xf32>
    %582 = vector.broadcast %579 : vector<4x1xf32> to vector<4x256xf32>
    %583 = arith.addf %581, %582 : vector<4x256xf32>
    %cst_119 = arith.constant 0.000000e+00 : f32
    %584 = vector.broadcast %cst_119 : f32 to vector<4x256xf32>
    %585 = arith.maximumf %583, %584 : vector<4x256xf32>
    %586 = vector.broadcast %576 : vector<4x1xf32> to vector<4x256xf32>
    %587 = arith.mulf %553, %586 : vector<4x256xf32>
    %588 = vector.broadcast %579 : vector<4x1xf32> to vector<4x256xf32>
    %589 = arith.addf %587, %588 : vector<4x256xf32>
    %cst_120 = arith.constant 0.000000e+00 : f32
    %590 = vector.broadcast %cst_120 : f32 to vector<4x256xf32>
    %591 = arith.maximumf %589, %590 : vector<4x256xf32>
    %cst_121 = arith.constant 0.000000e+00 : f32
    %592 = vector.broadcast %cst_121 : f32 to vector<4x256xf32>
    %c17_i32_122 = arith.constant 17 : i32
    %593 = tpu.dynamic_rotate %585 by %c17_i32_122 dim 1 : vector<4x256xf32>, i32 -> vector<4x256xf32>
    %c0_123 = arith.constant 0 : index
    %c0_124 = arith.constant 0 : index
    %c0_125 = arith.constant 0 : index
    %594 = vector.load %arg1[%c0_123, %c0_124, %c0_125] : memref<9x1x256xf32, #tpu.memory_space<vmem>>, vector<1x1x256xf32>
    %595 = vector.shape_cast %594 : vector<1x1x256xf32> to vector<1x256xf32>
    %596 = vector.broadcast %595 : vector<1x256xf32> to vector<4x256xf32>
    %597 = arith.mulf %593, %596 : vector<4x256xf32>
    %c0_126 = arith.constant 0 : index
    %c0_127 = arith.constant 0 : index
    %c0_128 = arith.constant 0 : index
    %598 = vector.load %arg3[%c0_126, %c0_127, %c0_128] : memref<9x4x4xf32, #tpu.memory_space<vmem>>, vector<1x4x4xf32>
    %599 = vector.shape_cast %598 : vector<1x4x4xf32> to vector<4x4xf32>
    %600 = vector.extract_strided_slice %599 {offsets = [0, 0], sizes = [4, 1], strides = [1, 1]} : vector<4x4xf32> to vector<4x1xf32>
    %601 = vector.extract_strided_slice %597 {offsets = [0, 0], sizes = [1, 256], strides = [1, 1]} : vector<4x256xf32> to vector<1x256xf32>
    %602 = vector.broadcast %600 : vector<4x1xf32> to vector<4x256xf32>
    %603 = vector.broadcast %601 : vector<1x256xf32> to vector<4x256xf32>
    %604 = arith.mulf %602, %603 : vector<4x256xf32>
    %605 = arith.addf %592, %604 : vector<4x256xf32>
    %606 = vector.extract_strided_slice %599 {offsets = [0, 1], sizes = [4, 1], strides = [1, 1]} : vector<4x4xf32> to vector<4x1xf32>
    %607 = vector.extract_strided_slice %597 {offsets = [1, 0], sizes = [1, 256], strides = [1, 1]} : vector<4x256xf32> to vector<1x256xf32>
    %608 = vector.broadcast %606 : vector<4x1xf32> to vector<4x256xf32>
    %609 = vector.broadcast %607 : vector<1x256xf32> to vector<4x256xf32>
    %610 = arith.mulf %608, %609 : vector<4x256xf32>
    %611 = arith.addf %605, %610 : vector<4x256xf32>
    %612 = vector.extract_strided_slice %599 {offsets = [0, 2], sizes = [4, 1], strides = [1, 1]} : vector<4x4xf32> to vector<4x1xf32>
    %613 = vector.extract_strided_slice %597 {offsets = [2, 0], sizes = [1, 256], strides = [1, 1]} : vector<4x256xf32> to vector<1x256xf32>
    %614 = vector.broadcast %612 : vector<4x1xf32> to vector<4x256xf32>
    %615 = vector.broadcast %613 : vector<1x256xf32> to vector<4x256xf32>
    %616 = arith.mulf %614, %615 : vector<4x256xf32>
    %617 = arith.addf %611, %616 : vector<4x256xf32>
    %618 = vector.extract_strided_slice %599 {offsets = [0, 3], sizes = [4, 1], strides = [1, 1]} : vector<4x4xf32> to vector<4x1xf32>
    %619 = vector.extract_strided_slice %597 {offsets = [3, 0], sizes = [1, 256], strides = [1, 1]} : vector<4x256xf32> to vector<1x256xf32>
    %620 = vector.broadcast %618 : vector<4x1xf32> to vector<4x256xf32>
    %621 = vector.broadcast %619 : vector<1x256xf32> to vector<4x256xf32>
    %622 = arith.mulf %620, %621 : vector<4x256xf32>
    %623 = arith.addf %617, %622 : vector<4x256xf32>
    %c16_i32_129 = arith.constant 16 : i32
    %624 = tpu.dynamic_rotate %585 by %c16_i32_129 dim 1 : vector<4x256xf32>, i32 -> vector<4x256xf32>
    %c1_130 = arith.constant 1 : index
    %c0_131 = arith.constant 0 : index
    %c0_132 = arith.constant 0 : index
    %625 = vector.load %arg1[%c1_130, %c0_131, %c0_132] : memref<9x1x256xf32, #tpu.memory_space<vmem>>, vector<1x1x256xf32>
    %626 = vector.shape_cast %625 : vector<1x1x256xf32> to vector<1x256xf32>
    %627 = vector.broadcast %626 : vector<1x256xf32> to vector<4x256xf32>
    %628 = arith.mulf %624, %627 : vector<4x256xf32>
    %c1_133 = arith.constant 1 : index
    %c0_134 = arith.constant 0 : index
    %c0_135 = arith.constant 0 : index
    %629 = vector.load %arg3[%c1_133, %c0_134, %c0_135] : memref<9x4x4xf32, #tpu.memory_space<vmem>>, vector<1x4x4xf32>
    %630 = vector.shape_cast %629 : vector<1x4x4xf32> to vector<4x4xf32>
    %631 = vector.extract_strided_slice %630 {offsets = [0, 0], sizes = [4, 1], strides = [1, 1]} : vector<4x4xf32> to vector<4x1xf32>
    %632 = vector.extract_strided_slice %628 {offsets = [0, 0], sizes = [1, 256], strides = [1, 1]} : vector<4x256xf32> to vector<1x256xf32>
    %633 = vector.broadcast %631 : vector<4x1xf32> to vector<4x256xf32>
    %634 = vector.broadcast %632 : vector<1x256xf32> to vector<4x256xf32>
    %635 = arith.mulf %633, %634 : vector<4x256xf32>
    %636 = arith.addf %623, %635 : vector<4x256xf32>
    %637 = vector.extract_strided_slice %630 {offsets = [0, 1], sizes = [4, 1], strides = [1, 1]} : vector<4x4xf32> to vector<4x1xf32>
    %638 = vector.extract_strided_slice %628 {offsets = [1, 0], sizes = [1, 256], strides = [1, 1]} : vector<4x256xf32> to vector<1x256xf32>
    %639 = vector.broadcast %637 : vector<4x1xf32> to vector<4x256xf32>
    %640 = vector.broadcast %638 : vector<1x256xf32> to vector<4x256xf32>
    %641 = arith.mulf %639, %640 : vector<4x256xf32>
    %642 = arith.addf %636, %641 : vector<4x256xf32>
    %643 = vector.extract_strided_slice %630 {offsets = [0, 2], sizes = [4, 1], strides = [1, 1]} : vector<4x4xf32> to vector<4x1xf32>
    %644 = vector.extract_strided_slice %628 {offsets = [2, 0], sizes = [1, 256], strides = [1, 1]} : vector<4x256xf32> to vector<1x256xf32>
    %645 = vector.broadcast %643 : vector<4x1xf32> to vector<4x256xf32>
    %646 = vector.broadcast %644 : vector<1x256xf32> to vector<4x256xf32>
    %647 = arith.mulf %645, %646 : vector<4x256xf32>
    %648 = arith.addf %642, %647 : vector<4x256xf32>
    %649 = vector.extract_strided_slice %630 {offsets = [0, 3], sizes = [4, 1], strides = [1, 1]} : vector<4x4xf32> to vector<4x1xf32>
    %650 = vector.extract_strided_slice %628 {offsets = [3, 0], sizes = [1, 256], strides = [1, 1]} : vector<4x256xf32> to vector<1x256xf32>
    %651 = vector.broadcast %649 : vector<4x1xf32> to vector<4x256xf32>
    %652 = vector.broadcast %650 : vector<1x256xf32> to vector<4x256xf32>
    %653 = arith.mulf %651, %652 : vector<4x256xf32>
    %654 = arith.addf %648, %653 : vector<4x256xf32>
    %c15_i32_136 = arith.constant 15 : i32
    %655 = tpu.dynamic_rotate %585 by %c15_i32_136 dim 1 : vector<4x256xf32>, i32 -> vector<4x256xf32>
    %c2_137 = arith.constant 2 : index
    %c0_138 = arith.constant 0 : index
    %c0_139 = arith.constant 0 : index
    %656 = vector.load %arg1[%c2_137, %c0_138, %c0_139] : memref<9x1x256xf32, #tpu.memory_space<vmem>>, vector<1x1x256xf32>
    %657 = vector.shape_cast %656 : vector<1x1x256xf32> to vector<1x256xf32>
    %658 = vector.broadcast %657 : vector<1x256xf32> to vector<4x256xf32>
    %659 = arith.mulf %655, %658 : vector<4x256xf32>
    %c2_140 = arith.constant 2 : index
    %c0_141 = arith.constant 0 : index
    %c0_142 = arith.constant 0 : index
    %660 = vector.load %arg3[%c2_140, %c0_141, %c0_142] : memref<9x4x4xf32, #tpu.memory_space<vmem>>, vector<1x4x4xf32>
    %661 = vector.shape_cast %660 : vector<1x4x4xf32> to vector<4x4xf32>
    %662 = vector.extract_strided_slice %661 {offsets = [0, 0], sizes = [4, 1], strides = [1, 1]} : vector<4x4xf32> to vector<4x1xf32>
    %663 = vector.extract_strided_slice %659 {offsets = [0, 0], sizes = [1, 256], strides = [1, 1]} : vector<4x256xf32> to vector<1x256xf32>
    %664 = vector.broadcast %662 : vector<4x1xf32> to vector<4x256xf32>
    %665 = vector.broadcast %663 : vector<1x256xf32> to vector<4x256xf32>
    %666 = arith.mulf %664, %665 : vector<4x256xf32>
    %667 = arith.addf %654, %666 : vector<4x256xf32>
    %668 = vector.extract_strided_slice %661 {offsets = [0, 1], sizes = [4, 1], strides = [1, 1]} : vector<4x4xf32> to vector<4x1xf32>
    %669 = vector.extract_strided_slice %659 {offsets = [1, 0], sizes = [1, 256], strides = [1, 1]} : vector<4x256xf32> to vector<1x256xf32>
    %670 = vector.broadcast %668 : vector<4x1xf32> to vector<4x256xf32>
    %671 = vector.broadcast %669 : vector<1x256xf32> to vector<4x256xf32>
    %672 = arith.mulf %670, %671 : vector<4x256xf32>
    %673 = arith.addf %667, %672 : vector<4x256xf32>
    %674 = vector.extract_strided_slice %661 {offsets = [0, 2], sizes = [4, 1], strides = [1, 1]} : vector<4x4xf32> to vector<4x1xf32>
    %675 = vector.extract_strided_slice %659 {offsets = [2, 0], sizes = [1, 256], strides = [1, 1]} : vector<4x256xf32> to vector<1x256xf32>
    %676 = vector.broadcast %674 : vector<4x1xf32> to vector<4x256xf32>
    %677 = vector.broadcast %675 : vector<1x256xf32> to vector<4x256xf32>
    %678 = arith.mulf %676, %677 : vector<4x256xf32>
    %679 = arith.addf %673, %678 : vector<4x256xf32>
    %680 = vector.extract_strided_slice %661 {offsets = [0, 3], sizes = [4, 1], strides = [1, 1]} : vector<4x4xf32> to vector<4x1xf32>
    %681 = vector.extract_strided_slice %659 {offsets = [3, 0], sizes = [1, 256], strides = [1, 1]} : vector<4x256xf32> to vector<1x256xf32>
    %682 = vector.broadcast %680 : vector<4x1xf32> to vector<4x256xf32>
    %683 = vector.broadcast %681 : vector<1x256xf32> to vector<4x256xf32>
    %684 = arith.mulf %682, %683 : vector<4x256xf32>
    %685 = arith.addf %679, %684 : vector<4x256xf32>
    %c1_i32_143 = arith.constant 1 : i32
    %686 = tpu.dynamic_rotate %585 by %c1_i32_143 dim 1 : vector<4x256xf32>, i32 -> vector<4x256xf32>
    %c3_144 = arith.constant 3 : index
    %c0_145 = arith.constant 0 : index
    %c0_146 = arith.constant 0 : index
    %687 = vector.load %arg1[%c3_144, %c0_145, %c0_146] : memref<9x1x256xf32, #tpu.memory_space<vmem>>, vector<1x1x256xf32>
    %688 = vector.shape_cast %687 : vector<1x1x256xf32> to vector<1x256xf32>
    %689 = vector.broadcast %688 : vector<1x256xf32> to vector<4x256xf32>
    %690 = arith.mulf %686, %689 : vector<4x256xf32>
    %c3_147 = arith.constant 3 : index
    %c0_148 = arith.constant 0 : index
    %c0_149 = arith.constant 0 : index
    %691 = vector.load %arg3[%c3_147, %c0_148, %c0_149] : memref<9x4x4xf32, #tpu.memory_space<vmem>>, vector<1x4x4xf32>
    %692 = vector.shape_cast %691 : vector<1x4x4xf32> to vector<4x4xf32>
    %693 = vector.extract_strided_slice %692 {offsets = [0, 0], sizes = [4, 1], strides = [1, 1]} : vector<4x4xf32> to vector<4x1xf32>
    %694 = vector.extract_strided_slice %690 {offsets = [0, 0], sizes = [1, 256], strides = [1, 1]} : vector<4x256xf32> to vector<1x256xf32>
    %695 = vector.broadcast %693 : vector<4x1xf32> to vector<4x256xf32>
    %696 = vector.broadcast %694 : vector<1x256xf32> to vector<4x256xf32>
    %697 = arith.mulf %695, %696 : vector<4x256xf32>
    %698 = arith.addf %685, %697 : vector<4x256xf32>
    %699 = vector.extract_strided_slice %692 {offsets = [0, 1], sizes = [4, 1], strides = [1, 1]} : vector<4x4xf32> to vector<4x1xf32>
    %700 = vector.extract_strided_slice %690 {offsets = [1, 0], sizes = [1, 256], strides = [1, 1]} : vector<4x256xf32> to vector<1x256xf32>
    %701 = vector.broadcast %699 : vector<4x1xf32> to vector<4x256xf32>
    %702 = vector.broadcast %700 : vector<1x256xf32> to vector<4x256xf32>
    %703 = arith.mulf %701, %702 : vector<4x256xf32>
    %704 = arith.addf %698, %703 : vector<4x256xf32>
    %705 = vector.extract_strided_slice %692 {offsets = [0, 2], sizes = [4, 1], strides = [1, 1]} : vector<4x4xf32> to vector<4x1xf32>
    %706 = vector.extract_strided_slice %690 {offsets = [2, 0], sizes = [1, 256], strides = [1, 1]} : vector<4x256xf32> to vector<1x256xf32>
    %707 = vector.broadcast %705 : vector<4x1xf32> to vector<4x256xf32>
    %708 = vector.broadcast %706 : vector<1x256xf32> to vector<4x256xf32>
    %709 = arith.mulf %707, %708 : vector<4x256xf32>
    %710 = arith.addf %704, %709 : vector<4x256xf32>
    %711 = vector.extract_strided_slice %692 {offsets = [0, 3], sizes = [4, 1], strides = [1, 1]} : vector<4x4xf32> to vector<4x1xf32>
    %712 = vector.extract_strided_slice %690 {offsets = [3, 0], sizes = [1, 256], strides = [1, 1]} : vector<4x256xf32> to vector<1x256xf32>
    %713 = vector.broadcast %711 : vector<4x1xf32> to vector<4x256xf32>
    %714 = vector.broadcast %712 : vector<1x256xf32> to vector<4x256xf32>
    %715 = arith.mulf %713, %714 : vector<4x256xf32>
    %716 = arith.addf %710, %715 : vector<4x256xf32>
    %c4_150 = arith.constant 4 : index
    %c0_151 = arith.constant 0 : index
    %c0_152 = arith.constant 0 : index
    %717 = vector.load %arg3[%c4_150, %c0_151, %c0_152] : memref<9x4x4xf32, #tpu.memory_space<vmem>>, vector<1x4x4xf32>
    %718 = vector.shape_cast %717 : vector<1x4x4xf32> to vector<4x4xf32>
    %719 = vector.extract_strided_slice %718 {offsets = [0, 0], sizes = [4, 1], strides = [1, 1]} : vector<4x4xf32> to vector<4x1xf32>
    %720 = vector.extract_strided_slice %585 {offsets = [0, 0], sizes = [1, 256], strides = [1, 1]} : vector<4x256xf32> to vector<1x256xf32>
    %721 = vector.broadcast %719 : vector<4x1xf32> to vector<4x256xf32>
    %722 = vector.broadcast %720 : vector<1x256xf32> to vector<4x256xf32>
    %723 = arith.mulf %721, %722 : vector<4x256xf32>
    %724 = arith.addf %716, %723 : vector<4x256xf32>
    %725 = vector.extract_strided_slice %718 {offsets = [0, 1], sizes = [4, 1], strides = [1, 1]} : vector<4x4xf32> to vector<4x1xf32>
    %726 = vector.extract_strided_slice %585 {offsets = [1, 0], sizes = [1, 256], strides = [1, 1]} : vector<4x256xf32> to vector<1x256xf32>
    %727 = vector.broadcast %725 : vector<4x1xf32> to vector<4x256xf32>
    %728 = vector.broadcast %726 : vector<1x256xf32> to vector<4x256xf32>
    %729 = arith.mulf %727, %728 : vector<4x256xf32>
    %730 = arith.addf %724, %729 : vector<4x256xf32>
    %731 = vector.extract_strided_slice %718 {offsets = [0, 2], sizes = [4, 1], strides = [1, 1]} : vector<4x4xf32> to vector<4x1xf32>
    %732 = vector.extract_strided_slice %585 {offsets = [2, 0], sizes = [1, 256], strides = [1, 1]} : vector<4x256xf32> to vector<1x256xf32>
    %733 = vector.broadcast %731 : vector<4x1xf32> to vector<4x256xf32>
    %734 = vector.broadcast %732 : vector<1x256xf32> to vector<4x256xf32>
    %735 = arith.mulf %733, %734 : vector<4x256xf32>
    %736 = arith.addf %730, %735 : vector<4x256xf32>
    %737 = vector.extract_strided_slice %718 {offsets = [0, 3], sizes = [4, 1], strides = [1, 1]} : vector<4x4xf32> to vector<4x1xf32>
    %738 = vector.extract_strided_slice %585 {offsets = [3, 0], sizes = [1, 256], strides = [1, 1]} : vector<4x256xf32> to vector<1x256xf32>
    %739 = vector.broadcast %737 : vector<4x1xf32> to vector<4x256xf32>
    %740 = vector.broadcast %738 : vector<1x256xf32> to vector<4x256xf32>
    %741 = arith.mulf %739, %740 : vector<4x256xf32>
    %742 = arith.addf %736, %741 : vector<4x256xf32>
    %c255_i32_153 = arith.constant 255 : i32
    %743 = tpu.dynamic_rotate %585 by %c255_i32_153 dim 1 : vector<4x256xf32>, i32 -> vector<4x256xf32>
    %c5_154 = arith.constant 5 : index
    %c0_155 = arith.constant 0 : index
    %c0_156 = arith.constant 0 : index
    %744 = vector.load %arg1[%c5_154, %c0_155, %c0_156] : memref<9x1x256xf32, #tpu.memory_space<vmem>>, vector<1x1x256xf32>
    %745 = vector.shape_cast %744 : vector<1x1x256xf32> to vector<1x256xf32>
    %746 = vector.broadcast %745 : vector<1x256xf32> to vector<4x256xf32>
    %747 = arith.mulf %743, %746 : vector<4x256xf32>
    %c5_157 = arith.constant 5 : index
    %c0_158 = arith.constant 0 : index
    %c0_159 = arith.constant 0 : index
    %748 = vector.load %arg3[%c5_157, %c0_158, %c0_159] : memref<9x4x4xf32, #tpu.memory_space<vmem>>, vector<1x4x4xf32>
    %749 = vector.shape_cast %748 : vector<1x4x4xf32> to vector<4x4xf32>
    %750 = vector.extract_strided_slice %749 {offsets = [0, 0], sizes = [4, 1], strides = [1, 1]} : vector<4x4xf32> to vector<4x1xf32>
    %751 = vector.extract_strided_slice %747 {offsets = [0, 0], sizes = [1, 256], strides = [1, 1]} : vector<4x256xf32> to vector<1x256xf32>
    %752 = vector.broadcast %750 : vector<4x1xf32> to vector<4x256xf32>
    %753 = vector.broadcast %751 : vector<1x256xf32> to vector<4x256xf32>
    %754 = arith.mulf %752, %753 : vector<4x256xf32>
    %755 = arith.addf %742, %754 : vector<4x256xf32>
    %756 = vector.extract_strided_slice %749 {offsets = [0, 1], sizes = [4, 1], strides = [1, 1]} : vector<4x4xf32> to vector<4x1xf32>
    %757 = vector.extract_strided_slice %747 {offsets = [1, 0], sizes = [1, 256], strides = [1, 1]} : vector<4x256xf32> to vector<1x256xf32>
    %758 = vector.broadcast %756 : vector<4x1xf32> to vector<4x256xf32>
    %759 = vector.broadcast %757 : vector<1x256xf32> to vector<4x256xf32>
    %760 = arith.mulf %758, %759 : vector<4x256xf32>
    %761 = arith.addf %755, %760 : vector<4x256xf32>
    %762 = vector.extract_strided_slice %749 {offsets = [0, 2], sizes = [4, 1], strides = [1, 1]} : vector<4x4xf32> to vector<4x1xf32>
    %763 = vector.extract_strided_slice %747 {offsets = [2, 0], sizes = [1, 256], strides = [1, 1]} : vector<4x256xf32> to vector<1x256xf32>
    %764 = vector.broadcast %762 : vector<4x1xf32> to vector<4x256xf32>
    %765 = vector.broadcast %763 : vector<1x256xf32> to vector<4x256xf32>
    %766 = arith.mulf %764, %765 : vector<4x256xf32>
    %767 = arith.addf %761, %766 : vector<4x256xf32>
    %768 = vector.extract_strided_slice %749 {offsets = [0, 3], sizes = [4, 1], strides = [1, 1]} : vector<4x4xf32> to vector<4x1xf32>
    %769 = vector.extract_strided_slice %747 {offsets = [3, 0], sizes = [1, 256], strides = [1, 1]} : vector<4x256xf32> to vector<1x256xf32>
    %770 = vector.broadcast %768 : vector<4x1xf32> to vector<4x256xf32>
    %771 = vector.broadcast %769 : vector<1x256xf32> to vector<4x256xf32>
    %772 = arith.mulf %770, %771 : vector<4x256xf32>
    %773 = arith.addf %767, %772 : vector<4x256xf32>
    %c241_i32_160 = arith.constant 241 : i32
    %774 = tpu.dynamic_rotate %585 by %c241_i32_160 dim 1 : vector<4x256xf32>, i32 -> vector<4x256xf32>
    %c6_161 = arith.constant 6 : index
    %c0_162 = arith.constant 0 : index
    %c0_163 = arith.constant 0 : index
    %775 = vector.load %arg1[%c6_161, %c0_162, %c0_163] : memref<9x1x256xf32, #tpu.memory_space<vmem>>, vector<1x1x256xf32>
    %776 = vector.shape_cast %775 : vector<1x1x256xf32> to vector<1x256xf32>
    %777 = vector.broadcast %776 : vector<1x256xf32> to vector<4x256xf32>
    %778 = arith.mulf %774, %777 : vector<4x256xf32>
    %c6_164 = arith.constant 6 : index
    %c0_165 = arith.constant 0 : index
    %c0_166 = arith.constant 0 : index
    %779 = vector.load %arg3[%c6_164, %c0_165, %c0_166] : memref<9x4x4xf32, #tpu.memory_space<vmem>>, vector<1x4x4xf32>
    %780 = vector.shape_cast %779 : vector<1x4x4xf32> to vector<4x4xf32>
    %781 = vector.extract_strided_slice %780 {offsets = [0, 0], sizes = [4, 1], strides = [1, 1]} : vector<4x4xf32> to vector<4x1xf32>
    %782 = vector.extract_strided_slice %778 {offsets = [0, 0], sizes = [1, 256], strides = [1, 1]} : vector<4x256xf32> to vector<1x256xf32>
    %783 = vector.broadcast %781 : vector<4x1xf32> to vector<4x256xf32>
    %784 = vector.broadcast %782 : vector<1x256xf32> to vector<4x256xf32>
    %785 = arith.mulf %783, %784 : vector<4x256xf32>
    %786 = arith.addf %773, %785 : vector<4x256xf32>
    %787 = vector.extract_strided_slice %780 {offsets = [0, 1], sizes = [4, 1], strides = [1, 1]} : vector<4x4xf32> to vector<4x1xf32>
    %788 = vector.extract_strided_slice %778 {offsets = [1, 0], sizes = [1, 256], strides = [1, 1]} : vector<4x256xf32> to vector<1x256xf32>
    %789 = vector.broadcast %787 : vector<4x1xf32> to vector<4x256xf32>
    %790 = vector.broadcast %788 : vector<1x256xf32> to vector<4x256xf32>
    %791 = arith.mulf %789, %790 : vector<4x256xf32>
    %792 = arith.addf %786, %791 : vector<4x256xf32>
    %793 = vector.extract_strided_slice %780 {offsets = [0, 2], sizes = [4, 1], strides = [1, 1]} : vector<4x4xf32> to vector<4x1xf32>
    %794 = vector.extract_strided_slice %778 {offsets = [2, 0], sizes = [1, 256], strides = [1, 1]} : vector<4x256xf32> to vector<1x256xf32>
    %795 = vector.broadcast %793 : vector<4x1xf32> to vector<4x256xf32>
    %796 = vector.broadcast %794 : vector<1x256xf32> to vector<4x256xf32>
    %797 = arith.mulf %795, %796 : vector<4x256xf32>
    %798 = arith.addf %792, %797 : vector<4x256xf32>
    %799 = vector.extract_strided_slice %780 {offsets = [0, 3], sizes = [4, 1], strides = [1, 1]} : vector<4x4xf32> to vector<4x1xf32>
    %800 = vector.extract_strided_slice %778 {offsets = [3, 0], sizes = [1, 256], strides = [1, 1]} : vector<4x256xf32> to vector<1x256xf32>
    %801 = vector.broadcast %799 : vector<4x1xf32> to vector<4x256xf32>
    %802 = vector.broadcast %800 : vector<1x256xf32> to vector<4x256xf32>
    %803 = arith.mulf %801, %802 : vector<4x256xf32>
    %804 = arith.addf %798, %803 : vector<4x256xf32>
    %c240_i32_167 = arith.constant 240 : i32
    %805 = tpu.dynamic_rotate %585 by %c240_i32_167 dim 1 : vector<4x256xf32>, i32 -> vector<4x256xf32>
    %c7_168 = arith.constant 7 : index
    %c0_169 = arith.constant 0 : index
    %c0_170 = arith.constant 0 : index
    %806 = vector.load %arg1[%c7_168, %c0_169, %c0_170] : memref<9x1x256xf32, #tpu.memory_space<vmem>>, vector<1x1x256xf32>
    %807 = vector.shape_cast %806 : vector<1x1x256xf32> to vector<1x256xf32>
    %808 = vector.broadcast %807 : vector<1x256xf32> to vector<4x256xf32>
    %809 = arith.mulf %805, %808 : vector<4x256xf32>
    %c7_171 = arith.constant 7 : index
    %c0_172 = arith.constant 0 : index
    %c0_173 = arith.constant 0 : index
    %810 = vector.load %arg3[%c7_171, %c0_172, %c0_173] : memref<9x4x4xf32, #tpu.memory_space<vmem>>, vector<1x4x4xf32>
    %811 = vector.shape_cast %810 : vector<1x4x4xf32> to vector<4x4xf32>
    %812 = vector.extract_strided_slice %811 {offsets = [0, 0], sizes = [4, 1], strides = [1, 1]} : vector<4x4xf32> to vector<4x1xf32>
    %813 = vector.extract_strided_slice %809 {offsets = [0, 0], sizes = [1, 256], strides = [1, 1]} : vector<4x256xf32> to vector<1x256xf32>
    %814 = vector.broadcast %812 : vector<4x1xf32> to vector<4x256xf32>
    %815 = vector.broadcast %813 : vector<1x256xf32> to vector<4x256xf32>
    %816 = arith.mulf %814, %815 : vector<4x256xf32>
    %817 = arith.addf %804, %816 : vector<4x256xf32>
    %818 = vector.extract_strided_slice %811 {offsets = [0, 1], sizes = [4, 1], strides = [1, 1]} : vector<4x4xf32> to vector<4x1xf32>
    %819 = vector.extract_strided_slice %809 {offsets = [1, 0], sizes = [1, 256], strides = [1, 1]} : vector<4x256xf32> to vector<1x256xf32>
    %820 = vector.broadcast %818 : vector<4x1xf32> to vector<4x256xf32>
    %821 = vector.broadcast %819 : vector<1x256xf32> to vector<4x256xf32>
    %822 = arith.mulf %820, %821 : vector<4x256xf32>
    %823 = arith.addf %817, %822 : vector<4x256xf32>
    %824 = vector.extract_strided_slice %811 {offsets = [0, 2], sizes = [4, 1], strides = [1, 1]} : vector<4x4xf32> to vector<4x1xf32>
    %825 = vector.extract_strided_slice %809 {offsets = [2, 0], sizes = [1, 256], strides = [1, 1]} : vector<4x256xf32> to vector<1x256xf32>
    %826 = vector.broadcast %824 : vector<4x1xf32> to vector<4x256xf32>
    %827 = vector.broadcast %825 : vector<1x256xf32> to vector<4x256xf32>
    %828 = arith.mulf %826, %827 : vector<4x256xf32>
    %829 = arith.addf %823, %828 : vector<4x256xf32>
    %830 = vector.extract_strided_slice %811 {offsets = [0, 3], sizes = [4, 1], strides = [1, 1]} : vector<4x4xf32> to vector<4x1xf32>
    %831 = vector.extract_strided_slice %809 {offsets = [3, 0], sizes = [1, 256], strides = [1, 1]} : vector<4x256xf32> to vector<1x256xf32>
    %832 = vector.broadcast %830 : vector<4x1xf32> to vector<4x256xf32>
    %833 = vector.broadcast %831 : vector<1x256xf32> to vector<4x256xf32>
    %834 = arith.mulf %832, %833 : vector<4x256xf32>
    %835 = arith.addf %829, %834 : vector<4x256xf32>
    %c239_i32_174 = arith.constant 239 : i32
    %836 = tpu.dynamic_rotate %585 by %c239_i32_174 dim 1 : vector<4x256xf32>, i32 -> vector<4x256xf32>
    %c8_175 = arith.constant 8 : index
    %c0_176 = arith.constant 0 : index
    %c0_177 = arith.constant 0 : index
    %837 = vector.load %arg1[%c8_175, %c0_176, %c0_177] : memref<9x1x256xf32, #tpu.memory_space<vmem>>, vector<1x1x256xf32>
    %838 = vector.shape_cast %837 : vector<1x1x256xf32> to vector<1x256xf32>
    %839 = vector.broadcast %838 : vector<1x256xf32> to vector<4x256xf32>
    %840 = arith.mulf %836, %839 : vector<4x256xf32>
    %c8_178 = arith.constant 8 : index
    %c0_179 = arith.constant 0 : index
    %c0_180 = arith.constant 0 : index
    %841 = vector.load %arg3[%c8_178, %c0_179, %c0_180] : memref<9x4x4xf32, #tpu.memory_space<vmem>>, vector<1x4x4xf32>
    %842 = vector.shape_cast %841 : vector<1x4x4xf32> to vector<4x4xf32>
    %843 = vector.extract_strided_slice %842 {offsets = [0, 0], sizes = [4, 1], strides = [1, 1]} : vector<4x4xf32> to vector<4x1xf32>
    %844 = vector.extract_strided_slice %840 {offsets = [0, 0], sizes = [1, 256], strides = [1, 1]} : vector<4x256xf32> to vector<1x256xf32>
    %845 = vector.broadcast %843 : vector<4x1xf32> to vector<4x256xf32>
    %846 = vector.broadcast %844 : vector<1x256xf32> to vector<4x256xf32>
    %847 = arith.mulf %845, %846 : vector<4x256xf32>
    %848 = arith.addf %835, %847 : vector<4x256xf32>
    %849 = vector.extract_strided_slice %842 {offsets = [0, 1], sizes = [4, 1], strides = [1, 1]} : vector<4x4xf32> to vector<4x1xf32>
    %850 = vector.extract_strided_slice %840 {offsets = [1, 0], sizes = [1, 256], strides = [1, 1]} : vector<4x256xf32> to vector<1x256xf32>
    %851 = vector.broadcast %849 : vector<4x1xf32> to vector<4x256xf32>
    %852 = vector.broadcast %850 : vector<1x256xf32> to vector<4x256xf32>
    %853 = arith.mulf %851, %852 : vector<4x256xf32>
    %854 = arith.addf %848, %853 : vector<4x256xf32>
    %855 = vector.extract_strided_slice %842 {offsets = [0, 2], sizes = [4, 1], strides = [1, 1]} : vector<4x4xf32> to vector<4x1xf32>
    %856 = vector.extract_strided_slice %840 {offsets = [2, 0], sizes = [1, 256], strides = [1, 1]} : vector<4x256xf32> to vector<1x256xf32>
    %857 = vector.broadcast %855 : vector<4x1xf32> to vector<4x256xf32>
    %858 = vector.broadcast %856 : vector<1x256xf32> to vector<4x256xf32>
    %859 = arith.mulf %857, %858 : vector<4x256xf32>
    %860 = arith.addf %854, %859 : vector<4x256xf32>
    %861 = vector.extract_strided_slice %842 {offsets = [0, 3], sizes = [4, 1], strides = [1, 1]} : vector<4x4xf32> to vector<4x1xf32>
    %862 = vector.extract_strided_slice %840 {offsets = [3, 0], sizes = [1, 256], strides = [1, 1]} : vector<4x256xf32> to vector<1x256xf32>
    %863 = vector.broadcast %861 : vector<4x1xf32> to vector<4x256xf32>
    %864 = vector.broadcast %862 : vector<1x256xf32> to vector<4x256xf32>
    %865 = arith.mulf %863, %864 : vector<4x256xf32>
    %866 = arith.addf %860, %865 : vector<4x256xf32>
    %cst_181 = arith.constant 0.000000e+00 : f32
    %867 = vector.broadcast %cst_181 : f32 to vector<4x256xf32>
    %c17_i32_182 = arith.constant 17 : i32
    %868 = tpu.dynamic_rotate %591 by %c17_i32_182 dim 1 : vector<4x256xf32>, i32 -> vector<4x256xf32>
    %c0_183 = arith.constant 0 : index
    %c0_184 = arith.constant 0 : index
    %c0_185 = arith.constant 0 : index
    %869 = vector.load %arg1[%c0_183, %c0_184, %c0_185] : memref<9x1x256xf32, #tpu.memory_space<vmem>>, vector<1x1x256xf32>
    %870 = vector.shape_cast %869 : vector<1x1x256xf32> to vector<1x256xf32>
    %871 = vector.broadcast %870 : vector<1x256xf32> to vector<4x256xf32>
    %872 = arith.mulf %868, %871 : vector<4x256xf32>
    %c0_186 = arith.constant 0 : index
    %c0_187 = arith.constant 0 : index
    %c0_188 = arith.constant 0 : index
    %873 = vector.load %arg3[%c0_186, %c0_187, %c0_188] : memref<9x4x4xf32, #tpu.memory_space<vmem>>, vector<1x4x4xf32>
    %874 = vector.shape_cast %873 : vector<1x4x4xf32> to vector<4x4xf32>
    %875 = vector.extract_strided_slice %874 {offsets = [0, 0], sizes = [4, 1], strides = [1, 1]} : vector<4x4xf32> to vector<4x1xf32>
    %876 = vector.extract_strided_slice %872 {offsets = [0, 0], sizes = [1, 256], strides = [1, 1]} : vector<4x256xf32> to vector<1x256xf32>
    %877 = vector.broadcast %875 : vector<4x1xf32> to vector<4x256xf32>
    %878 = vector.broadcast %876 : vector<1x256xf32> to vector<4x256xf32>
    %879 = arith.mulf %877, %878 : vector<4x256xf32>
    %880 = arith.addf %867, %879 : vector<4x256xf32>
    %881 = vector.extract_strided_slice %874 {offsets = [0, 1], sizes = [4, 1], strides = [1, 1]} : vector<4x4xf32> to vector<4x1xf32>
    %882 = vector.extract_strided_slice %872 {offsets = [1, 0], sizes = [1, 256], strides = [1, 1]} : vector<4x256xf32> to vector<1x256xf32>
    %883 = vector.broadcast %881 : vector<4x1xf32> to vector<4x256xf32>
    %884 = vector.broadcast %882 : vector<1x256xf32> to vector<4x256xf32>
    %885 = arith.mulf %883, %884 : vector<4x256xf32>
    %886 = arith.addf %880, %885 : vector<4x256xf32>
    %887 = vector.extract_strided_slice %874 {offsets = [0, 2], sizes = [4, 1], strides = [1, 1]} : vector<4x4xf32> to vector<4x1xf32>
    %888 = vector.extract_strided_slice %872 {offsets = [2, 0], sizes = [1, 256], strides = [1, 1]} : vector<4x256xf32> to vector<1x256xf32>
    %889 = vector.broadcast %887 : vector<4x1xf32> to vector<4x256xf32>
    %890 = vector.broadcast %888 : vector<1x256xf32> to vector<4x256xf32>
    %891 = arith.mulf %889, %890 : vector<4x256xf32>
    %892 = arith.addf %886, %891 : vector<4x256xf32>
    %893 = vector.extract_strided_slice %874 {offsets = [0, 3], sizes = [4, 1], strides = [1, 1]} : vector<4x4xf32> to vector<4x1xf32>
    %894 = vector.extract_strided_slice %872 {offsets = [3, 0], sizes = [1, 256], strides = [1, 1]} : vector<4x256xf32> to vector<1x256xf32>
    %895 = vector.broadcast %893 : vector<4x1xf32> to vector<4x256xf32>
    %896 = vector.broadcast %894 : vector<1x256xf32> to vector<4x256xf32>
    %897 = arith.mulf %895, %896 : vector<4x256xf32>
    %898 = arith.addf %892, %897 : vector<4x256xf32>
    %c16_i32_189 = arith.constant 16 : i32
    %899 = tpu.dynamic_rotate %591 by %c16_i32_189 dim 1 : vector<4x256xf32>, i32 -> vector<4x256xf32>
    %c1_190 = arith.constant 1 : index
    %c0_191 = arith.constant 0 : index
    %c0_192 = arith.constant 0 : index
    %900 = vector.load %arg1[%c1_190, %c0_191, %c0_192] : memref<9x1x256xf32, #tpu.memory_space<vmem>>, vector<1x1x256xf32>
    %901 = vector.shape_cast %900 : vector<1x1x256xf32> to vector<1x256xf32>
    %902 = vector.broadcast %901 : vector<1x256xf32> to vector<4x256xf32>
    %903 = arith.mulf %899, %902 : vector<4x256xf32>
    %c1_193 = arith.constant 1 : index
    %c0_194 = arith.constant 0 : index
    %c0_195 = arith.constant 0 : index
    %904 = vector.load %arg3[%c1_193, %c0_194, %c0_195] : memref<9x4x4xf32, #tpu.memory_space<vmem>>, vector<1x4x4xf32>
    %905 = vector.shape_cast %904 : vector<1x4x4xf32> to vector<4x4xf32>
    %906 = vector.extract_strided_slice %905 {offsets = [0, 0], sizes = [4, 1], strides = [1, 1]} : vector<4x4xf32> to vector<4x1xf32>
    %907 = vector.extract_strided_slice %903 {offsets = [0, 0], sizes = [1, 256], strides = [1, 1]} : vector<4x256xf32> to vector<1x256xf32>
    %908 = vector.broadcast %906 : vector<4x1xf32> to vector<4x256xf32>
    %909 = vector.broadcast %907 : vector<1x256xf32> to vector<4x256xf32>
    %910 = arith.mulf %908, %909 : vector<4x256xf32>
    %911 = arith.addf %898, %910 : vector<4x256xf32>
    %912 = vector.extract_strided_slice %905 {offsets = [0, 1], sizes = [4, 1], strides = [1, 1]} : vector<4x4xf32> to vector<4x1xf32>
    %913 = vector.extract_strided_slice %903 {offsets = [1, 0], sizes = [1, 256], strides = [1, 1]} : vector<4x256xf32> to vector<1x256xf32>
    %914 = vector.broadcast %912 : vector<4x1xf32> to vector<4x256xf32>
    %915 = vector.broadcast %913 : vector<1x256xf32> to vector<4x256xf32>
    %916 = arith.mulf %914, %915 : vector<4x256xf32>
    %917 = arith.addf %911, %916 : vector<4x256xf32>
    %918 = vector.extract_strided_slice %905 {offsets = [0, 2], sizes = [4, 1], strides = [1, 1]} : vector<4x4xf32> to vector<4x1xf32>
    %919 = vector.extract_strided_slice %903 {offsets = [2, 0], sizes = [1, 256], strides = [1, 1]} : vector<4x256xf32> to vector<1x256xf32>
    %920 = vector.broadcast %918 : vector<4x1xf32> to vector<4x256xf32>
    %921 = vector.broadcast %919 : vector<1x256xf32> to vector<4x256xf32>
    %922 = arith.mulf %920, %921 : vector<4x256xf32>
    %923 = arith.addf %917, %922 : vector<4x256xf32>
    %924 = vector.extract_strided_slice %905 {offsets = [0, 3], sizes = [4, 1], strides = [1, 1]} : vector<4x4xf32> to vector<4x1xf32>
    %925 = vector.extract_strided_slice %903 {offsets = [3, 0], sizes = [1, 256], strides = [1, 1]} : vector<4x256xf32> to vector<1x256xf32>
    %926 = vector.broadcast %924 : vector<4x1xf32> to vector<4x256xf32>
    %927 = vector.broadcast %925 : vector<1x256xf32> to vector<4x256xf32>
    %928 = arith.mulf %926, %927 : vector<4x256xf32>
    %929 = arith.addf %923, %928 : vector<4x256xf32>
    %c15_i32_196 = arith.constant 15 : i32
    %930 = tpu.dynamic_rotate %591 by %c15_i32_196 dim 1 : vector<4x256xf32>, i32 -> vector<4x256xf32>
    %c2_197 = arith.constant 2 : index
    %c0_198 = arith.constant 0 : index
    %c0_199 = arith.constant 0 : index
    %931 = vector.load %arg1[%c2_197, %c0_198, %c0_199] : memref<9x1x256xf32, #tpu.memory_space<vmem>>, vector<1x1x256xf32>
    %932 = vector.shape_cast %931 : vector<1x1x256xf32> to vector<1x256xf32>
    %933 = vector.broadcast %932 : vector<1x256xf32> to vector<4x256xf32>
    %934 = arith.mulf %930, %933 : vector<4x256xf32>
    %c2_200 = arith.constant 2 : index
    %c0_201 = arith.constant 0 : index
    %c0_202 = arith.constant 0 : index
    %935 = vector.load %arg3[%c2_200, %c0_201, %c0_202] : memref<9x4x4xf32, #tpu.memory_space<vmem>>, vector<1x4x4xf32>
    %936 = vector.shape_cast %935 : vector<1x4x4xf32> to vector<4x4xf32>
    %937 = vector.extract_strided_slice %936 {offsets = [0, 0], sizes = [4, 1], strides = [1, 1]} : vector<4x4xf32> to vector<4x1xf32>
    %938 = vector.extract_strided_slice %934 {offsets = [0, 0], sizes = [1, 256], strides = [1, 1]} : vector<4x256xf32> to vector<1x256xf32>
    %939 = vector.broadcast %937 : vector<4x1xf32> to vector<4x256xf32>
    %940 = vector.broadcast %938 : vector<1x256xf32> to vector<4x256xf32>
    %941 = arith.mulf %939, %940 : vector<4x256xf32>
    %942 = arith.addf %929, %941 : vector<4x256xf32>
    %943 = vector.extract_strided_slice %936 {offsets = [0, 1], sizes = [4, 1], strides = [1, 1]} : vector<4x4xf32> to vector<4x1xf32>
    %944 = vector.extract_strided_slice %934 {offsets = [1, 0], sizes = [1, 256], strides = [1, 1]} : vector<4x256xf32> to vector<1x256xf32>
    %945 = vector.broadcast %943 : vector<4x1xf32> to vector<4x256xf32>
    %946 = vector.broadcast %944 : vector<1x256xf32> to vector<4x256xf32>
    %947 = arith.mulf %945, %946 : vector<4x256xf32>
    %948 = arith.addf %942, %947 : vector<4x256xf32>
    %949 = vector.extract_strided_slice %936 {offsets = [0, 2], sizes = [4, 1], strides = [1, 1]} : vector<4x4xf32> to vector<4x1xf32>
    %950 = vector.extract_strided_slice %934 {offsets = [2, 0], sizes = [1, 256], strides = [1, 1]} : vector<4x256xf32> to vector<1x256xf32>
    %951 = vector.broadcast %949 : vector<4x1xf32> to vector<4x256xf32>
    %952 = vector.broadcast %950 : vector<1x256xf32> to vector<4x256xf32>
    %953 = arith.mulf %951, %952 : vector<4x256xf32>
    %954 = arith.addf %948, %953 : vector<4x256xf32>
    %955 = vector.extract_strided_slice %936 {offsets = [0, 3], sizes = [4, 1], strides = [1, 1]} : vector<4x4xf32> to vector<4x1xf32>
    %956 = vector.extract_strided_slice %934 {offsets = [3, 0], sizes = [1, 256], strides = [1, 1]} : vector<4x256xf32> to vector<1x256xf32>
    %957 = vector.broadcast %955 : vector<4x1xf32> to vector<4x256xf32>
    %958 = vector.broadcast %956 : vector<1x256xf32> to vector<4x256xf32>
    %959 = arith.mulf %957, %958 : vector<4x256xf32>
    %960 = arith.addf %954, %959 : vector<4x256xf32>
    %c1_i32_203 = arith.constant 1 : i32
    %961 = tpu.dynamic_rotate %591 by %c1_i32_203 dim 1 : vector<4x256xf32>, i32 -> vector<4x256xf32>
    %c3_204 = arith.constant 3 : index
    %c0_205 = arith.constant 0 : index
    %c0_206 = arith.constant 0 : index
    %962 = vector.load %arg1[%c3_204, %c0_205, %c0_206] : memref<9x1x256xf32, #tpu.memory_space<vmem>>, vector<1x1x256xf32>
    %963 = vector.shape_cast %962 : vector<1x1x256xf32> to vector<1x256xf32>
    %964 = vector.broadcast %963 : vector<1x256xf32> to vector<4x256xf32>
    %965 = arith.mulf %961, %964 : vector<4x256xf32>
    %c3_207 = arith.constant 3 : index
    %c0_208 = arith.constant 0 : index
    %c0_209 = arith.constant 0 : index
    %966 = vector.load %arg3[%c3_207, %c0_208, %c0_209] : memref<9x4x4xf32, #tpu.memory_space<vmem>>, vector<1x4x4xf32>
    %967 = vector.shape_cast %966 : vector<1x4x4xf32> to vector<4x4xf32>
    %968 = vector.extract_strided_slice %967 {offsets = [0, 0], sizes = [4, 1], strides = [1, 1]} : vector<4x4xf32> to vector<4x1xf32>
    %969 = vector.extract_strided_slice %965 {offsets = [0, 0], sizes = [1, 256], strides = [1, 1]} : vector<4x256xf32> to vector<1x256xf32>
    %970 = vector.broadcast %968 : vector<4x1xf32> to vector<4x256xf32>
    %971 = vector.broadcast %969 : vector<1x256xf32> to vector<4x256xf32>
    %972 = arith.mulf %970, %971 : vector<4x256xf32>
    %973 = arith.addf %960, %972 : vector<4x256xf32>
    %974 = vector.extract_strided_slice %967 {offsets = [0, 1], sizes = [4, 1], strides = [1, 1]} : vector<4x4xf32> to vector<4x1xf32>
    %975 = vector.extract_strided_slice %965 {offsets = [1, 0], sizes = [1, 256], strides = [1, 1]} : vector<4x256xf32> to vector<1x256xf32>
    %976 = vector.broadcast %974 : vector<4x1xf32> to vector<4x256xf32>
    %977 = vector.broadcast %975 : vector<1x256xf32> to vector<4x256xf32>
    %978 = arith.mulf %976, %977 : vector<4x256xf32>
    %979 = arith.addf %973, %978 : vector<4x256xf32>
    %980 = vector.extract_strided_slice %967 {offsets = [0, 2], sizes = [4, 1], strides = [1, 1]} : vector<4x4xf32> to vector<4x1xf32>
    %981 = vector.extract_strided_slice %965 {offsets = [2, 0], sizes = [1, 256], strides = [1, 1]} : vector<4x256xf32> to vector<1x256xf32>
    %982 = vector.broadcast %980 : vector<4x1xf32> to vector<4x256xf32>
    %983 = vector.broadcast %981 : vector<1x256xf32> to vector<4x256xf32>
    %984 = arith.mulf %982, %983 : vector<4x256xf32>
    %985 = arith.addf %979, %984 : vector<4x256xf32>
    %986 = vector.extract_strided_slice %967 {offsets = [0, 3], sizes = [4, 1], strides = [1, 1]} : vector<4x4xf32> to vector<4x1xf32>
    %987 = vector.extract_strided_slice %965 {offsets = [3, 0], sizes = [1, 256], strides = [1, 1]} : vector<4x256xf32> to vector<1x256xf32>
    %988 = vector.broadcast %986 : vector<4x1xf32> to vector<4x256xf32>
    %989 = vector.broadcast %987 : vector<1x256xf32> to vector<4x256xf32>
    %990 = arith.mulf %988, %989 : vector<4x256xf32>
    %991 = arith.addf %985, %990 : vector<4x256xf32>
    %c4_210 = arith.constant 4 : index
    %c0_211 = arith.constant 0 : index
    %c0_212 = arith.constant 0 : index
    %992 = vector.load %arg3[%c4_210, %c0_211, %c0_212] : memref<9x4x4xf32, #tpu.memory_space<vmem>>, vector<1x4x4xf32>
    %993 = vector.shape_cast %992 : vector<1x4x4xf32> to vector<4x4xf32>
    %994 = vector.extract_strided_slice %993 {offsets = [0, 0], sizes = [4, 1], strides = [1, 1]} : vector<4x4xf32> to vector<4x1xf32>
    %995 = vector.extract_strided_slice %591 {offsets = [0, 0], sizes = [1, 256], strides = [1, 1]} : vector<4x256xf32> to vector<1x256xf32>
    %996 = vector.broadcast %994 : vector<4x1xf32> to vector<4x256xf32>
    %997 = vector.broadcast %995 : vector<1x256xf32> to vector<4x256xf32>
    %998 = arith.mulf %996, %997 : vector<4x256xf32>
    %999 = arith.addf %991, %998 : vector<4x256xf32>
    %1000 = vector.extract_strided_slice %993 {offsets = [0, 1], sizes = [4, 1], strides = [1, 1]} : vector<4x4xf32> to vector<4x1xf32>
    %1001 = vector.extract_strided_slice %591 {offsets = [1, 0], sizes = [1, 256], strides = [1, 1]} : vector<4x256xf32> to vector<1x256xf32>
    %1002 = vector.broadcast %1000 : vector<4x1xf32> to vector<4x256xf32>
    %1003 = vector.broadcast %1001 : vector<1x256xf32> to vector<4x256xf32>
    %1004 = arith.mulf %1002, %1003 : vector<4x256xf32>
    %1005 = arith.addf %999, %1004 : vector<4x256xf32>
    %1006 = vector.extract_strided_slice %993 {offsets = [0, 2], sizes = [4, 1], strides = [1, 1]} : vector<4x4xf32> to vector<4x1xf32>
    %1007 = vector.extract_strided_slice %591 {offsets = [2, 0], sizes = [1, 256], strides = [1, 1]} : vector<4x256xf32> to vector<1x256xf32>
    %1008 = vector.broadcast %1006 : vector<4x1xf32> to vector<4x256xf32>
    %1009 = vector.broadcast %1007 : vector<1x256xf32> to vector<4x256xf32>
    %1010 = arith.mulf %1008, %1009 : vector<4x256xf32>
    %1011 = arith.addf %1005, %1010 : vector<4x256xf32>
    %1012 = vector.extract_strided_slice %993 {offsets = [0, 3], sizes = [4, 1], strides = [1, 1]} : vector<4x4xf32> to vector<4x1xf32>
    %1013 = vector.extract_strided_slice %591 {offsets = [3, 0], sizes = [1, 256], strides = [1, 1]} : vector<4x256xf32> to vector<1x256xf32>
    %1014 = vector.broadcast %1012 : vector<4x1xf32> to vector<4x256xf32>
    %1015 = vector.broadcast %1013 : vector<1x256xf32> to vector<4x256xf32>
    %1016 = arith.mulf %1014, %1015 : vector<4x256xf32>
    %1017 = arith.addf %1011, %1016 : vector<4x256xf32>
    %c255_i32_213 = arith.constant 255 : i32
    %1018 = tpu.dynamic_rotate %591 by %c255_i32_213 dim 1 : vector<4x256xf32>, i32 -> vector<4x256xf32>
    %c5_214 = arith.constant 5 : index
    %c0_215 = arith.constant 0 : index
    %c0_216 = arith.constant 0 : index
    %1019 = vector.load %arg1[%c5_214, %c0_215, %c0_216] : memref<9x1x256xf32, #tpu.memory_space<vmem>>, vector<1x1x256xf32>
    %1020 = vector.shape_cast %1019 : vector<1x1x256xf32> to vector<1x256xf32>
    %1021 = vector.broadcast %1020 : vector<1x256xf32> to vector<4x256xf32>
    %1022 = arith.mulf %1018, %1021 : vector<4x256xf32>
    %c5_217 = arith.constant 5 : index
    %c0_218 = arith.constant 0 : index
    %c0_219 = arith.constant 0 : index
    %1023 = vector.load %arg3[%c5_217, %c0_218, %c0_219] : memref<9x4x4xf32, #tpu.memory_space<vmem>>, vector<1x4x4xf32>
    %1024 = vector.shape_cast %1023 : vector<1x4x4xf32> to vector<4x4xf32>
    %1025 = vector.extract_strided_slice %1024 {offsets = [0, 0], sizes = [4, 1], strides = [1, 1]} : vector<4x4xf32> to vector<4x1xf32>
    %1026 = vector.extract_strided_slice %1022 {offsets = [0, 0], sizes = [1, 256], strides = [1, 1]} : vector<4x256xf32> to vector<1x256xf32>
    %1027 = vector.broadcast %1025 : vector<4x1xf32> to vector<4x256xf32>
    %1028 = vector.broadcast %1026 : vector<1x256xf32> to vector<4x256xf32>
    %1029 = arith.mulf %1027, %1028 : vector<4x256xf32>
    %1030 = arith.addf %1017, %1029 : vector<4x256xf32>
    %1031 = vector.extract_strided_slice %1024 {offsets = [0, 1], sizes = [4, 1], strides = [1, 1]} : vector<4x4xf32> to vector<4x1xf32>
    %1032 = vector.extract_strided_slice %1022 {offsets = [1, 0], sizes = [1, 256], strides = [1, 1]} : vector<4x256xf32> to vector<1x256xf32>
    %1033 = vector.broadcast %1031 : vector<4x1xf32> to vector<4x256xf32>
    %1034 = vector.broadcast %1032 : vector<1x256xf32> to vector<4x256xf32>
    %1035 = arith.mulf %1033, %1034 : vector<4x256xf32>
    %1036 = arith.addf %1030, %1035 : vector<4x256xf32>
    %1037 = vector.extract_strided_slice %1024 {offsets = [0, 2], sizes = [4, 1], strides = [1, 1]} : vector<4x4xf32> to vector<4x1xf32>
    %1038 = vector.extract_strided_slice %1022 {offsets = [2, 0], sizes = [1, 256], strides = [1, 1]} : vector<4x256xf32> to vector<1x256xf32>
    %1039 = vector.broadcast %1037 : vector<4x1xf32> to vector<4x256xf32>
    %1040 = vector.broadcast %1038 : vector<1x256xf32> to vector<4x256xf32>
    %1041 = arith.mulf %1039, %1040 : vector<4x256xf32>
    %1042 = arith.addf %1036, %1041 : vector<4x256xf32>
    %1043 = vector.extract_strided_slice %1024 {offsets = [0, 3], sizes = [4, 1], strides = [1, 1]} : vector<4x4xf32> to vector<4x1xf32>
    %1044 = vector.extract_strided_slice %1022 {offsets = [3, 0], sizes = [1, 256], strides = [1, 1]} : vector<4x256xf32> to vector<1x256xf32>
    %1045 = vector.broadcast %1043 : vector<4x1xf32> to vector<4x256xf32>
    %1046 = vector.broadcast %1044 : vector<1x256xf32> to vector<4x256xf32>
    %1047 = arith.mulf %1045, %1046 : vector<4x256xf32>
    %1048 = arith.addf %1042, %1047 : vector<4x256xf32>
    %c241_i32_220 = arith.constant 241 : i32
    %1049 = tpu.dynamic_rotate %591 by %c241_i32_220 dim 1 : vector<4x256xf32>, i32 -> vector<4x256xf32>
    %c6_221 = arith.constant 6 : index
    %c0_222 = arith.constant 0 : index
    %c0_223 = arith.constant 0 : index
    %1050 = vector.load %arg1[%c6_221, %c0_222, %c0_223] : memref<9x1x256xf32, #tpu.memory_space<vmem>>, vector<1x1x256xf32>
    %1051 = vector.shape_cast %1050 : vector<1x1x256xf32> to vector<1x256xf32>
    %1052 = vector.broadcast %1051 : vector<1x256xf32> to vector<4x256xf32>
    %1053 = arith.mulf %1049, %1052 : vector<4x256xf32>
    %c6_224 = arith.constant 6 : index
    %c0_225 = arith.constant 0 : index
    %c0_226 = arith.constant 0 : index
    %1054 = vector.load %arg3[%c6_224, %c0_225, %c0_226] : memref<9x4x4xf32, #tpu.memory_space<vmem>>, vector<1x4x4xf32>
    %1055 = vector.shape_cast %1054 : vector<1x4x4xf32> to vector<4x4xf32>
    %1056 = vector.extract_strided_slice %1055 {offsets = [0, 0], sizes = [4, 1], strides = [1, 1]} : vector<4x4xf32> to vector<4x1xf32>
    %1057 = vector.extract_strided_slice %1053 {offsets = [0, 0], sizes = [1, 256], strides = [1, 1]} : vector<4x256xf32> to vector<1x256xf32>
    %1058 = vector.broadcast %1056 : vector<4x1xf32> to vector<4x256xf32>
    %1059 = vector.broadcast %1057 : vector<1x256xf32> to vector<4x256xf32>
    %1060 = arith.mulf %1058, %1059 : vector<4x256xf32>
    %1061 = arith.addf %1048, %1060 : vector<4x256xf32>
    %1062 = vector.extract_strided_slice %1055 {offsets = [0, 1], sizes = [4, 1], strides = [1, 1]} : vector<4x4xf32> to vector<4x1xf32>
    %1063 = vector.extract_strided_slice %1053 {offsets = [1, 0], sizes = [1, 256], strides = [1, 1]} : vector<4x256xf32> to vector<1x256xf32>
    %1064 = vector.broadcast %1062 : vector<4x1xf32> to vector<4x256xf32>
    %1065 = vector.broadcast %1063 : vector<1x256xf32> to vector<4x256xf32>
    %1066 = arith.mulf %1064, %1065 : vector<4x256xf32>
    %1067 = arith.addf %1061, %1066 : vector<4x256xf32>
    %1068 = vector.extract_strided_slice %1055 {offsets = [0, 2], sizes = [4, 1], strides = [1, 1]} : vector<4x4xf32> to vector<4x1xf32>
    %1069 = vector.extract_strided_slice %1053 {offsets = [2, 0], sizes = [1, 256], strides = [1, 1]} : vector<4x256xf32> to vector<1x256xf32>
    %1070 = vector.broadcast %1068 : vector<4x1xf32> to vector<4x256xf32>
    %1071 = vector.broadcast %1069 : vector<1x256xf32> to vector<4x256xf32>
    %1072 = arith.mulf %1070, %1071 : vector<4x256xf32>
    %1073 = arith.addf %1067, %1072 : vector<4x256xf32>
    %1074 = vector.extract_strided_slice %1055 {offsets = [0, 3], sizes = [4, 1], strides = [1, 1]} : vector<4x4xf32> to vector<4x1xf32>
    %1075 = vector.extract_strided_slice %1053 {offsets = [3, 0], sizes = [1, 256], strides = [1, 1]} : vector<4x256xf32> to vector<1x256xf32>
    %1076 = vector.broadcast %1074 : vector<4x1xf32> to vector<4x256xf32>
    %1077 = vector.broadcast %1075 : vector<1x256xf32> to vector<4x256xf32>
    %1078 = arith.mulf %1076, %1077 : vector<4x256xf32>
    %1079 = arith.addf %1073, %1078 : vector<4x256xf32>
    %c240_i32_227 = arith.constant 240 : i32
    %1080 = tpu.dynamic_rotate %591 by %c240_i32_227 dim 1 : vector<4x256xf32>, i32 -> vector<4x256xf32>
    %c7_228 = arith.constant 7 : index
    %c0_229 = arith.constant 0 : index
    %c0_230 = arith.constant 0 : index
    %1081 = vector.load %arg1[%c7_228, %c0_229, %c0_230] : memref<9x1x256xf32, #tpu.memory_space<vmem>>, vector<1x1x256xf32>
    %1082 = vector.shape_cast %1081 : vector<1x1x256xf32> to vector<1x256xf32>
    %1083 = vector.broadcast %1082 : vector<1x256xf32> to vector<4x256xf32>
    %1084 = arith.mulf %1080, %1083 : vector<4x256xf32>
    %c7_231 = arith.constant 7 : index
    %c0_232 = arith.constant 0 : index
    %c0_233 = arith.constant 0 : index
    %1085 = vector.load %arg3[%c7_231, %c0_232, %c0_233] : memref<9x4x4xf32, #tpu.memory_space<vmem>>, vector<1x4x4xf32>
    %1086 = vector.shape_cast %1085 : vector<1x4x4xf32> to vector<4x4xf32>
    %1087 = vector.extract_strided_slice %1086 {offsets = [0, 0], sizes = [4, 1], strides = [1, 1]} : vector<4x4xf32> to vector<4x1xf32>
    %1088 = vector.extract_strided_slice %1084 {offsets = [0, 0], sizes = [1, 256], strides = [1, 1]} : vector<4x256xf32> to vector<1x256xf32>
    %1089 = vector.broadcast %1087 : vector<4x1xf32> to vector<4x256xf32>
    %1090 = vector.broadcast %1088 : vector<1x256xf32> to vector<4x256xf32>
    %1091 = arith.mulf %1089, %1090 : vector<4x256xf32>
    %1092 = arith.addf %1079, %1091 : vector<4x256xf32>
    %1093 = vector.extract_strided_slice %1086 {offsets = [0, 1], sizes = [4, 1], strides = [1, 1]} : vector<4x4xf32> to vector<4x1xf32>
    %1094 = vector.extract_strided_slice %1084 {offsets = [1, 0], sizes = [1, 256], strides = [1, 1]} : vector<4x256xf32> to vector<1x256xf32>
    %1095 = vector.broadcast %1093 : vector<4x1xf32> to vector<4x256xf32>
    %1096 = vector.broadcast %1094 : vector<1x256xf32> to vector<4x256xf32>
    %1097 = arith.mulf %1095, %1096 : vector<4x256xf32>
    %1098 = arith.addf %1092, %1097 : vector<4x256xf32>
    %1099 = vector.extract_strided_slice %1086 {offsets = [0, 2], sizes = [4, 1], strides = [1, 1]} : vector<4x4xf32> to vector<4x1xf32>
    %1100 = vector.extract_strided_slice %1084 {offsets = [2, 0], sizes = [1, 256], strides = [1, 1]} : vector<4x256xf32> to vector<1x256xf32>
    %1101 = vector.broadcast %1099 : vector<4x1xf32> to vector<4x256xf32>
    %1102 = vector.broadcast %1100 : vector<1x256xf32> to vector<4x256xf32>
    %1103 = arith.mulf %1101, %1102 : vector<4x256xf32>
    %1104 = arith.addf %1098, %1103 : vector<4x256xf32>
    %1105 = vector.extract_strided_slice %1086 {offsets = [0, 3], sizes = [4, 1], strides = [1, 1]} : vector<4x4xf32> to vector<4x1xf32>
    %1106 = vector.extract_strided_slice %1084 {offsets = [3, 0], sizes = [1, 256], strides = [1, 1]} : vector<4x256xf32> to vector<1x256xf32>
    %1107 = vector.broadcast %1105 : vector<4x1xf32> to vector<4x256xf32>
    %1108 = vector.broadcast %1106 : vector<1x256xf32> to vector<4x256xf32>
    %1109 = arith.mulf %1107, %1108 : vector<4x256xf32>
    %1110 = arith.addf %1104, %1109 : vector<4x256xf32>
    %c239_i32_234 = arith.constant 239 : i32
    %1111 = tpu.dynamic_rotate %591 by %c239_i32_234 dim 1 : vector<4x256xf32>, i32 -> vector<4x256xf32>
    %c8_235 = arith.constant 8 : index
    %c0_236 = arith.constant 0 : index
    %c0_237 = arith.constant 0 : index
    %1112 = vector.load %arg1[%c8_235, %c0_236, %c0_237] : memref<9x1x256xf32, #tpu.memory_space<vmem>>, vector<1x1x256xf32>
    %1113 = vector.shape_cast %1112 : vector<1x1x256xf32> to vector<1x256xf32>
    %1114 = vector.broadcast %1113 : vector<1x256xf32> to vector<4x256xf32>
    %1115 = arith.mulf %1111, %1114 : vector<4x256xf32>
    %c8_238 = arith.constant 8 : index
    %c0_239 = arith.constant 0 : index
    %c0_240 = arith.constant 0 : index
    %1116 = vector.load %arg3[%c8_238, %c0_239, %c0_240] : memref<9x4x4xf32, #tpu.memory_space<vmem>>, vector<1x4x4xf32>
    %1117 = vector.shape_cast %1116 : vector<1x4x4xf32> to vector<4x4xf32>
    %1118 = vector.extract_strided_slice %1117 {offsets = [0, 0], sizes = [4, 1], strides = [1, 1]} : vector<4x4xf32> to vector<4x1xf32>
    %1119 = vector.extract_strided_slice %1115 {offsets = [0, 0], sizes = [1, 256], strides = [1, 1]} : vector<4x256xf32> to vector<1x256xf32>
    %1120 = vector.broadcast %1118 : vector<4x1xf32> to vector<4x256xf32>
    %1121 = vector.broadcast %1119 : vector<1x256xf32> to vector<4x256xf32>
    %1122 = arith.mulf %1120, %1121 : vector<4x256xf32>
    %1123 = arith.addf %1110, %1122 : vector<4x256xf32>
    %1124 = vector.extract_strided_slice %1117 {offsets = [0, 1], sizes = [4, 1], strides = [1, 1]} : vector<4x4xf32> to vector<4x1xf32>
    %1125 = vector.extract_strided_slice %1115 {offsets = [1, 0], sizes = [1, 256], strides = [1, 1]} : vector<4x256xf32> to vector<1x256xf32>
    %1126 = vector.broadcast %1124 : vector<4x1xf32> to vector<4x256xf32>
    %1127 = vector.broadcast %1125 : vector<1x256xf32> to vector<4x256xf32>
    %1128 = arith.mulf %1126, %1127 : vector<4x256xf32>
    %1129 = arith.addf %1123, %1128 : vector<4x256xf32>
    %1130 = vector.extract_strided_slice %1117 {offsets = [0, 2], sizes = [4, 1], strides = [1, 1]} : vector<4x4xf32> to vector<4x1xf32>
    %1131 = vector.extract_strided_slice %1115 {offsets = [2, 0], sizes = [1, 256], strides = [1, 1]} : vector<4x256xf32> to vector<1x256xf32>
    %1132 = vector.broadcast %1130 : vector<4x1xf32> to vector<4x256xf32>
    %1133 = vector.broadcast %1131 : vector<1x256xf32> to vector<4x256xf32>
    %1134 = arith.mulf %1132, %1133 : vector<4x256xf32>
    %1135 = arith.addf %1129, %1134 : vector<4x256xf32>
    %1136 = vector.extract_strided_slice %1117 {offsets = [0, 3], sizes = [4, 1], strides = [1, 1]} : vector<4x4xf32> to vector<4x1xf32>
    %1137 = vector.extract_strided_slice %1115 {offsets = [3, 0], sizes = [1, 256], strides = [1, 1]} : vector<4x256xf32> to vector<1x256xf32>
    %1138 = vector.broadcast %1136 : vector<4x1xf32> to vector<4x256xf32>
    %1139 = vector.broadcast %1137 : vector<1x256xf32> to vector<4x256xf32>
    %1140 = arith.mulf %1138, %1139 : vector<4x256xf32>
    %1141 = arith.addf %1135, %1140 : vector<4x256xf32>
    %cst_241 = arith.constant dense<0.000000e+00> : vector<4xf32>
    %1142 = vector.multi_reduction <add>, %866, %cst_241 [1] : vector<4x256xf32> to vector<4xf32>
    %1143 = vector.shape_cast %1142 : vector<4xf32> to vector<4x1xf32>
    %1144 = arith.mulf %866, %866 : vector<4x256xf32>
    %cst_242 = arith.constant dense<0.000000e+00> : vector<4xf32>
    %1145 = vector.multi_reduction <add>, %1144, %cst_242 [1] : vector<4x256xf32> to vector<4xf32>
    %1146 = vector.shape_cast %1145 : vector<4xf32> to vector<4x1xf32>
    %cst_243 = arith.constant dense<0.000000e+00> : vector<4xf32>
    %1147 = vector.multi_reduction <add>, %1141, %cst_243 [1] : vector<4x256xf32> to vector<4xf32>
    %1148 = vector.shape_cast %1147 : vector<4xf32> to vector<4x1xf32>
    %1149 = arith.addf %1143, %1148 : vector<4x1xf32>
    %1150 = arith.mulf %1141, %1141 : vector<4x256xf32>
    %cst_244 = arith.constant dense<0.000000e+00> : vector<4xf32>
    %1151 = vector.multi_reduction <add>, %1150, %cst_244 [1] : vector<4x256xf32> to vector<4xf32>
    %1152 = vector.shape_cast %1151 : vector<4xf32> to vector<4x1xf32>
    %1153 = arith.addf %1146, %1152 : vector<4x1xf32>
    %cst_245 = arith.constant 0.001953125 : f32
    %1154 = vector.broadcast %cst_245 : f32 to vector<4x1xf32>
    %1155 = arith.mulf %1149, %1154 : vector<4x1xf32>
    %cst_246 = arith.constant 0.001953125 : f32
    %1156 = vector.broadcast %cst_246 : f32 to vector<4x1xf32>
    %1157 = arith.mulf %1153, %1156 : vector<4x1xf32>
    %1158 = arith.mulf %1155, %1155 : vector<4x1xf32>
    %1159 = arith.subf %1157, %1158 : vector<4x1xf32>
    %cst_247 = arith.constant 9.99999974E-6 : f32
    %1160 = vector.broadcast %cst_247 : f32 to vector<4x1xf32>
    %1161 = arith.addf %1159, %1160 : vector<4x1xf32>
    %1162 = math.rsqrt %1161 : vector<4x1xf32>
    %c0_248 = arith.constant 0 : index
    %c0_249 = arith.constant 0 : index
    %1163 = vector.load %arg6[%c0_248, %c0_249] : memref<4x1xf32, #tpu.memory_space<vmem>>, vector<4x1xf32>
    %1164 = arith.mulf %1163, %1162 : vector<4x1xf32>
    %c0_250 = arith.constant 0 : index
    %c0_251 = arith.constant 0 : index
    %1165 = vector.load %arg7[%c0_250, %c0_251] : memref<4x1xf32, #tpu.memory_space<vmem>>, vector<4x1xf32>
    %1166 = arith.mulf %1155, %1164 : vector<4x1xf32>
    %1167 = arith.subf %1165, %1166 : vector<4x1xf32>
    %1168 = vector.broadcast %1164 : vector<4x1xf32> to vector<4x256xf32>
    %1169 = arith.mulf %866, %1168 : vector<4x256xf32>
    %1170 = vector.broadcast %1167 : vector<4x1xf32> to vector<4x256xf32>
    %1171 = arith.addf %1169, %1170 : vector<4x256xf32>
    %1172 = arith.addf %1171, %1 : vector<4x256xf32>
    %cst_252 = arith.constant 0.000000e+00 : f32
    %1173 = vector.broadcast %cst_252 : f32 to vector<4x256xf32>
    %1174 = arith.maximumf %1172, %1173 : vector<4x256xf32>
    %c0_253 = arith.constant 0 : index
    %c0_254 = arith.constant 0 : index
    %c0_255 = arith.constant 0 : index
    %1175 = vector.load %arg8[%c0_253, %c0_254, %c0_255] : memref<2x4x256xf32, #tpu.memory_space<vmem>>, vector<1x4x256xf32>
    %1176 = vector.shape_cast %1175 : vector<1x4x256xf32> to vector<4x256xf32>
    %1177 = vector.shape_cast %1174 : vector<4x256xf32> to vector<1x4x256xf32>
    tpu.vector_store %arg8[%c0_253, %c0_254, %c0_255], %1177 {strides = array<i32>} : memref<2x4x256xf32, #tpu.memory_space<vmem>>, vector<1x4x256xf32>,
    %1178 = vector.broadcast %1164 : vector<4x1xf32> to vector<4x256xf32>
    %1179 = arith.mulf %1141, %1178 : vector<4x256xf32>
    %1180 = vector.broadcast %1167 : vector<4x1xf32> to vector<4x256xf32>
    %1181 = arith.addf %1179, %1180 : vector<4x256xf32>
    %1182 = arith.addf %1181, %3 : vector<4x256xf32>
    %cst_256 = arith.constant 0.000000e+00 : f32
    %1183 = vector.broadcast %cst_256 : f32 to vector<4x256xf32>
    %1184 = arith.maximumf %1182, %1183 : vector<4x256xf32>
    %c1_257 = arith.constant 1 : index
    %c0_258 = arith.constant 0 : index
    %c0_259 = arith.constant 0 : index
    %1185 = vector.load %arg8[%c1_257, %c0_258, %c0_259] : memref<2x4x256xf32, #tpu.memory_space<vmem>>, vector<1x4x256xf32>
    %1186 = vector.shape_cast %1185 : vector<1x4x256xf32> to vector<4x256xf32>
    %1187 = vector.shape_cast %1184 : vector<4x256xf32> to vector<1x4x256xf32>
    tpu.vector_store %arg8[%c1_257, %c0_258, %c0_259], %1187 {strides = array<i32>} : memref<2x4x256xf32, #tpu.memory_space<vmem>>, vector<1x4x256xf32>,
    return
  }
}

</mosaic_0001>

<llo_original>
// kernel: basic_block_forward.1
$region0: #{basic_block_forward.1}
  #allocation0 [shape = 'u32[]', space=smem, size = 0x4, offset = 0x4, fixed_abs, tag = 'smem constant byte address 0x4 - core index']
  #allocation1 [shape = 'u32[144,128]{1,0:T(1,128)}', space=vmem, size = 0x12000, scoped, tag = 'internal scratch']
  %s0 = inlined_call_operand.vmem [shape: f32[2,4,256], index: 0, kind: input, shape index: {}]
  %s1 = inlined_call_operand.vmem [shape: f32[9,1,256], index: 1, kind: input, shape index: {}]
  %s2 = inlined_call_operand.vmem [shape: f32[9,4,4], index: 2, kind: input, shape index: {}]
  %s3 = inlined_call_operand.vmem [shape: f32[9,4,4], index: 3, kind: input, shape index: {}]
  %s4 = inlined_call_operand.vmem [shape: f32[4,1], index: 4, kind: input, shape index: {}]
  %s5 = inlined_call_operand.vmem [shape: f32[4,1], index: 5, kind: input, shape index: {}]
  %s6 = inlined_call_operand.vmem [shape: f32[4,1], index: 6, kind: input, shape index: {}]
  %s7 = inlined_call_operand.vmem [shape: f32[4,1], index: 7, kind: input, shape index: {}]
  %s8 = inlined_call_operand.vmem [shape: f32[2,4,256], index: 8, kind: output, shape index: {}]
  %s9 = sld [smem:[#allocation0]]
  $region42: #{basic_block_forward.1} parent=0
    _
  %s11 = ssub.s32 1, %s9
  %s12 = scalar_select 0, %s11, %s9
  // Predicated region
  $region2: #{basic_block_forward.1} parent=0 // pred_check
    _
  $region3: #{basic_block_forward.1} parent=0 // pred_check_branch
    %14 = sbr.rel (0) target = $region5
  $region4: #{basic_block_forward.1} parent=0 // pred_region
    _
  $region5: #{basic_block_forward.1} parent=0 // pred_fallthru
    _
  // Predicated region
  $region6: #{basic_block_forward.1} parent=0 // pred_check
    _
  $region7: #{basic_block_forward.1} parent=0 // pred_check_branch
    %16 = sbr.rel (0) target = $region9
  $region8: #{basic_block_forward.1} parent=0 // pred_region
    _
  $region9: #{basic_block_forward.1} parent=0 // pred_fallthru
    _
  // Predicated region
  $region10: #{basic_block_forward.1} parent=0 // pred_check
    _
  $region11: #{basic_block_forward.1} parent=0 // pred_check_branch
    %18 = sbr.rel (0) target = $region13
  $region12: #{basic_block_forward.1} parent=0 // pred_region
    _
  $region13: #{basic_block_forward.1} parent=0 // pred_fallthru
    _
  // Predicated region
  $region14: #{basic_block_forward.1} parent=0 // pred_check
    _
  $region15: #{basic_block_forward.1} parent=0 // pred_check_branch
    %20 = sbr.rel (0) target = $region17
  $region16: #{basic_block_forward.1} parent=0 // pred_region
    _
  $region17: #{basic_block_forward.1} parent=0 // pred_fallthru
    _
  // Predicated region
  $region18: #{basic_block_forward.1} parent=0 // pred_check
    _
  $region19: #{basic_block_forward.1} parent=0 // pred_check_branch
    %22 = sbr.rel (0) target = $region21
  $region20: #{basic_block_forward.1} parent=0 // pred_region
    _
  $region21: #{basic_block_forward.1} parent=0 // pred_fallthru
    _
  // Predicated region
  $region22: #{basic_block_forward.1} parent=0 // pred_check
    _
  $region23: #{basic_block_forward.1} parent=0 // pred_check_branch
    %24 = sbr.rel (0) target = $region25
  $region24: #{basic_block_forward.1} parent=0 // pred_region
    _
  $region25: #{basic_block_forward.1} parent=0 // pred_fallthru
    _
  // Predicated region
  $region26: #{basic_block_forward.1} parent=0 // pred_check
    _
  $region27: #{basic_block_forward.1} parent=0 // pred_check_branch
    %26 = sbr.rel (0) target = $region29
  $region28: #{basic_block_forward.1} parent=0 // pred_region
    _
  $region29: #{basic_block_forward.1} parent=0 // pred_fallthru
    _
  // Predicated region
  $region30: #{basic_block_forward.1} parent=0 // pred_check
    _
  $region31: #{basic_block_forward.1} parent=0 // pred_check_branch
    %28 = sbr.rel (0) target = $region33
  $region32: #{basic_block_forward.1} parent=0 // pred_region
    _
  $region33: #{basic_block_forward.1} parent=0 // pred_fallthru
    _
  %v29 = vld [vmem:[%s0] sm:$0xff]
  %s30 = scalar_lea.vmem %s0, 8
  %v31 = vld [vmem:[%s30] sm:$0xff]
  %v33 = vcombine.high %v29, %v29
  %35 = vrot.lane.b32.xlu0 %v29, 17
  %v36 = vpop.permute.xlu0 %35
  %37 = vrot.lane.b32.xlu0 %v33, 17
  %v38 = vpop.permute.xlu0 %37
  %v39 = vlaneseq
  %v40 = vand.u32 %v39, 127
  %vm41 = vcmp.lt.s32.totalorder %v40, 17
  %v42 = vsel %vm41, %v36, %v38
  %v43 = vsel %vm41, %v38, %v36
  %v44 = vld [vmem:[%s1] sm:$0x3]
  %v46 = vlaneseq
  %v47 = vshrl.u32 %v46, 7
  %v48 = vsub.s32 0, %v47
  %v49 = vrot.slane %v44, %v48
  %v50 = vlaneseq
  %v51 = vshrl.u32 %v50, 7
  %v52 = vsub.s32 1, %v51
  %v53 = vrot.slane %v44, %v52
  %v56 = vmul.f32 %v43, %v49
  %v57 = vmul.f32 %v42, %v53
  %v58 = vld [vmem:[%s2] sm:$0xf]
  %60 = vset.pattern.permute.xlu0 0
  %61 = vperm.xlu0 %60, %v58
  %v62 = vpop.permute.xlu0 %61
  %v64 = vlaneseq
  %v65 = vshrl.u32 %v64, 7
  %v66 = vsub.s32 0, %v65
  %v67 = vrot.slane %v56, %v66
  %v68 = vlaneseq
  %v69 = vshrl.u32 %v68, 7
  %v70 = vsub.s32 0, %v69
  %v71 = vrot.slane %v57, %v70
  %v72 = vmul.f32 %v62, %v67
  %v73 = vmul.f32 %v62, %v71
  %v74 = vadd.f32 %v72, 0.0
  %v75 = vadd.f32 %v73, 0.0
  %76 = vset.pattern.permute.xlu0 1
  %77 = vperm.xlu0 %76, %v58
  %v78 = vpop.permute.xlu0 %77
  %v80 = vlaneseq
  %v81 = vshrl.u32 %v80, 7
  %v82 = vsub.s32 1, %v81
  %v83 = vrot.slane %v56, %v82
  %v84 = vlaneseq
  %v85 = vshrl.u32 %v84, 7
  %v86 = vsub.s32 1, %v85
  %v87 = vrot.slane %v57, %v86
  %v88 = vmul.f32 %v78, %v83
  %v89 = vmul.f32 %v78, %v87
  %v90 = vadd.f32 %v74, %v88
  %v91 = vadd.f32 %v75, %v89
  %92 = vset.pattern.permute.xlu0 2
  %93 = vperm.xlu0 %92, %v58
  %v94 = vpop.permute.xlu0 %93
  %v96 = vlaneseq
  %v97 = vshrl.u32 %v96, 7
  %v98 = vsub.s32 2, %v97
  %v99 = vrot.slane %v56, %v98
  %v100 = vlaneseq
  %v101 = vshrl.u32 %v100, 7
  %v102 = vsub.s32 2, %v101
  %v103 = vrot.slane %v57, %v102
  %v104 = vmul.f32 %v94, %v99
  %v105 = vmul.f32 %v94, %v103
  %v106 = vadd.f32 %v90, %v104
  %v107 = vadd.f32 %v91, %v105
  %108 = vset.pattern.permute.xlu0 3
  %109 = vperm.xlu0 %108, %v58
  %v110 = vpop.permute.xlu0 %109
  %v112 = vlaneseq
  %v113 = vshrl.u32 %v112, 7
  %v114 = vsub.s32 3, %v113
  %v115 = vrot.slane %v56, %v114
  %v116 = vlaneseq
  %v117 = vshrl.u32 %v116, 7
  %v118 = vsub.s32 3, %v117
  %v119 = vrot.slane %v57, %v118
  %v120 = vmul.f32 %v110, %v115
  %v121 = vmul.f32 %v110, %v119
  %v122 = vadd.f32 %v106, %v120
  %v123 = vadd.f32 %v107, %v121
  %124 = vrot.lane.b32.xlu0 %v29, 16
  %v125 = vpop.permute.xlu0 %124
  %126 = vrot.lane.b32.xlu0 %v33, 16
  %v127 = vpop.permute.xlu0 %126
  %vm128 = vcmp.lt.s32.totalorder %v40, 16
  %v129 = vsel %vm128, %v125, %v127
  %v130 = vsel %vm128, %v127, %v125
  %s131 = scalar_lea.vmem %s1, 2
  %v132 = vld [vmem:[%s131] sm:$0x3]
  %v134 = vlaneseq
  %v135 = vshrl.u32 %v134, 7
  %v136 = vsub.s32 0, %v135
  %v137 = vrot.slane %v132, %v136
  %v138 = vlaneseq
  %v139 = vshrl.u32 %v138, 7
  %v140 = vsub.s32 1, %v139
  %v141 = vrot.slane %v132, %v140
  %v144 = vmul.f32 %v130, %v137
  %v145 = vmul.f32 %v129, %v141
  %s146 = scalar_lea.vmem %s2, 4
  %v147 = vld [vmem:[%s146] sm:$0xf]
  %149 = vset.pattern.permute.xlu0 0
  %150 = vperm.xlu0 %149, %v147
  %v151 = vpop.permute.xlu0 %150
  %v153 = vlaneseq
  %v154 = vshrl.u32 %v153, 7
  %v155 = vsub.s32 0, %v154
  %v156 = vrot.slane %v144, %v155
  %v157 = vlaneseq
  %v158 = vshrl.u32 %v157, 7
  %v159 = vsub.s32 0, %v158
  %v160 = vrot.slane %v145, %v159
  %v161 = vmul.f32 %v151, %v156
  %v162 = vmul.f32 %v151, %v160
  %v163 = vadd.f32 %v122, %v161
  %v164 = vadd.f32 %v123, %v162
  %165 = vset.pattern.permute.xlu0 1
  %166 = vperm.xlu0 %165, %v147
  %v167 = vpop.permute.xlu0 %166
  %v169 = vlaneseq
  %v170 = vshrl.u32 %v169, 7
  %v171 = vsub.s32 1, %v170
  %v172 = vrot.slane %v144, %v171
  %v173 = vlaneseq
  %v174 = vshrl.u32 %v173, 7
  %v175 = vsub.s32 1, %v174
  %v176 = vrot.slane %v145, %v175
  %v177 = vmul.f32 %v167, %v172
  %v178 = vmul.f32 %v167, %v176
  %v179 = vadd.f32 %v163, %v177
  %v180 = vadd.f32 %v164, %v178
  %181 = vset.pattern.permute.xlu0 2
  %182 = vperm.xlu0 %181, %v147
  %v183 = vpop.permute.xlu0 %182
  %v185 = vlaneseq
  %v186 = vshrl.u32 %v185, 7
  %v187 = vsub.s32 2, %v186
  %v188 = vrot.slane %v144, %v187
  %v189 = vlaneseq
  %v190 = vshrl.u32 %v189, 7
  %v191 = vsub.s32 2, %v190
  %v192 = vrot.slane %v145, %v191
  %v193 = vmul.f32 %v183, %v188
  %v194 = vmul.f32 %v183, %v192
  %v195 = vadd.f32 %v179, %v193
  %v196 = vadd.f32 %v180, %v194
  %197 = vset.pattern.permute.xlu0 3
  %198 = vperm.xlu0 %197, %v147
  %v199 = vpop.permute.xlu0 %198
  %v201 = vlaneseq
  %v202 = vshrl.u32 %v201, 7
  %v203 = vsub.s32 3, %v202
  %v204 = vrot.slane %v144, %v203
  %v205 = vlaneseq
  %v206 = vshrl.u32 %v205, 7
  %v207 = vsub.s32 3, %v206
  %v208 = vrot.slane %v145, %v207
  %v209 = vmul.f32 %v199, %v204
  %v210 = vmul.f32 %v199, %v208
  %v211 = vadd.f32 %v195, %v209
  %v212 = vadd.f32 %v196, %v210
  %213 = vrot.lane.b32.xlu0 %v29, 15
  %v214 = vpop.permute.xlu0 %213
  %215 = vrot.lane.b32.xlu0 %v33, 15
  %v216 = vpop.permute.xlu0 %215
  %vm217 = vcmp.lt.s32.totalorder %v40, 15
  %v218 = vsel %vm217, %v214, %v216
  %v219 = vsel %vm217, %v216, %v214
  %s220 = scalar_lea.vmem %s1, 4
  %v221 = vld [vmem:[%s220] sm:$0x3]
  %v223 = vlaneseq
  %v224 = vshrl.u32 %v223, 7
  %v225 = vsub.s32 0, %v224
  %v226 = vrot.slane %v221, %v225
  %v227 = vlaneseq
  %v228 = vshrl.u32 %v227, 7
  %v229 = vsub.s32 1, %v228
  %v230 = vrot.slane %v221, %v229
  %v233 = vmul.f32 %v219, %v226
  %v234 = vmul.f32 %v218, %v230
  %s235 = scalar_lea.vmem %s2, 8
  %v236 = vld [vmem:[%s235] sm:$0xf]
  %238 = vset.pattern.permute.xlu0 0
  %239 = vperm.xlu0 %238, %v236
  %v240 = vpop.permute.xlu0 %239
  %v242 = vlaneseq
  %v243 = vshrl.u32 %v242, 7
  %v244 = vsub.s32 0, %v243
  %v245 = vrot.slane %v233, %v244
  %v246 = vlaneseq
  %v247 = vshrl.u32 %v246, 7
  %v248 = vsub.s32 0, %v247
  %v249 = vrot.slane %v234, %v248
  %v250 = vmul.f32 %v240, %v245
  %v251 = vmul.f32 %v240, %v249
  %v252 = vadd.f32 %v211, %v250
  %v253 = vadd.f32 %v212, %v251
  %254 = vset.pattern.permute.xlu0 1
  %255 = vperm.xlu0 %254, %v236
  %v256 = vpop.permute.xlu0 %255
  %v258 = vlaneseq
  %v259 = vshrl.u32 %v258, 7
  %v260 = vsub.s32 1, %v259
  %v261 = vrot.slane %v233, %v260
  %v262 = vlaneseq
  %v263 = vshrl.u32 %v262, 7
  %v264 = vsub.s32 1, %v263
  %v265 = vrot.slane %v234, %v264
  %v266 = vmul.f32 %v256, %v261
  %v267 = vmul.f32 %v256, %v265
  %v268 = vadd.f32 %v252, %v266
  %v269 = vadd.f32 %v253, %v267
  %270 = vset.pattern.permute.xlu0 2
  %271 = vperm.xlu0 %270, %v236
  %v272 = vpop.permute.xlu0 %271
  %v274 = vlaneseq
  %v275 = vshrl.u32 %v274, 7
  %v276 = vsub.s32 2, %v275
  %v277 = vrot.slane %v233, %v276
  %v278 = vlaneseq
  %v279 = vshrl.u32 %v278, 7
  %v280 = vsub.s32 2, %v279
  %v281 = vrot.slane %v234, %v280
  %v282 = vmul.f32 %v272, %v277
  %v283 = vmul.f32 %v272, %v281
  %v284 = vadd.f32 %v268, %v282
  %v285 = vadd.f32 %v269, %v283
  %286 = vset.pattern.permute.xlu0 3
  %287 = vperm.xlu0 %286, %v236
  %v288 = vpop.permute.xlu0 %287
  %v290 = vlaneseq
  %v291 = vshrl.u32 %v290, 7
  %v292 = vsub.s32 3, %v291
  %v293 = vrot.slane %v233, %v292
  %v294 = vlaneseq
  %v295 = vshrl.u32 %v294, 7
  %v296 = vsub.s32 3, %v295
  %v297 = vrot.slane %v234, %v296
  %v298 = vmul.f32 %v288, %v293
  %v299 = vmul.f32 %v288, %v297
  %v300 = vadd.f32 %v284, %v298
  %v301 = vadd.f32 %v285, %v299
  %302 = vrot.lane.b32.xlu0 %v29, 1
  %v303 = vpop.permute.xlu0 %302
  %304 = vrot.lane.b32.xlu0 %v33, 1
  %v305 = vpop.permute.xlu0 %304
  %vm306 = vcmp.lt.s32.totalorder %v40, 1
  %v307 = vsel %vm306, %v303, %v305
  %v308 = vsel %vm306, %v305, %v303
  %s309 = scalar_lea.vmem %s1, 6
  %v310 = vld [vmem:[%s309] sm:$0x3]
  %v312 = vlaneseq
  %v313 = vshrl.u32 %v312, 7
  %v314 = vsub.s32 0, %v313
  %v315 = vrot.slane %v310, %v314
  %v316 = vlaneseq
  %v317 = vshrl.u32 %v316, 7
  %v318 = vsub.s32 1, %v317
  %v319 = vrot.slane %v310, %v318
  %v322 = vmul.f32 %v308, %v315
  %v323 = vmul.f32 %v307, %v319
  %s324 = scalar_lea.vmem %s2, 12
  %v325 = vld [vmem:[%s324] sm:$0xf]
  %327 = vset.pattern.permute.xlu0 0
  %328 = vperm.xlu0 %327, %v325
  %v329 = vpop.permute.xlu0 %328
  %v331 = vlaneseq
  %v332 = vshrl.u32 %v331, 7
  %v333 = vsub.s32 0, %v332
  %v334 = vrot.slane %v322, %v333
  %v335 = vlaneseq
  %v336 = vshrl.u32 %v335, 7
  %v337 = vsub.s32 0, %v336
  %v338 = vrot.slane %v323, %v337
  %v339 = vmul.f32 %v329, %v334
  %v340 = vmul.f32 %v329, %v338
  %v341 = vadd.f32 %v300, %v339
  %v342 = vadd.f32 %v301, %v340
  %343 = vset.pattern.permute.xlu0 1
  %344 = vperm.xlu0 %343, %v325
  %v345 = vpop.permute.xlu0 %344
  %v347 = vlaneseq
  %v348 = vshrl.u32 %v347, 7
  %v349 = vsub.s32 1, %v348
  %v350 = vrot.slane %v322, %v349
  %v351 = vlaneseq
  %v352 = vshrl.u32 %v351, 7
  %v353 = vsub.s32 1, %v352
  %v354 = vrot.slane %v323, %v353
  %v355 = vmul.f32 %v345, %v350
  %v356 = vmul.f32 %v345, %v354
  %v357 = vadd.f32 %v341, %v355
  %v358 = vadd.f32 %v342, %v356
  %359 = vset.pattern.permute.xlu0 2
  %360 = vperm.xlu0 %359, %v325
  %v361 = vpop.permute.xlu0 %360
  %v363 = vlaneseq
  %v364 = vshrl.u32 %v363, 7
  %v365 = vsub.s32 2, %v364
  %v366 = vrot.slane %v322, %v365
  %v367 = vlaneseq
  %v368 = vshrl.u32 %v367, 7
  %v369 = vsub.s32 2, %v368
  %v370 = vrot.slane %v323, %v369
  %v371 = vmul.f32 %v361, %v366
  %v372 = vmul.f32 %v361, %v370
  %v373 = vadd.f32 %v357, %v371
  %v374 = vadd.f32 %v358, %v372
  %375 = vset.pattern.permute.xlu0 3
  %376 = vperm.xlu0 %375, %v325
  %v377 = vpop.permute.xlu0 %376
  %v379 = vlaneseq
  %v380 = vshrl.u32 %v379, 7
  %v381 = vsub.s32 3, %v380
  %v382 = vrot.slane %v322, %v381
  %v383 = vlaneseq
  %v384 = vshrl.u32 %v383, 7
  %v385 = vsub.s32 3, %v384
  %v386 = vrot.slane %v323, %v385
  %v387 = vmul.f32 %v377, %v382
  %v388 = vmul.f32 %v377, %v386
  %v389 = vadd.f32 %v373, %v387
  %v390 = vadd.f32 %v374, %v388
  %s391 = scalar_lea.vmem %s2, 16
  %v392 = vld [vmem:[%s391] sm:$0xf]
  %394 = vset.pattern.permute.xlu0 0
  %395 = vperm.xlu0 %394, %v392
  %v396 = vpop.permute.xlu0 %395
  %v398 = vlaneseq
  %v399 = vshrl.u32 %v398, 7
  %v400 = vsub.s32 0, %v399
  %v401 = vrot.slane %v29, %v400
  %v402 = vlaneseq
  %v403 = vshrl.u32 %v402, 7
  %v404 = vsub.s32 4, %v403
  %v405 = vrot.slane %v29, %v404
  %v408 = vlaneseq
  %v409 = vshrl.u32 %v408, 7
  %v410 = vsub.s32 0, %v409
  %v411 = vrot.slane %v401, %v410
  %v412 = vlaneseq
  %v413 = vshrl.u32 %v412, 7
  %v414 = vsub.s32 0, %v413
  %v415 = vrot.slane %v405, %v414
  %v416 = vmul.f32 %v396, %v411
  %v417 = vmul.f32 %v396, %v415
  %v418 = vadd.f32 %v389, %v416
  %v419 = vadd.f32 %v390, %v417
  %420 = vset.pattern.permute.xlu0 1
  %421 = vperm.xlu0 %420, %v392
  %v422 = vpop.permute.xlu0 %421
  %v424 = vlaneseq
  %v425 = vshrl.u32 %v424, 7
  %v426 = vsub.s32 1, %v425
  %v427 = vrot.slane %v29, %v426
  %v428 = vlaneseq
  %v429 = vshrl.u32 %v428, 7
  %v430 = vsub.s32 5, %v429
  %v431 = vrot.slane %v29, %v430
  %v434 = vlaneseq
  %v435 = vshrl.u32 %v434, 7
  %v436 = vsub.s32 1, %v435
  %v437 = vrot.slane %v427, %v436
  %v438 = vlaneseq
  %v439 = vshrl.u32 %v438, 7
  %v440 = vsub.s32 1, %v439
  %v441 = vrot.slane %v431, %v440
  %v442 = vmul.f32 %v422, %v437
  %v443 = vmul.f32 %v422, %v441
  %v444 = vadd.f32 %v418, %v442
  %v445 = vadd.f32 %v419, %v443
  %446 = vset.pattern.permute.xlu0 2
  %447 = vperm.xlu0 %446, %v392
  %v448 = vpop.permute.xlu0 %447
  %v450 = vlaneseq
  %v451 = vshrl.u32 %v450, 7
  %v452 = vsub.s32 2, %v451
  %v453 = vrot.slane %v29, %v452
  %v454 = vlaneseq
  %v455 = vshrl.u32 %v454, 7
  %v456 = vsub.s32 6, %v455
  %v457 = vrot.slane %v29, %v456
  %v460 = vlaneseq
  %v461 = vshrl.u32 %v460, 7
  %v462 = vsub.s32 2, %v461
  %v463 = vrot.slane %v453, %v462
  %v464 = vlaneseq
  %v465 = vshrl.u32 %v464, 7
  %v466 = vsub.s32 2, %v465
  %v467 = vrot.slane %v457, %v466
  %v468 = vmul.f32 %v448, %v463
  %v469 = vmul.f32 %v448, %v467
  %v470 = vadd.f32 %v444, %v468
  %v471 = vadd.f32 %v445, %v469
  %472 = vset.pattern.permute.xlu0 3
  %473 = vperm.xlu0 %472, %v392
  %v474 = vpop.permute.xlu0 %473
  %v476 = vlaneseq
  %v477 = vshrl.u32 %v476, 7
  %v478 = vsub.s32 3, %v477
  %v479 = vrot.slane %v29, %v478
  %v480 = vlaneseq
  %v481 = vshrl.u32 %v480, 7
  %v482 = vsub.s32 7, %v481
  %v483 = vrot.slane %v29, %v482
  %v486 = vlaneseq
  %v487 = vshrl.u32 %v486, 7
  %v488 = vsub.s32 3, %v487
  %v489 = vrot.slane %v479, %v488
  %v490 = vlaneseq
  %v491 = vshrl.u32 %v490, 7
  %v492 = vsub.s32 3, %v491
  %v493 = vrot.slane %v483, %v492
  %v494 = vmul.f32 %v474, %v489
  %v495 = vmul.f32 %v474, %v493
  %v496 = vadd.f32 %v470, %v494
  %v497 = vadd.f32 %v471, %v495
  %498 = vrot.lane.b32.xlu0 %v29, 127
  %v499 = vpop.permute.xlu0 %498
  %500 = vrot.lane.b32.xlu0 %v33, 127
  %v501 = vpop.permute.xlu0 %500
  %vm502 = vcmp.lt.s32.totalorder %v40, 127
  %v503 = vsel %vm502, %v499, %v501
  %v504 = vsel %vm502, %v501, %v499
  %s505 = scalar_lea.vmem %s1, 10
  %v506 = vld [vmem:[%s505] sm:$0x3]
  %v508 = vlaneseq
  %v509 = vshrl.u32 %v508, 7
  %v510 = vsub.s32 0, %v509
  %v511 = vrot.slane %v506, %v510
  %v512 = vlaneseq
  %v513 = vshrl.u32 %v512, 7
  %v514 = vsub.s32 1, %v513
  %v515 = vrot.slane %v506, %v514
  %v518 = vmul.f32 %v503, %v511
  %v519 = vmul.f32 %v504, %v515
  %s520 = scalar_lea.vmem %s2, 20
  %v521 = vld [vmem:[%s520] sm:$0xf]
  %523 = vset.pattern.permute.xlu0 0
  %524 = vperm.xlu0 %523, %v521
  %v525 = vpop.permute.xlu0 %524
  %v527 = vlaneseq
  %v528 = vshrl.u32 %v527, 7
  %v529 = vsub.s32 0, %v528
  %v530 = vrot.slane %v518, %v529
  %v531 = vlaneseq
  %v532 = vshrl.u32 %v531, 7
  %v533 = vsub.s32 0, %v532
  %v534 = vrot.slane %v519, %v533
  %v535 = vmul.f32 %v525, %v530
  %v536 = vmul.f32 %v525, %v534
  %v537 = vadd.f32 %v496, %v535
  %v538 = vadd.f32 %v497, %v536
  %539 = vset.pattern.permute.xlu0 1
  %540 = vperm.xlu0 %539, %v521
  %v541 = vpop.permute.xlu0 %540
  %v543 = vlaneseq
  %v544 = vshrl.u32 %v543, 7
  %v545 = vsub.s32 1, %v544
  %v546 = vrot.slane %v518, %v545
  %v547 = vlaneseq
  %v548 = vshrl.u32 %v547, 7
  %v549 = vsub.s32 1, %v548
  %v550 = vrot.slane %v519, %v549
  %v551 = vmul.f32 %v541, %v546
  %v552 = vmul.f32 %v541, %v550
  %v553 = vadd.f32 %v537, %v551
  %v554 = vadd.f32 %v538, %v552
  %555 = vset.pattern.permute.xlu0 2
  %556 = vperm.xlu0 %555, %v521
  %v557 = vpop.permute.xlu0 %556
  %v559 = vlaneseq
  %v560 = vshrl.u32 %v559, 7
  %v561 = vsub.s32 2, %v560
  %v562 = vrot.slane %v518, %v561
  %v563 = vlaneseq
  %v564 = vshrl.u32 %v563, 7
  %v565 = vsub.s32 2, %v564
  %v566 = vrot.slane %v519, %v565
  %v567 = vmul.f32 %v557, %v562
  %v568 = vmul.f32 %v557, %v566
  %v569 = vadd.f32 %v553, %v567
  %v570 = vadd.f32 %v554, %v568
  %571 = vset.pattern.permute.xlu0 3
  %572 = vperm.xlu0 %571, %v521
  %v573 = vpop.permute.xlu0 %572
  %v575 = vlaneseq
  %v576 = vshrl.u32 %v575, 7
  %v577 = vsub.s32 3, %v576
  %v578 = vrot.slane %v518, %v577
  %v579 = vlaneseq
  %v580 = vshrl.u32 %v579, 7
  %v581 = vsub.s32 3, %v580
  %v582 = vrot.slane %v519, %v581
  %v583 = vmul.f32 %v573, %v578
  %v584 = vmul.f32 %v573, %v582
  %v585 = vadd.f32 %v569, %v583
  %v586 = vadd.f32 %v570, %v584
  %587 = vrot.lane.b32.xlu0 %v29, 113
  %v588 = vpop.permute.xlu0 %587
  %589 = vrot.lane.b32.xlu0 %v33, 113
  %v590 = vpop.permute.xlu0 %589
  %vm591 = vcmp.lt.s32.totalorder %v40, 113
  %v592 = vsel %vm591, %v588, %v590
  %v593 = vsel %vm591, %v590, %v588
  %s594 = scalar_lea.vmem %s1, 12
  %v595 = vld [vmem:[%s594] sm:$0x3]
  %v597 = vlaneseq
  %v598 = vshrl.u32 %v597, 7
  %v599 = vsub.s32 0, %v598
  %v600 = vrot.slane %v595, %v599
  %v601 = vlaneseq
  %v602 = vshrl.u32 %v601, 7
  %v603 = vsub.s32 1, %v602
  %v604 = vrot.slane %v595, %v603
  %v607 = vmul.f32 %v592, %v600
  %v608 = vmul.f32 %v593, %v604
  %s609 = scalar_lea.vmem %s2, 24
  %v610 = vld [vmem:[%s609] sm:$0xf]
  %612 = vset.pattern.permute.xlu0 0
  %613 = vperm.xlu0 %612, %v610
  %v614 = vpop.permute.xlu0 %613
  %v616 = vlaneseq
  %v617 = vshrl.u32 %v616, 7
  %v618 = vsub.s32 0, %v617
  %v619 = vrot.slane %v607, %v618
  %v620 = vlaneseq
  %v621 = vshrl.u32 %v620, 7
  %v622 = vsub.s32 0, %v621
  %v623 = vrot.slane %v608, %v622
  %v624 = vmul.f32 %v614, %v619
  %v625 = vmul.f32 %v614, %v623
  %v626 = vadd.f32 %v585, %v624
  %v627 = vadd.f32 %v586, %v625
  %628 = vset.pattern.permute.xlu0 1
  %629 = vperm.xlu0 %628, %v610
  %v630 = vpop.permute.xlu0 %629
  %v632 = vlaneseq
  %v633 = vshrl.u32 %v632, 7
  %v634 = vsub.s32 1, %v633
  %v635 = vrot.slane %v607, %v634
  %v636 = vlaneseq
  %v637 = vshrl.u32 %v636, 7
  %v638 = vsub.s32 1, %v637
  %v639 = vrot.slane %v608, %v638
  %v640 = vmul.f32 %v630, %v635
  %v641 = vmul.f32 %v630, %v639
  %v642 = vadd.f32 %v626, %v640
  %v643 = vadd.f32 %v627, %v641
  %644 = vset.pattern.permute.xlu0 2
  %645 = vperm.xlu0 %644, %v610
  %v646 = vpop.permute.xlu0 %645
  %v648 = vlaneseq
  %v649 = vshrl.u32 %v648, 7
  %v650 = vsub.s32 2, %v649
  %v651 = vrot.slane %v607, %v650
  %v652 = vlaneseq
  %v653 = vshrl.u32 %v652, 7
  %v654 = vsub.s32 2, %v653
  %v655 = vrot.slane %v608, %v654
  %v656 = vmul.f32 %v646, %v651
  %v657 = vmul.f32 %v646, %v655
  %v658 = vadd.f32 %v642, %v656
  %v659 = vadd.f32 %v643, %v657
  %660 = vset.pattern.permute.xlu0 3
  %661 = vperm.xlu0 %660, %v610
  %v662 = vpop.permute.xlu0 %661
  %v664 = vlaneseq
  %v665 = vshrl.u32 %v664, 7
  %v666 = vsub.s32 3, %v665
  %v667 = vrot.slane %v607, %v666
  %v668 = vlaneseq
  %v669 = vshrl.u32 %v668, 7
  %v670 = vsub.s32 3, %v669
  %v671 = vrot.slane %v608, %v670
  %v672 = vmul.f32 %v662, %v667
  %v673 = vmul.f32 %v662, %v671
  %v674 = vadd.f32 %v658, %v672
  %v675 = vadd.f32 %v659, %v673
  %676 = vrot.lane.b32.xlu0 %v29, 112
  %v677 = vpop.permute.xlu0 %676
  %678 = vrot.lane.b32.xlu0 %v33, 112
  %v679 = vpop.permute.xlu0 %678
  %vm680 = vcmp.lt.s32.totalorder %v40, 112
  %v681 = vsel %vm680, %v677, %v679
  %v682 = vsel %vm680, %v679, %v677
  %s683 = scalar_lea.vmem %s1, 14
  %v684 = vld [vmem:[%s683] sm:$0x3]
  %v686 = vlaneseq
  %v687 = vshrl.u32 %v686, 7
  %v688 = vsub.s32 0, %v687
  %v689 = vrot.slane %v684, %v688
  %v690 = vlaneseq
  %v691 = vshrl.u32 %v690, 7
  %v692 = vsub.s32 1, %v691
  %v693 = vrot.slane %v684, %v692
  %v696 = vmul.f32 %v681, %v689
  %v697 = vmul.f32 %v682, %v693
  %s698 = scalar_lea.vmem %s2, 28
  %v699 = vld [vmem:[%s698] sm:$0xf]
  %701 = vset.pattern.permute.xlu0 0
  %702 = vperm.xlu0 %701, %v699
  %v703 = vpop.permute.xlu0 %702
  %v705 = vlaneseq
  %v706 = vshrl.u32 %v705, 7
  %v707 = vsub.s32 0, %v706
  %v708 = vrot.slane %v696, %v707
  %v709 = vlaneseq
  %v710 = vshrl.u32 %v709, 7
  %v711 = vsub.s32 0, %v710
  %v712 = vrot.slane %v697, %v711
  %v713 = vmul.f32 %v703, %v708
  %v714 = vmul.f32 %v703, %v712
  %v715 = vadd.f32 %v674, %v713
  %v716 = vadd.f32 %v675, %v714
  %717 = vset.pattern.permute.xlu0 1
  %718 = vperm.xlu0 %717, %v699
  %v719 = vpop.permute.xlu0 %718
  %v721 = vlaneseq
  %v722 = vshrl.u32 %v721, 7
  %v723 = vsub.s32 1, %v722
  %v724 = vrot.slane %v696, %v723
  %v725 = vlaneseq
  %v726 = vshrl.u32 %v725, 7
  %v727 = vsub.s32 1, %v726
  %v728 = vrot.slane %v697, %v727
  %v729 = vmul.f32 %v719, %v724
  %v730 = vmul.f32 %v719, %v728
  %v731 = vadd.f32 %v715, %v729
  %v732 = vadd.f32 %v716, %v730
  %733 = vset.pattern.permute.xlu0 2
  %734 = vperm.xlu0 %733, %v699
  %v735 = vpop.permute.xlu0 %734
  %v737 = vlaneseq
  %v738 = vshrl.u32 %v737, 7
  %v739 = vsub.s32 2, %v738
  %v740 = vrot.slane %v696, %v739
  %v741 = vlaneseq
  %v742 = vshrl.u32 %v741, 7
  %v743 = vsub.s32 2, %v742
  %v744 = vrot.slane %v697, %v743
  %v745 = vmul.f32 %v735, %v740
  %v746 = vmul.f32 %v735, %v744
  %v747 = vadd.f32 %v731, %v745
  %v748 = vadd.f32 %v732, %v746
  %749 = vset.pattern.permute.xlu0 3
  %750 = vperm.xlu0 %749, %v699
  %v751 = vpop.permute.xlu0 %750
  %v753 = vlaneseq
  %v754 = vshrl.u32 %v753, 7
  %v755 = vsub.s32 3, %v754
  %v756 = vrot.slane %v696, %v755
  %v757 = vlaneseq
  %v758 = vshrl.u32 %v757, 7
  %v759 = vsub.s32 3, %v758
  %v760 = vrot.slane %v697, %v759
  %v761 = vmul.f32 %v751, %v756
  %v762 = vmul.f32 %v751, %v760
  %v763 = vadd.f32 %v747, %v761
  %v764 = vadd.f32 %v748, %v762
  %765 = vrot.lane.b32.xlu0 %v29, 111
  %v766 = vpop.permute.xlu0 %765
  %767 = vrot.lane.b32.xlu0 %v33, 111
  %v768 = vpop.permute.xlu0 %767
  %vm769 = vcmp.lt.s32.totalorder %v40, 111
  %v770 = vsel %vm769, %v766, %v768
  %v771 = vsel %vm769, %v768, %v766
  %s772 = scalar_lea.vmem %s1, 16
  %v773 = vld [vmem:[%s772] sm:$0x3]
  %v775 = vlaneseq
  %v776 = vshrl.u32 %v775, 7
  %v777 = vsub.s32 0, %v776
  %v778 = vrot.slane %v773, %v777
  %v779 = vlaneseq
  %v780 = vshrl.u32 %v779, 7
  %v781 = vsub.s32 1, %v780
  %v782 = vrot.slane %v773, %v781
  %v785 = vmul.f32 %v770, %v778
  %v786 = vmul.f32 %v771, %v782
  %s787 = scalar_lea.vmem %s2, 32
  %v788 = vld [vmem:[%s787] sm:$0xf]
  %790 = vset.pattern.permute.xlu0 0
  %791 = vperm.xlu0 %790, %v788
  %v792 = vpop.permute.xlu0 %791
  %v794 = vlaneseq
  %v795 = vshrl.u32 %v794, 7
  %v796 = vsub.s32 0, %v795
  %v797 = vrot.slane %v785, %v796
  %v798 = vlaneseq
  %v799 = vshrl.u32 %v798, 7
  %v800 = vsub.s32 0, %v799
  %v801 = vrot.slane %v786, %v800
  %v802 = vmul.f32 %v792, %v797
  %v803 = vmul.f32 %v792, %v801
  %v804 = vadd.f32 %v763, %v802
  %v805 = vadd.f32 %v764, %v803
  %806 = vset.pattern.permute.xlu0 1
  %807 = vperm.xlu0 %806, %v788
  %v808 = vpop.permute.xlu0 %807
  %v810 = vlaneseq
  %v811 = vshrl.u32 %v810, 7
  %v812 = vsub.s32 1, %v811
  %v813 = vrot.slane %v785, %v812
  %v814 = vlaneseq
  %v815 = vshrl.u32 %v814, 7
  %v816 = vsub.s32 1, %v815
  %v817 = vrot.slane %v786, %v816
  %v818 = vmul.f32 %v808, %v813
  %v819 = vmul.f32 %v808, %v817
  %v820 = vadd.f32 %v804, %v818
  %v821 = vadd.f32 %v805, %v819
  %822 = vset.pattern.permute.xlu0 2
  %823 = vperm.xlu0 %822, %v788
  %v824 = vpop.permute.xlu0 %823
  %v826 = vlaneseq
  %v827 = vshrl.u32 %v826, 7
  %v828 = vsub.s32 2, %v827
  %v829 = vrot.slane %v785, %v828
  %v830 = vlaneseq
  %v831 = vshrl.u32 %v830, 7
  %v832 = vsub.s32 2, %v831
  %v833 = vrot.slane %v786, %v832
  %v834 = vmul.f32 %v824, %v829
  %v835 = vmul.f32 %v824, %v833
  %v836 = vadd.f32 %v820, %v834
  %v837 = vadd.f32 %v821, %v835
  %838 = vset.pattern.permute.xlu0 3
  %839 = vperm.xlu0 %838, %v788
  %v840 = vpop.permute.xlu0 %839
  %v842 = vlaneseq
  %v843 = vshrl.u32 %v842, 7
  %v844 = vsub.s32 3, %v843
  %v845 = vrot.slane %v785, %v844
  %v846 = vlaneseq
  %v847 = vshrl.u32 %v846, 7
  %v848 = vsub.s32 3, %v847
  %v849 = vrot.slane %v786, %v848
  %v850 = vmul.f32 %v840, %v845
  %v851 = vmul.f32 %v840, %v849
  %v852 = vadd.f32 %v836, %v850
  %v853 = vadd.f32 %v837, %v851
  %v855 = vcombine.high %v31, %v31
  %857 = vrot.lane.b32.xlu0 %v31, 17
  %v858 = vpop.permute.xlu0 %857
  %859 = vrot.lane.b32.xlu0 %v855, 17
  %v860 = vpop.permute.xlu0 %859
  %v861 = vsel %vm41, %v858, %v860
  %v862 = vsel %vm41, %v860, %v858
  %v863 = vmul.f32 %v862, %v49
  %v864 = vmul.f32 %v861, %v53
  %v865 = vlaneseq
  %v866 = vshrl.u32 %v865, 7
  %v867 = vsub.s32 0, %v866
  %v868 = vrot.slane %v863, %v867
  %v869 = vlaneseq
  %v870 = vshrl.u32 %v869, 7
  %v871 = vsub.s32 0, %v870
  %v872 = vrot.slane %v864, %v871
  %v873 = vmul.f32 %v62, %v868
  %v874 = vmul.f32 %v62, %v872
  %v875 = vadd.f32 %v873, 0.0
  %v876 = vadd.f32 %v874, 0.0
  %v877 = vlaneseq
  %v878 = vshrl.u32 %v877, 7
  %v879 = vsub.s32 1, %v878
  %v880 = vrot.slane %v863, %v879
  %v881 = vlaneseq
  %v882 = vshrl.u32 %v881, 7
  %v883 = vsub.s32 1, %v882
  %v884 = vrot.slane %v864, %v883
  %v885 = vmul.f32 %v78, %v880
  %v886 = vmul.f32 %v78, %v884
  %v887 = vadd.f32 %v875, %v885
  %v888 = vadd.f32 %v876, %v886
  %v889 = vlaneseq
  %v890 = vshrl.u32 %v889, 7
  %v891 = vsub.s32 2, %v890
  %v892 = vrot.slane %v863, %v891
  %v893 = vlaneseq
  %v894 = vshrl.u32 %v893, 7
  %v895 = vsub.s32 2, %v894
  %v896 = vrot.slane %v864, %v895
  %v897 = vmul.f32 %v94, %v892
  %v898 = vmul.f32 %v94, %v896
  %v899 = vadd.f32 %v887, %v897
  %v900 = vadd.f32 %v888, %v898
  %v901 = vlaneseq
  %v902 = vshrl.u32 %v901, 7
  %v903 = vsub.s32 3, %v902
  %v904 = vrot.slane %v863, %v903
  %v905 = vlaneseq
  %v906 = vshrl.u32 %v905, 7
  %v907 = vsub.s32 3, %v906
  %v908 = vrot.slane %v864, %v907
  %v909 = vmul.f32 %v110, %v904
  %v910 = vmul.f32 %v110, %v908
  %v911 = vadd.f32 %v899, %v909
  %v912 = vadd.f32 %v900, %v910
  %913 = vrot.lane.b32.xlu0 %v31, 16
  %v914 = vpop.permute.xlu0 %913
  %915 = vrot.lane.b32.xlu0 %v855, 16
  %v916 = vpop.permute.xlu0 %915
  %v917 = vsel %vm128, %v914, %v916
  %v918 = vsel %vm128, %v916, %v914
  %v919 = vmul.f32 %v918, %v137
  %v920 = vmul.f32 %v917, %v141
  %v921 = vlaneseq
  %v922 = vshrl.u32 %v921, 7
  %v923 = vsub.s32 0, %v922
  %v924 = vrot.slane %v919, %v923
  %v925 = vlaneseq
  %v926 = vshrl.u32 %v925, 7
  %v927 = vsub.s32 0, %v926
  %v928 = vrot.slane %v920, %v927
  %v929 = vmul.f32 %v151, %v924
  %v930 = vmul.f32 %v151, %v928
  %v931 = vadd.f32 %v911, %v929
  %v932 = vadd.f32 %v912, %v930
  %v933 = vlaneseq
  %v934 = vshrl.u32 %v933, 7
  %v935 = vsub.s32 1, %v934
  %v936 = vrot.slane %v919, %v935
  %v937 = vlaneseq
  %v938 = vshrl.u32 %v937, 7
  %v939 = vsub.s32 1, %v938
  %v940 = vrot.slane %v920, %v939
  %v941 = vmul.f32 %v167, %v936
  %v942 = vmul.f32 %v167, %v940
  %v943 = vadd.f32 %v931, %v941
  %v944 = vadd.f32 %v932, %v942
  %v945 = vlaneseq
  %v946 = vshrl.u32 %v945, 7
  %v947 = vsub.s32 2, %v946
  %v948 = vrot.slane %v919, %v947
  %v949 = vlaneseq
  %v950 = vshrl.u32 %v949, 7
  %v951 = vsub.s32 2, %v950
  %v952 = vrot.slane %v920, %v951
  %v953 = vmul.f32 %v183, %v948
  %v954 = vmul.f32 %v183, %v952
  %v955 = vadd.f32 %v943, %v953
  %v956 = vadd.f32 %v944, %v954
  %v957 = vlaneseq
  %v958 = vshrl.u32 %v957, 7
  %v959 = vsub.s32 3, %v958
  %v960 = vrot.slane %v919, %v959
  %v961 = vlaneseq
  %v962 = vshrl.u32 %v961, 7
  %v963 = vsub.s32 3, %v962
  %v964 = vrot.slane %v920, %v963
  %v965 = vmul.f32 %v199, %v960
  %v966 = vmul.f32 %v199, %v964
  %v967 = vadd.f32 %v955, %v965
  %v968 = vadd.f32 %v956, %v966
  %969 = vrot.lane.b32.xlu0 %v31, 15
  %v970 = vpop.permute.xlu0 %969
  %971 = vrot.lane.b32.xlu0 %v855, 15
  %v972 = vpop.permute.xlu0 %971
  %v973 = vsel %vm217, %v970, %v972
  %v974 = vsel %vm217, %v972, %v970
  %v975 = vmul.f32 %v974, %v226
  %v976 = vmul.f32 %v973, %v230
  %v977 = vlaneseq
  %v978 = vshrl.u32 %v977, 7
  %v979 = vsub.s32 0, %v978
  %v980 = vrot.slane %v975, %v979
  %v981 = vlaneseq
  %v982 = vshrl.u32 %v981, 7
  %v983 = vsub.s32 0, %v982
  %v984 = vrot.slane %v976, %v983
  %v985 = vmul.f32 %v240, %v980
  %v986 = vmul.f32 %v240, %v984
  %v987 = vadd.f32 %v967, %v985
  %v988 = vadd.f32 %v968, %v986
  %v989 = vlaneseq
  %v990 = vshrl.u32 %v989, 7
  %v991 = vsub.s32 1, %v990
  %v992 = vrot.slane %v975, %v991
  %v993 = vlaneseq
  %v994 = vshrl.u32 %v993, 7
  %v995 = vsub.s32 1, %v994
  %v996 = vrot.slane %v976, %v995
  %v997 = vmul.f32 %v256, %v992
  %v998 = vmul.f32 %v256, %v996
  %v999 = vadd.f32 %v987, %v997
  %v1000 = vadd.f32 %v988, %v998
  %v1001 = vlaneseq
  %v1002 = vshrl.u32 %v1001, 7
  %v1003 = vsub.s32 2, %v1002
  %v1004 = vrot.slane %v975, %v1003
  %v1005 = vlaneseq
  %v1006 = vshrl.u32 %v1005, 7
  %v1007 = vsub.s32 2, %v1006
  %v1008 = vrot.slane %v976, %v1007
  %v1009 = vmul.f32 %v272, %v1004
  %v1010 = vmul.f32 %v272, %v1008
  %v1011 = vadd.f32 %v999, %v1009
  %v1012 = vadd.f32 %v1000, %v1010
  %v1013 = vlaneseq
  %v1014 = vshrl.u32 %v1013, 7
  %v1015 = vsub.s32 3, %v1014
  %v1016 = vrot.slane %v975, %v1015
  %v1017 = vlaneseq
  %v1018 = vshrl.u32 %v1017, 7
  %v1019 = vsub.s32 3, %v1018
  %v1020 = vrot.slane %v976, %v1019
  %v1021 = vmul.f32 %v288, %v1016
  %v1022 = vmul.f32 %v288, %v1020
  %v1023 = vadd.f32 %v1011, %v1021
  %v1024 = vadd.f32 %v1012, %v1022
  %1025 = vrot.lane.b32.xlu0 %v31, 1
  %v1026 = vpop.permute.xlu0 %1025
  %1027 = vrot.lane.b32.xlu0 %v855, 1
  %v1028 = vpop.permute.xlu0 %1027
  %v1029 = vsel %vm306, %v1026, %v1028
  %v1030 = vsel %vm306, %v1028, %v1026
  %v1031 = vmul.f32 %v1030, %v315
  %v1032 = vmul.f32 %v1029, %v319
  %v1033 = vlaneseq
  %v1034 = vshrl.u32 %v1033, 7
  %v1035 = vsub.s32 0, %v1034
  %v1036 = vrot.slane %v1031, %v1035
  %v1037 = vlaneseq
  %v1038 = vshrl.u32 %v1037, 7
  %v1039 = vsub.s32 0, %v1038
  %v1040 = vrot.slane %v1032, %v1039
  %v1041 = vmul.f32 %v329, %v1036
  %v1042 = vmul.f32 %v329, %v1040
  %v1043 = vadd.f32 %v1023, %v1041
  %v1044 = vadd.f32 %v1024, %v1042
  %v1045 = vlaneseq
  %v1046 = vshrl.u32 %v1045, 7
  %v1047 = vsub.s32 1, %v1046
  %v1048 = vrot.slane %v1031, %v1047
  %v1049 = vlaneseq
  %v1050 = vshrl.u32 %v1049, 7
  %v1051 = vsub.s32 1, %v1050
  %v1052 = vrot.slane %v1032, %v1051
  %v1053 = vmul.f32 %v345, %v1048
  %v1054 = vmul.f32 %v345, %v1052
  %v1055 = vadd.f32 %v1043, %v1053
  %v1056 = vadd.f32 %v1044, %v1054
  %v1057 = vlaneseq
  %v1058 = vshrl.u32 %v1057, 7
  %v1059 = vsub.s32 2, %v1058
  %v1060 = vrot.slane %v1031, %v1059
  %v1061 = vlaneseq
  %v1062 = vshrl.u32 %v1061, 7
  %v1063 = vsub.s32 2, %v1062
  %v1064 = vrot.slane %v1032, %v1063
  %v1065 = vmul.f32 %v361, %v1060
  %v1066 = vmul.f32 %v361, %v1064
  %v1067 = vadd.f32 %v1055, %v1065
  %v1068 = vadd.f32 %v1056, %v1066
  %v1069 = vlaneseq
  %v1070 = vshrl.u32 %v1069, 7
  %v1071 = vsub.s32 3, %v1070
  %v1072 = vrot.slane %v1031, %v1071
  %v1073 = vlaneseq
  %v1074 = vshrl.u32 %v1073, 7
  %v1075 = vsub.s32 3, %v1074
  %v1076 = vrot.slane %v1032, %v1075
  %v1077 = vmul.f32 %v377, %v1072
  %v1078 = vmul.f32 %v377, %v1076
  %v1079 = vadd.f32 %v1067, %v1077
  %v1080 = vadd.f32 %v1068, %v1078
  %v1081 = vlaneseq
  %v1082 = vshrl.u32 %v1081, 7
  %v1083 = vsub.s32 0, %v1082
  %v1084 = vrot.slane %v31, %v1083
  %v1085 = vlaneseq
  %v1086 = vshrl.u32 %v1085, 7
  %v1087 = vsub.s32 4, %v1086
  %v1088 = vrot.slane %v31, %v1087
  %v1091 = vlaneseq
  %v1092 = vshrl.u32 %v1091, 7
  %v1093 = vsub.s32 0, %v1092
  %v1094 = vrot.slane %v1084, %v1093
  %v1095 = vlaneseq
  %v1096 = vshrl.u32 %v1095, 7
  %v1097 = vsub.s32 0, %v1096
  %v1098 = vrot.slane %v1088, %v1097
  %v1099 = vmul.f32 %v396, %v1094
  %v1100 = vmul.f32 %v396, %v1098
  %v1101 = vadd.f32 %v1079, %v1099
  %v1102 = vadd.f32 %v1080, %v1100
  %v1103 = vlaneseq
  %v1104 = vshrl.u32 %v1103, 7
  %v1105 = vsub.s32 1, %v1104
  %v1106 = vrot.slane %v31, %v1105
  %v1107 = vlaneseq
  %v1108 = vshrl.u32 %v1107, 7
  %v1109 = vsub.s32 5, %v1108
  %v1110 = vrot.slane %v31, %v1109
  %v1113 = vlaneseq
  %v1114 = vshrl.u32 %v1113, 7
  %v1115 = vsub.s32 1, %v1114
  %v1116 = vrot.slane %v1106, %v1115
  %v1117 = vlaneseq
  %v1118 = vshrl.u32 %v1117, 7
  %v1119 = vsub.s32 1, %v1118
  %v1120 = vrot.slane %v1110, %v1119
  %v1121 = vmul.f32 %v422, %v1116
  %v1122 = vmul.f32 %v422, %v1120
  %v1123 = vadd.f32 %v1101, %v1121
  %v1124 = vadd.f32 %v1102, %v1122
  %v1125 = vlaneseq
  %v1126 = vshrl.u32 %v1125, 7
  %v1127 = vsub.s32 2, %v1126
  %v1128 = vrot.slane %v31, %v1127
  %v1129 = vlaneseq
  %v1130 = vshrl.u32 %v1129, 7
  %v1131 = vsub.s32 6, %v1130
  %v1132 = vrot.slane %v31, %v1131
  %v1135 = vlaneseq
  %v1136 = vshrl.u32 %v1135, 7
  %v1137 = vsub.s32 2, %v1136
  %v1138 = vrot.slane %v1128, %v1137
  %v1139 = vlaneseq
  %v1140 = vshrl.u32 %v1139, 7
  %v1141 = vsub.s32 2, %v1140
  %v1142 = vrot.slane %v1132, %v1141
  %v1143 = vmul.f32 %v448, %v1138
  %v1144 = vmul.f32 %v448, %v1142
  %v1145 = vadd.f32 %v1123, %v1143
  %v1146 = vadd.f32 %v1124, %v1144
  %v1147 = vlaneseq
  %v1148 = vshrl.u32 %v1147, 7
  %v1149 = vsub.s32 3, %v1148
  %v1150 = vrot.slane %v31, %v1149
  %v1151 = vlaneseq
  %v1152 = vshrl.u32 %v1151, 7
  %v1153 = vsub.s32 7, %v1152
  %v1154 = vrot.slane %v31, %v1153
  %v1157 = vlaneseq
  %v1158 = vshrl.u32 %v1157, 7
  %v1159 = vsub.s32 3, %v1158
  %v1160 = vrot.slane %v1150, %v1159
  %v1161 = vlaneseq
  %v1162 = vshrl.u32 %v1161, 7
  %v1163 = vsub.s32 3, %v1162
  %v1164 = vrot.slane %v1154, %v1163
  %v1165 = vmul.f32 %v474, %v1160
  %v1166 = vmul.f32 %v474, %v1164
  %v1167 = vadd.f32 %v1145, %v1165
  %v1168 = vadd.f32 %v1146, %v1166
  %1169 = vrot.lane.b32.xlu0 %v31, 127
  %v1170 = vpop.permute.xlu0 %1169
  %1171 = vrot.lane.b32.xlu0 %v855, 127
  %v1172 = vpop.permute.xlu0 %1171
  %v1173 = vsel %vm502, %v1170, %v1172
  %v1174 = vsel %vm502, %v1172, %v1170
  %v1175 = vmul.f32 %v1173, %v511
  %v1176 = vmul.f32 %v1174, %v515
  %v1177 = vlaneseq
  %v1178 = vshrl.u32 %v1177, 7
  %v1179 = vsub.s32 0, %v1178
  %v1180 = vrot.slane %v1175, %v1179
  %v1181 = vlaneseq
  %v1182 = vshrl.u32 %v1181, 7
  %v1183 = vsub.s32 0, %v1182
  %v1184 = vrot.slane %v1176, %v1183
  %v1185 = vmul.f32 %v525, %v1180
  %v1186 = vmul.f32 %v525, %v1184
  %v1187 = vadd.f32 %v1167, %v1185
  %v1188 = vadd.f32 %v1168, %v1186
  %v1189 = vlaneseq
  %v1190 = vshrl.u32 %v1189, 7
  %v1191 = vsub.s32 1, %v1190
  %v1192 = vrot.slane %v1175, %v1191
  %v1193 = vlaneseq
  %v1194 = vshrl.u32 %v1193, 7
  %v1195 = vsub.s32 1, %v1194
  %v1196 = vrot.slane %v1176, %v1195
  %v1197 = vmul.f32 %v541, %v1192
  %v1198 = vmul.f32 %v541, %v1196
  %v1199 = vadd.f32 %v1187, %v1197
  %v1200 = vadd.f32 %v1188, %v1198
  %v1201 = vlaneseq
  %v1202 = vshrl.u32 %v1201, 7
  %v1203 = vsub.s32 2, %v1202
  %v1204 = vrot.slane %v1175, %v1203
  %v1205 = vlaneseq
  %v1206 = vshrl.u32 %v1205, 7
  %v1207 = vsub.s32 2, %v1206
  %v1208 = vrot.slane %v1176, %v1207
  %v1209 = vmul.f32 %v557, %v1204
  %v1210 = vmul.f32 %v557, %v1208
  %v1211 = vadd.f32 %v1199, %v1209
  %v1212 = vadd.f32 %v1200, %v1210
  %v1213 = vlaneseq
  %v1214 = vshrl.u32 %v1213, 7
  %v1215 = vsub.s32 3, %v1214
  %v1216 = vrot.slane %v1175, %v1215
  %v1217 = vlaneseq
  %v1218 = vshrl.u32 %v1217, 7
  %v1219 = vsub.s32 3, %v1218
  %v1220 = vrot.slane %v1176, %v1219
  %v1221 = vmul.f32 %v573, %v1216
  %v1222 = vmul.f32 %v573, %v1220
  %v1223 = vadd.f32 %v1211, %v1221
  %v1224 = vadd.f32 %v1212, %v1222
  %1225 = vrot.lane.b32.xlu0 %v31, 113
  %v1226 = vpop.permute.xlu0 %1225
  %1227 = vrot.lane.b32.xlu0 %v855, 113
  %v1228 = vpop.permute.xlu0 %1227
  %v1229 = vsel %vm591, %v1226, %v1228
  %v1230 = vsel %vm591, %v1228, %v1226
  %v1231 = vmul.f32 %v1229, %v600
  %v1232 = vmul.f32 %v1230, %v604
  %v1233 = vlaneseq
  %v1234 = vshrl.u32 %v1233, 7
  %v1235 = vsub.s32 0, %v1234
  %v1236 = vrot.slane %v1231, %v1235
  %v1237 = vlaneseq
  %v1238 = vshrl.u32 %v1237, 7
  %v1239 = vsub.s32 0, %v1238
  %v1240 = vrot.slane %v1232, %v1239
  %v1241 = vmul.f32 %v614, %v1236
  %v1242 = vmul.f32 %v614, %v1240
  %v1243 = vadd.f32 %v1223, %v1241
  %v1244 = vadd.f32 %v1224, %v1242
  %v1245 = vlaneseq
  %v1246 = vshrl.u32 %v1245, 7
  %v1247 = vsub.s32 1, %v1246
  %v1248 = vrot.slane %v1231, %v1247
  %v1249 = vlaneseq
  %v1250 = vshrl.u32 %v1249, 7
  %v1251 = vsub.s32 1, %v1250
  %v1252 = vrot.slane %v1232, %v1251
  %v1253 = vmul.f32 %v630, %v1248
  %v1254 = vmul.f32 %v630, %v1252
  %v1255 = vadd.f32 %v1243, %v1253
  %v1256 = vadd.f32 %v1244, %v1254
  %v1257 = vlaneseq
  %v1258 = vshrl.u32 %v1257, 7
  %v1259 = vsub.s32 2, %v1258
  %v1260 = vrot.slane %v1231, %v1259
  %v1261 = vlaneseq
  %v1262 = vshrl.u32 %v1261, 7
  %v1263 = vsub.s32 2, %v1262
  %v1264 = vrot.slane %v1232, %v1263
  %v1265 = vmul.f32 %v646, %v1260
  %v1266 = vmul.f32 %v646, %v1264
  %v1267 = vadd.f32 %v1255, %v1265
  %v1268 = vadd.f32 %v1256, %v1266
  %v1269 = vlaneseq
  %v1270 = vshrl.u32 %v1269, 7
  %v1271 = vsub.s32 3, %v1270
  %v1272 = vrot.slane %v1231, %v1271
  %v1273 = vlaneseq
  %v1274 = vshrl.u32 %v1273, 7
  %v1275 = vsub.s32 3, %v1274
  %v1276 = vrot.slane %v1232, %v1275
  %v1277 = vmul.f32 %v662, %v1272
  %v1278 = vmul.f32 %v662, %v1276
  %v1279 = vadd.f32 %v1267, %v1277
  %v1280 = vadd.f32 %v1268, %v1278
  %1281 = vrot.lane.b32.xlu0 %v31, 112
  %v1282 = vpop.permute.xlu0 %1281
  %1283 = vrot.lane.b32.xlu0 %v855, 112
  %v1284 = vpop.permute.xlu0 %1283
  %v1285 = vsel %vm680, %v1282, %v1284
  %v1286 = vsel %vm680, %v1284, %v1282
  %v1287 = vmul.f32 %v1285, %v689
  %v1288 = vmul.f32 %v1286, %v693
  %v1289 = vlaneseq
  %v1290 = vshrl.u32 %v1289, 7
  %v1291 = vsub.s32 0, %v1290
  %v1292 = vrot.slane %v1287, %v1291
  %v1293 = vlaneseq
  %v1294 = vshrl.u32 %v1293, 7
  %v1295 = vsub.s32 0, %v1294
  %v1296 = vrot.slane %v1288, %v1295
  %v1297 = vmul.f32 %v703, %v1292
  %v1298 = vmul.f32 %v703, %v1296
  %v1299 = vadd.f32 %v1279, %v1297
  %v1300 = vadd.f32 %v1280, %v1298
  %v1301 = vlaneseq
  %v1302 = vshrl.u32 %v1301, 7
  %v1303 = vsub.s32 1, %v1302
  %v1304 = vrot.slane %v1287, %v1303
  %v1305 = vlaneseq
  %v1306 = vshrl.u32 %v1305, 7
  %v1307 = vsub.s32 1, %v1306
  %v1308 = vrot.slane %v1288, %v1307
  %v1309 = vmul.f32 %v719, %v1304
  %v1310 = vmul.f32 %v719, %v1308
  %v1311 = vadd.f32 %v1299, %v1309
  %v1312 = vadd.f32 %v1300, %v1310
  %v1313 = vlaneseq
  %v1314 = vshrl.u32 %v1313, 7
  %v1315 = vsub.s32 2, %v1314
  %v1316 = vrot.slane %v1287, %v1315
  %v1317 = vlaneseq
  %v1318 = vshrl.u32 %v1317, 7
  %v1319 = vsub.s32 2, %v1318
  %v1320 = vrot.slane %v1288, %v1319
  %v1321 = vmul.f32 %v735, %v1316
  %v1322 = vmul.f32 %v735, %v1320
  %v1323 = vadd.f32 %v1311, %v1321
  %v1324 = vadd.f32 %v1312, %v1322
  %v1325 = vlaneseq
  %v1326 = vshrl.u32 %v1325, 7
  %v1327 = vsub.s32 3, %v1326
  %v1328 = vrot.slane %v1287, %v1327
  %v1329 = vlaneseq
  %v1330 = vshrl.u32 %v1329, 7
  %v1331 = vsub.s32 3, %v1330
  %v1332 = vrot.slane %v1288, %v1331
  %v1333 = vmul.f32 %v751, %v1328
  %v1334 = vmul.f32 %v751, %v1332
  %v1335 = vadd.f32 %v1323, %v1333
  %v1336 = vadd.f32 %v1324, %v1334
  %1337 = vrot.lane.b32.xlu0 %v31, 111
  %v1338 = vpop.permute.xlu0 %1337
  %1339 = vrot.lane.b32.xlu0 %v855, 111
  %v1340 = vpop.permute.xlu0 %1339
  %v1341 = vsel %vm769, %v1338, %v1340
  %v1342 = vsel %vm769, %v1340, %v1338
  %v1343 = vmul.f32 %v1341, %v778
  %v1344 = vmul.f32 %v1342, %v782
  %v1345 = vlaneseq
  %v1346 = vshrl.u32 %v1345, 7
  %v1347 = vsub.s32 0, %v1346
  %v1348 = vrot.slane %v1343, %v1347
  %v1349 = vlaneseq
  %v1350 = vshrl.u32 %v1349, 7
  %v1351 = vsub.s32 0, %v1350
  %v1352 = vrot.slane %v1344, %v1351
  %v1353 = vmul.f32 %v792, %v1348
  %v1354 = vmul.f32 %v792, %v1352
  %v1355 = vadd.f32 %v1335, %v1353
  %v1356 = vadd.f32 %v1336, %v1354
  %v1357 = vlaneseq
  %v1358 = vshrl.u32 %v1357, 7
  %v1359 = vsub.s32 1, %v1358
  %v1360 = vrot.slane %v1343, %v1359
  %v1361 = vlaneseq
  %v1362 = vshrl.u32 %v1361, 7
  %v1363 = vsub.s32 1, %v1362
  %v1364 = vrot.slane %v1344, %v1363
  %v1365 = vmul.f32 %v808, %v1360
  %v1366 = vmul.f32 %v808, %v1364
  %v1367 = vadd.f32 %v1355, %v1365
  %v1368 = vadd.f32 %v1356, %v1366
  %v1369 = vlaneseq
  %v1370 = vshrl.u32 %v1369, 7
  %v1371 = vsub.s32 2, %v1370
  %v1372 = vrot.slane %v1343, %v1371
  %v1373 = vlaneseq
  %v1374 = vshrl.u32 %v1373, 7
  %v1375 = vsub.s32 2, %v1374
  %v1376 = vrot.slane %v1344, %v1375
  %v1377 = vmul.f32 %v824, %v1372
  %v1378 = vmul.f32 %v824, %v1376
  %v1379 = vadd.f32 %v1367, %v1377
  %v1380 = vadd.f32 %v1368, %v1378
  %v1381 = vlaneseq
  %v1382 = vshrl.u32 %v1381, 7
  %v1383 = vsub.s32 3, %v1382
  %v1384 = vrot.slane %v1343, %v1383
  %v1385 = vlaneseq
  %v1386 = vshrl.u32 %v1385, 7
  %v1387 = vsub.s32 3, %v1386
  %v1388 = vrot.slane %v1344, %v1387
  %v1389 = vmul.f32 %v840, %v1384
  %v1390 = vmul.f32 %v840, %v1388
  %v1391 = vadd.f32 %v1379, %v1389
  %v1392 = vadd.f32 %v1380, %v1390
  %vm1393 = vcmask 1043456
  %v1394 = vsel %vm1393, %v852, 0.0
  %v1395 = vsel %vm1393, %v853, 0.0
  %v1396 = vadd.f32 %v1394, %v1395
  %1397 = vadd.xlane.f32.xlu0 %v1396
  %v1398 = vpop.xlane.xlu0 %1397
  %v1399 = vmul.f32 %v852, %v852
  %v1400 = vmul.f32 %v853, %v853
  %v1401 = vsel %vm1393, %v1399, 0.0
  %v1402 = vsel %vm1393, %v1400, 0.0
  %v1403 = vadd.f32 %v1401, %v1402
  %1404 = vadd.xlane.f32.xlu0 %v1403
  %v1405 = vpop.xlane.xlu0 %1404
  %v1406 = vsel %vm1393, %v1391, 0.0
  %v1407 = vsel %vm1393, %v1392, 0.0
  %v1408 = vadd.f32 %v1406, %v1407
  %1409 = vadd.xlane.f32.xlu0 %v1408
  %v1410 = vpop.xlane.xlu0 %1409
  %v1411 = vadd.f32 %v1398, %v1410
  %v1412 = vmul.f32 %v1391, %v1391
  %v1413 = vmul.f32 %v1392, %v1392
  %v1414 = vsel %vm1393, %v1412, 0.0
  %v1415 = vsel %vm1393, %v1413, 0.0
  %v1416 = vadd.f32 %v1414, %v1415
  %1417 = vadd.xlane.f32.xlu0 %v1416
  %v1418 = vpop.xlane.xlu0 %1417
  %v1419 = vadd.f32 %v1405, %v1418
  %v1420 = vmul.f32 %v1411, 0.001953125
  %v1421 = vmul.f32 %v1419, 0.001953125
  %v1422 = vmul.f32 %v1420, %v1420
  %v1423 = vsub.f32 %v1421, %v1422
  %v1424 = vadd.f32 %v1423, 1e-05
  %v1425 = vrsqrt.pop %v1424
  %v1426 = vld [vmem:[%s4] sm:$0xf]
  %v1427 = vmul.f32 %v1426, %v1425
  %v1428 = vld [vmem:[%s5] sm:$0xf]
  %v1429 = vmul.f32 %v1420, %v1427
  %v1430 = vsub.f32 %v1428, %v1429
  %1432 = vset.pattern.permute.xlu0 0
  %1433 = vperm.xlu0 %1432, %v1427
  %v1434 = vpop.permute.xlu0 %1433
  %v1436 = vmul.f32 %v852, %v1434
  %v1437 = vmul.f32 %v853, %v1434
  %1439 = vset.pattern.permute.xlu0 0
  %1440 = vperm.xlu0 %1439, %v1430
  %v1441 = vpop.permute.xlu0 %1440
  %v1443 = vadd.f32 %v1436, %v1441
  %v1444 = vadd.f32 %v1437, %v1441
  %v1445 = vmax.f32 %v1443, 0.0
  %v1446 = vmax.f32 %v1444, 0.0
  %v1447 = vmul.f32 %v1391, %v1434
  %v1448 = vmul.f32 %v1392, %v1434
  %v1449 = vadd.f32 %v1447, %v1441
  %v1450 = vadd.f32 %v1448, %v1441
  %v1451 = vmax.f32 %v1449, 0.0
  %v1452 = vmax.f32 %v1450, 0.0
  %1453 = vrot.lane.b32.xlu0 %v1445, 17
  %v1454 = vpop.permute.xlu0 %1453
  %1455 = vrot.lane.b32.xlu0 %v1446, 17
  %v1456 = vpop.permute.xlu0 %1455
  %v1457 = vsel %vm41, %v1454, %v1456
  %v1458 = vsel %vm41, %v1456, %v1454
  %v1459 = vmul.f32 %v1458, %v49
  %v1460 = vmul.f32 %v1457, %v53
  %v1461 = vld [vmem:[%s3] sm:$0xf]
  %1463 = vset.pattern.permute.xlu0 0
  %1464 = vperm.xlu0 %1463, %v1461
  %v1465 = vpop.permute.xlu0 %1464
  %v1467 = vlaneseq
  %v1468 = vshrl.u32 %v1467, 7
  %v1469 = vsub.s32 0, %v1468
  %v1470 = vrot.slane %v1459, %v1469
  %v1471 = vlaneseq
  %v1472 = vshrl.u32 %v1471, 7
  %v1473 = vsub.s32 0, %v1472
  %v1474 = vrot.slane %v1460, %v1473
  %v1475 = vmul.f32 %v1465, %v1470
  %v1476 = vmul.f32 %v1465, %v1474
  %v1477 = vadd.f32 %v1475, 0.0
  %v1478 = vadd.f32 %v1476, 0.0
  %1479 = vset.pattern.permute.xlu0 1
  %1480 = vperm.xlu0 %1479, %v1461
  %v1481 = vpop.permute.xlu0 %1480
  %v1483 = vlaneseq
  %v1484 = vshrl.u32 %v1483, 7
  %v1485 = vsub.s32 1, %v1484
  %v1486 = vrot.slane %v1459, %v1485
  %v1487 = vlaneseq
  %v1488 = vshrl.u32 %v1487, 7
  %v1489 = vsub.s32 1, %v1488
  %v1490 = vrot.slane %v1460, %v1489
  %v1491 = vmul.f32 %v1481, %v1486
  %v1492 = vmul.f32 %v1481, %v1490
  %v1493 = vadd.f32 %v1477, %v1491
  %v1494 = vadd.f32 %v1478, %v1492
  %1495 = vset.pattern.permute.xlu0 2
  %1496 = vperm.xlu0 %1495, %v1461
  %v1497 = vpop.permute.xlu0 %1496
  %v1499 = vlaneseq
  %v1500 = vshrl.u32 %v1499, 7
  %v1501 = vsub.s32 2, %v1500
  %v1502 = vrot.slane %v1459, %v1501
  %v1503 = vlaneseq
  %v1504 = vshrl.u32 %v1503, 7
  %v1505 = vsub.s32 2, %v1504
  %v1506 = vrot.slane %v1460, %v1505
  %v1507 = vmul.f32 %v1497, %v1502
  %v1508 = vmul.f32 %v1497, %v1506
  %v1509 = vadd.f32 %v1493, %v1507
  %v1510 = vadd.f32 %v1494, %v1508
  %1511 = vset.pattern.permute.xlu0 3
  %1512 = vperm.xlu0 %1511, %v1461
  %v1513 = vpop.permute.xlu0 %1512
  %v1515 = vlaneseq
  %v1516 = vshrl.u32 %v1515, 7
  %v1517 = vsub.s32 3, %v1516
  %v1518 = vrot.slane %v1459, %v1517
  %v1519 = vlaneseq
  %v1520 = vshrl.u32 %v1519, 7
  %v1521 = vsub.s32 3, %v1520
  %v1522 = vrot.slane %v1460, %v1521
  %v1523 = vmul.f32 %v1513, %v1518
  %v1524 = vmul.f32 %v1513, %v1522
  %v1525 = vadd.f32 %v1509, %v1523
  %v1526 = vadd.f32 %v1510, %v1524
  %1527 = vrot.lane.b32.xlu0 %v1445, 16
  %v1528 = vpop.permute.xlu0 %1527
  %1529 = vrot.lane.b32.xlu0 %v1446, 16
  %v1530 = vpop.permute.xlu0 %1529
  %v1531 = vsel %vm128, %v1528, %v1530
  %v1532 = vsel %vm128, %v1530, %v1528
  %v1533 = vmul.f32 %v1532, %v137
  %v1534 = vmul.f32 %v1531, %v141
  %s1535 = scalar_lea.vmem %s3, 4
  %v1536 = vld [vmem:[%s1535] sm:$0xf]
  %1538 = vset.pattern.permute.xlu0 0
  %1539 = vperm.xlu0 %1538, %v1536
  %v1540 = vpop.permute.xlu0 %1539
  %v1542 = vlaneseq
  %v1543 = vshrl.u32 %v1542, 7
  %v1544 = vsub.s32 0, %v1543
  %v1545 = vrot.slane %v1533, %v1544
  %v1546 = vlaneseq
  %v1547 = vshrl.u32 %v1546, 7
  %v1548 = vsub.s32 0, %v1547
  %v1549 = vrot.slane %v1534, %v1548
  %v1550 = vmul.f32 %v1540, %v1545
  %v1551 = vmul.f32 %v1540, %v1549
  %v1552 = vadd.f32 %v1525, %v1550
  %v1553 = vadd.f32 %v1526, %v1551
  %1554 = vset.pattern.permute.xlu0 1
  %1555 = vperm.xlu0 %1554, %v1536
  %v1556 = vpop.permute.xlu0 %1555
  %v1558 = vlaneseq
  %v1559 = vshrl.u32 %v1558, 7
  %v1560 = vsub.s32 1, %v1559
  %v1561 = vrot.slane %v1533, %v1560
  %v1562 = vlaneseq
  %v1563 = vshrl.u32 %v1562, 7
  %v1564 = vsub.s32 1, %v1563
  %v1565 = vrot.slane %v1534, %v1564
  %v1566 = vmul.f32 %v1556, %v1561
  %v1567 = vmul.f32 %v1556, %v1565
  %v1568 = vadd.f32 %v1552, %v1566
  %v1569 = vadd.f32 %v1553, %v1567
  %1570 = vset.pattern.permute.xlu0 2
  %1571 = vperm.xlu0 %1570, %v1536
  %v1572 = vpop.permute.xlu0 %1571
  %v1574 = vlaneseq
  %v1575 = vshrl.u32 %v1574, 7
  %v1576 = vsub.s32 2, %v1575
  %v1577 = vrot.slane %v1533, %v1576
  %v1578 = vlaneseq
  %v1579 = vshrl.u32 %v1578, 7
  %v1580 = vsub.s32 2, %v1579
  %v1581 = vrot.slane %v1534, %v1580
  %v1582 = vmul.f32 %v1572, %v1577
  %v1583 = vmul.f32 %v1572, %v1581
  %v1584 = vadd.f32 %v1568, %v1582
  %v1585 = vadd.f32 %v1569, %v1583
  %1586 = vset.pattern.permute.xlu0 3
  %1587 = vperm.xlu0 %1586, %v1536
  %v1588 = vpop.permute.xlu0 %1587
  %v1590 = vlaneseq
  %v1591 = vshrl.u32 %v1590, 7
  %v1592 = vsub.s32 3, %v1591
  %v1593 = vrot.slane %v1533, %v1592
  %v1594 = vlaneseq
  %v1595 = vshrl.u32 %v1594, 7
  %v1596 = vsub.s32 3, %v1595
  %v1597 = vrot.slane %v1534, %v1596
  %v1598 = vmul.f32 %v1588, %v1593
  %v1599 = vmul.f32 %v1588, %v1597
  %v1600 = vadd.f32 %v1584, %v1598
  %v1601 = vadd.f32 %v1585, %v1599
  %1602 = vrot.lane.b32.xlu0 %v1445, 15
  %v1603 = vpop.permute.xlu0 %1602
  %1604 = vrot.lane.b32.xlu0 %v1446, 15
  %v1605 = vpop.permute.xlu0 %1604
  %v1606 = vsel %vm217, %v1603, %v1605
  %v1607 = vsel %vm217, %v1605, %v1603
  %v1608 = vmul.f32 %v1607, %v226
  %v1609 = vmul.f32 %v1606, %v230
  %s1610 = scalar_lea.vmem %s3, 8
  %v1611 = vld [vmem:[%s1610] sm:$0xf]
  %1613 = vset.pattern.permute.xlu0 0
  %1614 = vperm.xlu0 %1613, %v1611
  %v1615 = vpop.permute.xlu0 %1614
  %v1617 = vlaneseq
  %v1618 = vshrl.u32 %v1617, 7
  %v1619 = vsub.s32 0, %v1618
  %v1620 = vrot.slane %v1608, %v1619
  %v1621 = vlaneseq
  %v1622 = vshrl.u32 %v1621, 7
  %v1623 = vsub.s32 0, %v1622
  %v1624 = vrot.slane %v1609, %v1623
  %v1625 = vmul.f32 %v1615, %v1620
  %v1626 = vmul.f32 %v1615, %v1624
  %v1627 = vadd.f32 %v1600, %v1625
  %v1628 = vadd.f32 %v1601, %v1626
  %1629 = vset.pattern.permute.xlu0 1
  %1630 = vperm.xlu0 %1629, %v1611
  %v1631 = vpop.permute.xlu0 %1630
  %v1633 = vlaneseq
  %v1634 = vshrl.u32 %v1633, 7
  %v1635 = vsub.s32 1, %v1634
  %v1636 = vrot.slane %v1608, %v1635
  %v1637 = vlaneseq
  %v1638 = vshrl.u32 %v1637, 7
  %v1639 = vsub.s32 1, %v1638
  %v1640 = vrot.slane %v1609, %v1639
  %v1641 = vmul.f32 %v1631, %v1636
  %v1642 = vmul.f32 %v1631, %v1640
  %v1643 = vadd.f32 %v1627, %v1641
  %v1644 = vadd.f32 %v1628, %v1642
  %1645 = vset.pattern.permute.xlu0 2
  %1646 = vperm.xlu0 %1645, %v1611
  %v1647 = vpop.permute.xlu0 %1646
  %v1649 = vlaneseq
  %v1650 = vshrl.u32 %v1649, 7
  %v1651 = vsub.s32 2, %v1650
  %v1652 = vrot.slane %v1608, %v1651
  %v1653 = vlaneseq
  %v1654 = vshrl.u32 %v1653, 7
  %v1655 = vsub.s32 2, %v1654
  %v1656 = vrot.slane %v1609, %v1655
  %v1657 = vmul.f32 %v1647, %v1652
  %v1658 = vmul.f32 %v1647, %v1656
  %v1659 = vadd.f32 %v1643, %v1657
  %v1660 = vadd.f32 %v1644, %v1658
  %1661 = vset.pattern.permute.xlu0 3
  %1662 = vperm.xlu0 %1661, %v1611
  %v1663 = vpop.permute.xlu0 %1662
  %v1665 = vlaneseq
  %v1666 = vshrl.u32 %v1665, 7
  %v1667 = vsub.s32 3, %v1666
  %v1668 = vrot.slane %v1608, %v1667
  %v1669 = vlaneseq
  %v1670 = vshrl.u32 %v1669, 7
  %v1671 = vsub.s32 3, %v1670
  %v1672 = vrot.slane %v1609, %v1671
  %v1673 = vmul.f32 %v1663, %v1668
  %v1674 = vmul.f32 %v1663, %v1672
  %v1675 = vadd.f32 %v1659, %v1673
  %v1676 = vadd.f32 %v1660, %v1674
  %1677 = vrot.lane.b32.xlu0 %v1445, 1
  %v1678 = vpop.permute.xlu0 %1677
  %1679 = vrot.lane.b32.xlu0 %v1446, 1
  %v1680 = vpop.permute.xlu0 %1679
  %v1681 = vsel %vm306, %v1678, %v1680
  %v1682 = vsel %vm306, %v1680, %v1678
  %v1683 = vmul.f32 %v1682, %v315
  %v1684 = vmul.f32 %v1681, %v319
  %s1685 = scalar_lea.vmem %s3, 12
  %v1686 = vld [vmem:[%s1685] sm:$0xf]
  %1688 = vset.pattern.permute.xlu0 0
  %1689 = vperm.xlu0 %1688, %v1686
  %v1690 = vpop.permute.xlu0 %1689
  %v1692 = vlaneseq
  %v1693 = vshrl.u32 %v1692, 7
  %v1694 = vsub.s32 0, %v1693
  %v1695 = vrot.slane %v1683, %v1694
  %v1696 = vlaneseq
  %v1697 = vshrl.u32 %v1696, 7
  %v1698 = vsub.s32 0, %v1697
  %v1699 = vrot.slane %v1684, %v1698
  %v1700 = vmul.f32 %v1690, %v1695
  %v1701 = vmul.f32 %v1690, %v1699
  %v1702 = vadd.f32 %v1675, %v1700
  %v1703 = vadd.f32 %v1676, %v1701
  %1704 = vset.pattern.permute.xlu0 1
  %1705 = vperm.xlu0 %1704, %v1686
  %v1706 = vpop.permute.xlu0 %1705
  %v1708 = vlaneseq
  %v1709 = vshrl.u32 %v1708, 7
  %v1710 = vsub.s32 1, %v1709
  %v1711 = vrot.slane %v1683, %v1710
  %v1712 = vlaneseq
  %v1713 = vshrl.u32 %v1712, 7
  %v1714 = vsub.s32 1, %v1713
  %v1715 = vrot.slane %v1684, %v1714
  %v1716 = vmul.f32 %v1706, %v1711
  %v1717 = vmul.f32 %v1706, %v1715
  %v1718 = vadd.f32 %v1702, %v1716
  %v1719 = vadd.f32 %v1703, %v1717
  %1720 = vset.pattern.permute.xlu0 2
  %1721 = vperm.xlu0 %1720, %v1686
  %v1722 = vpop.permute.xlu0 %1721
  %v1724 = vlaneseq
  %v1725 = vshrl.u32 %v1724, 7
  %v1726 = vsub.s32 2, %v1725
  %v1727 = vrot.slane %v1683, %v1726
  %v1728 = vlaneseq
  %v1729 = vshrl.u32 %v1728, 7
  %v1730 = vsub.s32 2, %v1729
  %v1731 = vrot.slane %v1684, %v1730
  %v1732 = vmul.f32 %v1722, %v1727
  %v1733 = vmul.f32 %v1722, %v1731
  %v1734 = vadd.f32 %v1718, %v1732
  %v1735 = vadd.f32 %v1719, %v1733
  %1736 = vset.pattern.permute.xlu0 3
  %1737 = vperm.xlu0 %1736, %v1686
  %v1738 = vpop.permute.xlu0 %1737
  %v1740 = vlaneseq
  %v1741 = vshrl.u32 %v1740, 7
  %v1742 = vsub.s32 3, %v1741
  %v1743 = vrot.slane %v1683, %v1742
  %v1744 = vlaneseq
  %v1745 = vshrl.u32 %v1744, 7
  %v1746 = vsub.s32 3, %v1745
  %v1747 = vrot.slane %v1684, %v1746
  %v1748 = vmul.f32 %v1738, %v1743
  %v1749 = vmul.f32 %v1738, %v1747
  %v1750 = vadd.f32 %v1734, %v1748
  %v1751 = vadd.f32 %v1735, %v1749
  %s1752 = scalar_lea.vmem %s3, 16
  %v1753 = vld [vmem:[%s1752] sm:$0xf]
  %1755 = vset.pattern.permute.xlu0 0
  %1756 = vperm.xlu0 %1755, %v1753
  %v1757 = vpop.permute.xlu0 %1756
  %v1759 = vlaneseq
  %v1760 = vshrl.u32 %v1759, 7
  %v1761 = vsub.s32 0, %v1760
  %v1762 = vrot.slane %v1445, %v1761
  %v1763 = vlaneseq
  %v1764 = vshrl.u32 %v1763, 7
  %v1765 = vsub.s32 0, %v1764
  %v1766 = vrot.slane %v1446, %v1765
  %v1767 = vmul.f32 %v1757, %v1762
  %v1768 = vmul.f32 %v1757, %v1766
  %v1769 = vadd.f32 %v1750, %v1767
  %v1770 = vadd.f32 %v1751, %v1768
  %1771 = vset.pattern.permute.xlu0 1
  %1772 = vperm.xlu0 %1771, %v1753
  %v1773 = vpop.permute.xlu0 %1772
  %v1775 = vlaneseq
  %v1776 = vshrl.u32 %v1775, 7
  %v1777 = vsub.s32 1, %v1776
  %v1778 = vrot.slane %v1445, %v1777
  %v1779 = vlaneseq
  %v1780 = vshrl.u32 %v1779, 7
  %v1781 = vsub.s32 1, %v1780
  %v1782 = vrot.slane %v1446, %v1781
  %v1783 = vmul.f32 %v1773, %v1778
  %v1784 = vmul.f32 %v1773, %v1782
  %v1785 = vadd.f32 %v1769, %v1783
  %v1786 = vadd.f32 %v1770, %v1784
  %1787 = vset.pattern.permute.xlu0 2
  %1788 = vperm.xlu0 %1787, %v1753
  %v1789 = vpop.permute.xlu0 %1788
  %v1791 = vlaneseq
  %v1792 = vshrl.u32 %v1791, 7
  %v1793 = vsub.s32 2, %v1792
  %v1794 = vrot.slane %v1445, %v1793
  %v1795 = vlaneseq
  %v1796 = vshrl.u32 %v1795, 7
  %v1797 = vsub.s32 2, %v1796
  %v1798 = vrot.slane %v1446, %v1797
  %v1799 = vmul.f32 %v1789, %v1794
  %v1800 = vmul.f32 %v1789, %v1798
  %v1801 = vadd.f32 %v1785, %v1799
  %v1802 = vadd.f32 %v1786, %v1800
  %1803 = vset.pattern.permute.xlu0 3
  %1804 = vperm.xlu0 %1803, %v1753
  %v1805 = vpop.permute.xlu0 %1804
  %v1807 = vlaneseq
  %v1808 = vshrl.u32 %v1807, 7
  %v1809 = vsub.s32 3, %v1808
  %v1810 = vrot.slane %v1445, %v1809
  %v1811 = vlaneseq
  %v1812 = vshrl.u32 %v1811, 7
  %v1813 = vsub.s32 3, %v1812
  %v1814 = vrot.slane %v1446, %v1813
  %v1815 = vmul.f32 %v1805, %v1810
  %v1816 = vmul.f32 %v1805, %v1814
  %v1817 = vadd.f32 %v1801, %v1815
  %v1818 = vadd.f32 %v1802, %v1816
  %1819 = vrot.lane.b32.xlu0 %v1445, 127
  %v1820 = vpop.permute.xlu0 %1819
  %1821 = vrot.lane.b32.xlu0 %v1446, 127
  %v1822 = vpop.permute.xlu0 %1821
  %v1823 = vsel %vm502, %v1820, %v1822
  %v1824 = vsel %vm502, %v1822, %v1820
  %v1825 = vmul.f32 %v1823, %v511
  %v1826 = vmul.f32 %v1824, %v515
  %s1827 = scalar_lea.vmem %s3, 20
  %v1828 = vld [vmem:[%s1827] sm:$0xf]
  %1830 = vset.pattern.permute.xlu0 0
  %1831 = vperm.xlu0 %1830, %v1828
  %v1832 = vpop.permute.xlu0 %1831
  %v1834 = vlaneseq
  %v1835 = vshrl.u32 %v1834, 7
  %v1836 = vsub.s32 0, %v1835
  %v1837 = vrot.slane %v1825, %v1836
  %v1838 = vlaneseq
  %v1839 = vshrl.u32 %v1838, 7
  %v1840 = vsub.s32 0, %v1839
  %v1841 = vrot.slane %v1826, %v1840
  %v1842 = vmul.f32 %v1832, %v1837
  %v1843 = vmul.f32 %v1832, %v1841
  %v1844 = vadd.f32 %v1817, %v1842
  %v1845 = vadd.f32 %v1818, %v1843
  %1846 = vset.pattern.permute.xlu0 1
  %1847 = vperm.xlu0 %1846, %v1828
  %v1848 = vpop.permute.xlu0 %1847
  %v1850 = vlaneseq
  %v1851 = vshrl.u32 %v1850, 7
  %v1852 = vsub.s32 1, %v1851
  %v1853 = vrot.slane %v1825, %v1852
  %v1854 = vlaneseq
  %v1855 = vshrl.u32 %v1854, 7
  %v1856 = vsub.s32 1, %v1855
  %v1857 = vrot.slane %v1826, %v1856
  %v1858 = vmul.f32 %v1848, %v1853
  %v1859 = vmul.f32 %v1848, %v1857
  %v1860 = vadd.f32 %v1844, %v1858
  %v1861 = vadd.f32 %v1845, %v1859
  %1862 = vset.pattern.permute.xlu0 2
  %1863 = vperm.xlu0 %1862, %v1828
  %v1864 = vpop.permute.xlu0 %1863
  %v1866 = vlaneseq
  %v1867 = vshrl.u32 %v1866, 7
  %v1868 = vsub.s32 2, %v1867
  %v1869 = vrot.slane %v1825, %v1868
  %v1870 = vlaneseq
  %v1871 = vshrl.u32 %v1870, 7
  %v1872 = vsub.s32 2, %v1871
  %v1873 = vrot.slane %v1826, %v1872
  %v1874 = vmul.f32 %v1864, %v1869
  %v1875 = vmul.f32 %v1864, %v1873
  %v1876 = vadd.f32 %v1860, %v1874
  %v1877 = vadd.f32 %v1861, %v1875
  %1878 = vset.pattern.permute.xlu0 3
  %1879 = vperm.xlu0 %1878, %v1828
  %v1880 = vpop.permute.xlu0 %1879
  %v1882 = vlaneseq
  %v1883 = vshrl.u32 %v1882, 7
  %v1884 = vsub.s32 3, %v1883
  %v1885 = vrot.slane %v1825, %v1884
  %v1886 = vlaneseq
  %v1887 = vshrl.u32 %v1886, 7
  %v1888 = vsub.s32 3, %v1887
  %v1889 = vrot.slane %v1826, %v1888
  %v1890 = vmul.f32 %v1880, %v1885
  %v1891 = vmul.f32 %v1880, %v1889
  %v1892 = vadd.f32 %v1876, %v1890
  %v1893 = vadd.f32 %v1877, %v1891
  %1894 = vrot.lane.b32.xlu0 %v1445, 113
  %v1895 = vpop.permute.xlu0 %1894
  %1896 = vrot.lane.b32.xlu0 %v1446, 113
  %v1897 = vpop.permute.xlu0 %1896
  %v1898 = vsel %vm591, %v1895, %v1897
  %v1899 = vsel %vm591, %v1897, %v1895
  %v1900 = vmul.f32 %v1898, %v600
  %v1901 = vmul.f32 %v1899, %v604
  %s1902 = scalar_lea.vmem %s3, 24
  %v1903 = vld [vmem:[%s1902] sm:$0xf]
  %1905 = vset.pattern.permute.xlu0 0
  %1906 = vperm.xlu0 %1905, %v1903
  %v1907 = vpop.permute.xlu0 %1906
  %v1909 = vlaneseq
  %v1910 = vshrl.u32 %v1909, 7
  %v1911 = vsub.s32 0, %v1910
  %v1912 = vrot.slane %v1900, %v1911
  %v1913 = vlaneseq
  %v1914 = vshrl.u32 %v1913, 7
  %v1915 = vsub.s32 0, %v1914
  %v1916 = vrot.slane %v1901, %v1915
  %v1917 = vmul.f32 %v1907, %v1912
  %v1918 = vmul.f32 %v1907, %v1916
  %v1919 = vadd.f32 %v1892, %v1917
  %v1920 = vadd.f32 %v1893, %v1918
  %1921 = vset.pattern.permute.xlu0 1
  %1922 = vperm.xlu0 %1921, %v1903
  %v1923 = vpop.permute.xlu0 %1922
  %v1925 = vlaneseq
  %v1926 = vshrl.u32 %v1925, 7
  %v1927 = vsub.s32 1, %v1926
  %v1928 = vrot.slane %v1900, %v1927
  %v1929 = vlaneseq
  %v1930 = vshrl.u32 %v1929, 7
  %v1931 = vsub.s32 1, %v1930
  %v1932 = vrot.slane %v1901, %v1931
  %v1933 = vmul.f32 %v1923, %v1928
  %v1934 = vmul.f32 %v1923, %v1932
  %v1935 = vadd.f32 %v1919, %v1933
  %v1936 = vadd.f32 %v1920, %v1934
  %1937 = vset.pattern.permute.xlu0 2
  %1938 = vperm.xlu0 %1937, %v1903
  %v1939 = vpop.permute.xlu0 %1938
  %v1941 = vlaneseq
  %v1942 = vshrl.u32 %v1941, 7
  %v1943 = vsub.s32 2, %v1942
  %v1944 = vrot.slane %v1900, %v1943
  %v1945 = vlaneseq
  %v1946 = vshrl.u32 %v1945, 7
  %v1947 = vsub.s32 2, %v1946
  %v1948 = vrot.slane %v1901, %v1947
  %v1949 = vmul.f32 %v1939, %v1944
  %v1950 = vmul.f32 %v1939, %v1948
  %v1951 = vadd.f32 %v1935, %v1949
  %v1952 = vadd.f32 %v1936, %v1950
  %1953 = vset.pattern.permute.xlu0 3
  %1954 = vperm.xlu0 %1953, %v1903
  %v1955 = vpop.permute.xlu0 %1954
  %v1957 = vlaneseq
  %v1958 = vshrl.u32 %v1957, 7
  %v1959 = vsub.s32 3, %v1958
  %v1960 = vrot.slane %v1900, %v1959
  %v1961 = vlaneseq
  %v1962 = vshrl.u32 %v1961, 7
  %v1963 = vsub.s32 3, %v1962
  %v1964 = vrot.slane %v1901, %v1963
  %v1965 = vmul.f32 %v1955, %v1960
  %v1966 = vmul.f32 %v1955, %v1964
  %v1967 = vadd.f32 %v1951, %v1965
  %v1968 = vadd.f32 %v1952, %v1966
  %1969 = vrot.lane.b32.xlu0 %v1445, 112
  %v1970 = vpop.permute.xlu0 %1969
  %1971 = vrot.lane.b32.xlu0 %v1446, 112
  %v1972 = vpop.permute.xlu0 %1971
  %v1973 = vsel %vm680, %v1970, %v1972
  %v1974 = vsel %vm680, %v1972, %v1970
  %v1975 = vmul.f32 %v1973, %v689
  %v1976 = vmul.f32 %v1974, %v693
  %s1977 = scalar_lea.vmem %s3, 28
  %v1978 = vld [vmem:[%s1977] sm:$0xf]
  %1980 = vset.pattern.permute.xlu0 0
  %1981 = vperm.xlu0 %1980, %v1978
  %v1982 = vpop.permute.xlu0 %1981
  %v1984 = vlaneseq
  %v1985 = vshrl.u32 %v1984, 7
  %v1986 = vsub.s32 0, %v1985
  %v1987 = vrot.slane %v1975, %v1986
  %v1988 = vlaneseq
  %v1989 = vshrl.u32 %v1988, 7
  %v1990 = vsub.s32 0, %v1989
  %v1991 = vrot.slane %v1976, %v1990
  %v1992 = vmul.f32 %v1982, %v1987
  %v1993 = vmul.f32 %v1982, %v1991
  %v1994 = vadd.f32 %v1967, %v1992
  %v1995 = vadd.f32 %v1968, %v1993
  %1996 = vset.pattern.permute.xlu0 1
  %1997 = vperm.xlu0 %1996, %v1978
  %v1998 = vpop.permute.xlu0 %1997
  %v2000 = vlaneseq
  %v2001 = vshrl.u32 %v2000, 7
  %v2002 = vsub.s32 1, %v2001
  %v2003 = vrot.slane %v1975, %v2002
  %v2004 = vlaneseq
  %v2005 = vshrl.u32 %v2004, 7
  %v2006 = vsub.s32 1, %v2005
  %v2007 = vrot.slane %v1976, %v2006
  %v2008 = vmul.f32 %v1998, %v2003
  %v2009 = vmul.f32 %v1998, %v2007
  %v2010 = vadd.f32 %v1994, %v2008
  %v2011 = vadd.f32 %v1995, %v2009
  %2012 = vset.pattern.permute.xlu0 2
  %2013 = vperm.xlu0 %2012, %v1978
  %v2014 = vpop.permute.xlu0 %2013
  %v2016 = vlaneseq
  %v2017 = vshrl.u32 %v2016, 7
  %v2018 = vsub.s32 2, %v2017
  %v2019 = vrot.slane %v1975, %v2018
  %v2020 = vlaneseq
  %v2021 = vshrl.u32 %v2020, 7
  %v2022 = vsub.s32 2, %v2021
  %v2023 = vrot.slane %v1976, %v2022
  %v2024 = vmul.f32 %v2014, %v2019
  %v2025 = vmul.f32 %v2014, %v2023
  %v2026 = vadd.f32 %v2010, %v2024
  %v2027 = vadd.f32 %v2011, %v2025
  %2028 = vset.pattern.permute.xlu0 3
  %2029 = vperm.xlu0 %2028, %v1978
  %v2030 = vpop.permute.xlu0 %2029
  %v2032 = vlaneseq
  %v2033 = vshrl.u32 %v2032, 7
  %v2034 = vsub.s32 3, %v2033
  %v2035 = vrot.slane %v1975, %v2034
  %v2036 = vlaneseq
  %v2037 = vshrl.u32 %v2036, 7
  %v2038 = vsub.s32 3, %v2037
  %v2039 = vrot.slane %v1976, %v2038
  %v2040 = vmul.f32 %v2030, %v2035
  %v2041 = vmul.f32 %v2030, %v2039
  %v2042 = vadd.f32 %v2026, %v2040
  %v2043 = vadd.f32 %v2027, %v2041
  %2044 = vrot.lane.b32.xlu0 %v1445, 111
  %v2045 = vpop.permute.xlu0 %2044
  %2046 = vrot.lane.b32.xlu0 %v1446, 111
  %v2047 = vpop.permute.xlu0 %2046
  %v2048 = vsel %vm769, %v2045, %v2047
  %v2049 = vsel %vm769, %v2047, %v2045
  %v2050 = vmul.f32 %v2048, %v778
  %v2051 = vmul.f32 %v2049, %v782
  %s2052 = scalar_lea.vmem %s3, 32
  %v2053 = vld [vmem:[%s2052] sm:$0xf]
  %2055 = vset.pattern.permute.xlu0 0
  %2056 = vperm.xlu0 %2055, %v2053
  %v2057 = vpop.permute.xlu0 %2056
  %v2059 = vlaneseq
  %v2060 = vshrl.u32 %v2059, 7
  %v2061 = vsub.s32 0, %v2060
  %v2062 = vrot.slane %v2050, %v2061
  %v2063 = vlaneseq
  %v2064 = vshrl.u32 %v2063, 7
  %v2065 = vsub.s32 0, %v2064
  %v2066 = vrot.slane %v2051, %v2065
  %v2067 = vmul.f32 %v2057, %v2062
  %v2068 = vmul.f32 %v2057, %v2066
  %v2069 = vadd.f32 %v2042, %v2067
  %v2070 = vadd.f32 %v2043, %v2068
  %2071 = vset.pattern.permute.xlu0 1
  %2072 = vperm.xlu0 %2071, %v2053
  %v2073 = vpop.permute.xlu0 %2072
  %v2075 = vlaneseq
  %v2076 = vshrl.u32 %v2075, 7
  %v2077 = vsub.s32 1, %v2076
  %v2078 = vrot.slane %v2050, %v2077
  %v2079 = vlaneseq
  %v2080 = vshrl.u32 %v2079, 7
  %v2081 = vsub.s32 1, %v2080
  %v2082 = vrot.slane %v2051, %v2081
  %v2083 = vmul.f32 %v2073, %v2078
  %v2084 = vmul.f32 %v2073, %v2082
  %v2085 = vadd.f32 %v2069, %v2083
  %v2086 = vadd.f32 %v2070, %v2084
  %2087 = vset.pattern.permute.xlu0 2
  %2088 = vperm.xlu0 %2087, %v2053
  %v2089 = vpop.permute.xlu0 %2088
  %v2091 = vlaneseq
  %v2092 = vshrl.u32 %v2091, 7
  %v2093 = vsub.s32 2, %v2092
  %v2094 = vrot.slane %v2050, %v2093
  %v2095 = vlaneseq
  %v2096 = vshrl.u32 %v2095, 7
  %v2097 = vsub.s32 2, %v2096
  %v2098 = vrot.slane %v2051, %v2097
  %v2099 = vmul.f32 %v2089, %v2094
  %v2100 = vmul.f32 %v2089, %v2098
  %v2101 = vadd.f32 %v2085, %v2099
  %v2102 = vadd.f32 %v2086, %v2100
  %2103 = vset.pattern.permute.xlu0 3
  %2104 = vperm.xlu0 %2103, %v2053
  %v2105 = vpop.permute.xlu0 %2104
  %v2107 = vlaneseq
  %v2108 = vshrl.u32 %v2107, 7
  %v2109 = vsub.s32 3, %v2108
  %v2110 = vrot.slane %v2050, %v2109
  %v2111 = vlaneseq
  %v2112 = vshrl.u32 %v2111, 7
  %v2113 = vsub.s32 3, %v2112
  %v2114 = vrot.slane %v2051, %v2113
  %v2115 = vmul.f32 %v2105, %v2110
  %v2116 = vmul.f32 %v2105, %v2114
  %v2117 = vadd.f32 %v2101, %v2115
  %v2118 = vadd.f32 %v2102, %v2116
  %2119 = vrot.lane.b32.xlu0 %v1451, 17
  %v2120 = vpop.permute.xlu0 %2119
  %2121 = vrot.lane.b32.xlu0 %v1452, 17
  %v2122 = vpop.permute.xlu0 %2121
  %v2123 = vsel %vm41, %v2120, %v2122
  %v2124 = vsel %vm41, %v2122, %v2120
  %v2125 = vmul.f32 %v2124, %v49
  %v2126 = vmul.f32 %v2123, %v53
  %v2127 = vlaneseq
  %v2128 = vshrl.u32 %v2127, 7
  %v2129 = vsub.s32 0, %v2128
  %v2130 = vrot.slane %v2125, %v2129
  %v2131 = vlaneseq
  %v2132 = vshrl.u32 %v2131, 7
  %v2133 = vsub.s32 0, %v2132
  %v2134 = vrot.slane %v2126, %v2133
  %v2135 = vmul.f32 %v1465, %v2130
  %v2136 = vmul.f32 %v1465, %v2134
  %v2137 = vadd.f32 %v2135, 0.0
  %v2138 = vadd.f32 %v2136, 0.0
  %v2139 = vlaneseq
  %v2140 = vshrl.u32 %v2139, 7
  %v2141 = vsub.s32 1, %v2140
  %v2142 = vrot.slane %v2125, %v2141
  %v2143 = vlaneseq
  %v2144 = vshrl.u32 %v2143, 7
  %v2145 = vsub.s32 1, %v2144
  %v2146 = vrot.slane %v2126, %v2145
  %v2147 = vmul.f32 %v1481, %v2142
  %v2148 = vmul.f32 %v1481, %v2146
  %v2149 = vadd.f32 %v2137, %v2147
  %v2150 = vadd.f32 %v2138, %v2148
  %v2151 = vlaneseq
  %v2152 = vshrl.u32 %v2151, 7
  %v2153 = vsub.s32 2, %v2152
  %v2154 = vrot.slane %v2125, %v2153
  %v2155 = vlaneseq
  %v2156 = vshrl.u32 %v2155, 7
  %v2157 = vsub.s32 2, %v2156
  %v2158 = vrot.slane %v2126, %v2157
  %v2159 = vmul.f32 %v1497, %v2154
  %v2160 = vmul.f32 %v1497, %v2158
  %v2161 = vadd.f32 %v2149, %v2159
  %v2162 = vadd.f32 %v2150, %v2160
  %v2163 = vlaneseq
  %v2164 = vshrl.u32 %v2163, 7
  %v2165 = vsub.s32 3, %v2164
  %v2166 = vrot.slane %v2125, %v2165
  %v2167 = vlaneseq
  %v2168 = vshrl.u32 %v2167, 7
  %v2169 = vsub.s32 3, %v2168
  %v2170 = vrot.slane %v2126, %v2169
  %v2171 = vmul.f32 %v1513, %v2166
  %v2172 = vmul.f32 %v1513, %v2170
  %v2173 = vadd.f32 %v2161, %v2171
  %v2174 = vadd.f32 %v2162, %v2172
  %2175 = vrot.lane.b32.xlu0 %v1451, 16
  %v2176 = vpop.permute.xlu0 %2175
  %2177 = vrot.lane.b32.xlu0 %v1452, 16
  %v2178 = vpop.permute.xlu0 %2177
  %v2179 = vsel %vm128, %v2176, %v2178
  %v2180 = vsel %vm128, %v2178, %v2176
  %v2181 = vmul.f32 %v2180, %v137
  %v2182 = vmul.f32 %v2179, %v141
  %v2183 = vlaneseq
  %v2184 = vshrl.u32 %v2183, 7
  %v2185 = vsub.s32 0, %v2184
  %v2186 = vrot.slane %v2181, %v2185
  %v2187 = vlaneseq
  %v2188 = vshrl.u32 %v2187, 7
  %v2189 = vsub.s32 0, %v2188
  %v2190 = vrot.slane %v2182, %v2189
  %v2191 = vmul.f32 %v1540, %v2186
  %v2192 = vmul.f32 %v1540, %v2190
  %v2193 = vadd.f32 %v2173, %v2191
  %v2194 = vadd.f32 %v2174, %v2192
  %v2195 = vlaneseq
  %v2196 = vshrl.u32 %v2195, 7
  %v2197 = vsub.s32 1, %v2196
  %v2198 = vrot.slane %v2181, %v2197
  %v2199 = vlaneseq
  %v2200 = vshrl.u32 %v2199, 7
  %v2201 = vsub.s32 1, %v2200
  %v2202 = vrot.slane %v2182, %v2201
  %v2203 = vmul.f32 %v1556, %v2198
  %v2204 = vmul.f32 %v1556, %v2202
  %v2205 = vadd.f32 %v2193, %v2203
  %v2206 = vadd.f32 %v2194, %v2204
  %v2207 = vlaneseq
  %v2208 = vshrl.u32 %v2207, 7
  %v2209 = vsub.s32 2, %v2208
  %v2210 = vrot.slane %v2181, %v2209
  %v2211 = vlaneseq
  %v2212 = vshrl.u32 %v2211, 7
  %v2213 = vsub.s32 2, %v2212
  %v2214 = vrot.slane %v2182, %v2213
  %v2215 = vmul.f32 %v1572, %v2210
  %v2216 = vmul.f32 %v1572, %v2214
  %v2217 = vadd.f32 %v2205, %v2215
  %v2218 = vadd.f32 %v2206, %v2216
  %v2219 = vlaneseq
  %v2220 = vshrl.u32 %v2219, 7
  %v2221 = vsub.s32 3, %v2220
  %v2222 = vrot.slane %v2181, %v2221
  %v2223 = vlaneseq
  %v2224 = vshrl.u32 %v2223, 7
  %v2225 = vsub.s32 3, %v2224
  %v2226 = vrot.slane %v2182, %v2225
  %v2227 = vmul.f32 %v1588, %v2222
  %v2228 = vmul.f32 %v1588, %v2226
  %v2229 = vadd.f32 %v2217, %v2227
  %v2230 = vadd.f32 %v2218, %v2228
  %2231 = vrot.lane.b32.xlu0 %v1451, 15
  %v2232 = vpop.permute.xlu0 %2231
  %2233 = vrot.lane.b32.xlu0 %v1452, 15
  %v2234 = vpop.permute.xlu0 %2233
  %v2235 = vsel %vm217, %v2232, %v2234
  %v2236 = vsel %vm217, %v2234, %v2232
  %v2237 = vmul.f32 %v2236, %v226
  %v2238 = vmul.f32 %v2235, %v230
  %v2239 = vlaneseq
  %v2240 = vshrl.u32 %v2239, 7
  %v2241 = vsub.s32 0, %v2240
  %v2242 = vrot.slane %v2237, %v2241
  %v2243 = vlaneseq
  %v2244 = vshrl.u32 %v2243, 7
  %v2245 = vsub.s32 0, %v2244
  %v2246 = vrot.slane %v2238, %v2245
  %v2247 = vmul.f32 %v1615, %v2242
  %v2248 = vmul.f32 %v1615, %v2246
  %v2249 = vadd.f32 %v2229, %v2247
  %v2250 = vadd.f32 %v2230, %v2248
  %v2251 = vlaneseq
  %v2252 = vshrl.u32 %v2251, 7
  %v2253 = vsub.s32 1, %v2252
  %v2254 = vrot.slane %v2237, %v2253
  %v2255 = vlaneseq
  %v2256 = vshrl.u32 %v2255, 7
  %v2257 = vsub.s32 1, %v2256
  %v2258 = vrot.slane %v2238, %v2257
  %v2259 = vmul.f32 %v1631, %v2254
  %v2260 = vmul.f32 %v1631, %v2258
  %v2261 = vadd.f32 %v2249, %v2259
  %v2262 = vadd.f32 %v2250, %v2260
  %v2263 = vlaneseq
  %v2264 = vshrl.u32 %v2263, 7
  %v2265 = vsub.s32 2, %v2264
  %v2266 = vrot.slane %v2237, %v2265
  %v2267 = vlaneseq
  %v2268 = vshrl.u32 %v2267, 7
  %v2269 = vsub.s32 2, %v2268
  %v2270 = vrot.slane %v2238, %v2269
  %v2271 = vmul.f32 %v1647, %v2266
  %v2272 = vmul.f32 %v1647, %v2270
  %v2273 = vadd.f32 %v2261, %v2271
  %v2274 = vadd.f32 %v2262, %v2272
  %v2275 = vlaneseq
  %v2276 = vshrl.u32 %v2275, 7
  %v2277 = vsub.s32 3, %v2276
  %v2278 = vrot.slane %v2237, %v2277
  %v2279 = vlaneseq
  %v2280 = vshrl.u32 %v2279, 7
  %v2281 = vsub.s32 3, %v2280
  %v2282 = vrot.slane %v2238, %v2281
  %v2283 = vmul.f32 %v1663, %v2278
  %v2284 = vmul.f32 %v1663, %v2282
  %v2285 = vadd.f32 %v2273, %v2283
  %v2286 = vadd.f32 %v2274, %v2284
  %2287 = vrot.lane.b32.xlu0 %v1451, 1
  %v2288 = vpop.permute.xlu0 %2287
  %2289 = vrot.lane.b32.xlu0 %v1452, 1
  %v2290 = vpop.permute.xlu0 %2289
  %v2291 = vsel %vm306, %v2288, %v2290
  %v2292 = vsel %vm306, %v2290, %v2288
  %v2293 = vmul.f32 %v2292, %v315
  %v2294 = vmul.f32 %v2291, %v319
  %v2295 = vlaneseq
  %v2296 = vshrl.u32 %v2295, 7
  %v2297 = vsub.s32 0, %v2296
  %v2298 = vrot.slane %v2293, %v2297
  %v2299 = vlaneseq
  %v2300 = vshrl.u32 %v2299, 7
  %v2301 = vsub.s32 0, %v2300
  %v2302 = vrot.slane %v2294, %v2301
  %v2303 = vmul.f32 %v1690, %v2298
  %v2304 = vmul.f32 %v1690, %v2302
  %v2305 = vadd.f32 %v2285, %v2303
  %v2306 = vadd.f32 %v2286, %v2304
  %v2307 = vlaneseq
  %v2308 = vshrl.u32 %v2307, 7
  %v2309 = vsub.s32 1, %v2308
  %v2310 = vrot.slane %v2293, %v2309
  %v2311 = vlaneseq
  %v2312 = vshrl.u32 %v2311, 7
  %v2313 = vsub.s32 1, %v2312
  %v2314 = vrot.slane %v2294, %v2313
  %v2315 = vmul.f32 %v1706, %v2310
  %v2316 = vmul.f32 %v1706, %v2314
  %v2317 = vadd.f32 %v2305, %v2315
  %v2318 = vadd.f32 %v2306, %v2316
  %v2319 = vlaneseq
  %v2320 = vshrl.u32 %v2319, 7
  %v2321 = vsub.s32 2, %v2320
  %v2322 = vrot.slane %v2293, %v2321
  %v2323 = vlaneseq
  %v2324 = vshrl.u32 %v2323, 7
  %v2325 = vsub.s32 2, %v2324
  %v2326 = vrot.slane %v2294, %v2325
  %v2327 = vmul.f32 %v1722, %v2322
  %v2328 = vmul.f32 %v1722, %v2326
  %v2329 = vadd.f32 %v2317, %v2327
  %v2330 = vadd.f32 %v2318, %v2328
  %v2331 = vlaneseq
  %v2332 = vshrl.u32 %v2331, 7
  %v2333 = vsub.s32 3, %v2332
  %v2334 = vrot.slane %v2293, %v2333
  %v2335 = vlaneseq
  %v2336 = vshrl.u32 %v2335, 7
  %v2337 = vsub.s32 3, %v2336
  %v2338 = vrot.slane %v2294, %v2337
  %v2339 = vmul.f32 %v1738, %v2334
  %v2340 = vmul.f32 %v1738, %v2338
  %v2341 = vadd.f32 %v2329, %v2339
  %v2342 = vadd.f32 %v2330, %v2340
  %v2343 = vlaneseq
  %v2344 = vshrl.u32 %v2343, 7
  %v2345 = vsub.s32 0, %v2344
  %v2346 = vrot.slane %v1451, %v2345
  %v2347 = vlaneseq
  %v2348 = vshrl.u32 %v2347, 7
  %v2349 = vsub.s32 0, %v2348
  %v2350 = vrot.slane %v1452, %v2349
  %v2351 = vmul.f32 %v1757, %v2346
  %v2352 = vmul.f32 %v1757, %v2350
  %v2353 = vadd.f32 %v2341, %v2351
  %v2354 = vadd.f32 %v2342, %v2352
  %v2355 = vlaneseq
  %v2356 = vshrl.u32 %v2355, 7
  %v2357 = vsub.s32 1, %v2356
  %v2358 = vrot.slane %v1451, %v2357
  %v2359 = vlaneseq
  %v2360 = vshrl.u32 %v2359, 7
  %v2361 = vsub.s32 1, %v2360
  %v2362 = vrot.slane %v1452, %v2361
  %v2363 = vmul.f32 %v1773, %v2358
  %v2364 = vmul.f32 %v1773, %v2362
  %v2365 = vadd.f32 %v2353, %v2363
  %v2366 = vadd.f32 %v2354, %v2364
  %v2367 = vlaneseq
  %v2368 = vshrl.u32 %v2367, 7
  %v2369 = vsub.s32 2, %v2368
  %v2370 = vrot.slane %v1451, %v2369
  %v2371 = vlaneseq
  %v2372 = vshrl.u32 %v2371, 7
  %v2373 = vsub.s32 2, %v2372
  %v2374 = vrot.slane %v1452, %v2373
  %v2375 = vmul.f32 %v1789, %v2370
  %v2376 = vmul.f32 %v1789, %v2374
  %v2377 = vadd.f32 %v2365, %v2375
  %v2378 = vadd.f32 %v2366, %v2376
  %v2379 = vlaneseq
  %v2380 = vshrl.u32 %v2379, 7
  %v2381 = vsub.s32 3, %v2380
  %v2382 = vrot.slane %v1451, %v2381
  %v2383 = vlaneseq
  %v2384 = vshrl.u32 %v2383, 7
  %v2385 = vsub.s32 3, %v2384
  %v2386 = vrot.slane %v1452, %v2385
  %v2387 = vmul.f32 %v1805, %v2382
  %v2388 = vmul.f32 %v1805, %v2386
  %v2389 = vadd.f32 %v2377, %v2387
  %v2390 = vadd.f32 %v2378, %v2388
  %2391 = vrot.lane.b32.xlu0 %v1451, 127
  %v2392 = vpop.permute.xlu0 %2391
  %2393 = vrot.lane.b32.xlu0 %v1452, 127
  %v2394 = vpop.permute.xlu0 %2393
  %v2395 = vsel %vm502, %v2392, %v2394
  %v2396 = vsel %vm502, %v2394, %v2392
  %v2397 = vmul.f32 %v2395, %v511
  %v2398 = vmul.f32 %v2396, %v515
  %v2399 = vlaneseq
  %v2400 = vshrl.u32 %v2399, 7
  %v2401 = vsub.s32 0, %v2400
  %v2402 = vrot.slane %v2397, %v2401
  %v2403 = vlaneseq
  %v2404 = vshrl.u32 %v2403, 7
  %v2405 = vsub.s32 0, %v2404
  %v2406 = vrot.slane %v2398, %v2405
  %v2407 = vmul.f32 %v1832, %v2402
  %v2408 = vmul.f32 %v1832, %v2406
  %v2409 = vadd.f32 %v2389, %v2407
  %v2410 = vadd.f32 %v2390, %v2408
  %v2411 = vlaneseq
  %v2412 = vshrl.u32 %v2411, 7
  %v2413 = vsub.s32 1, %v2412
  %v2414 = vrot.slane %v2397, %v2413
  %v2415 = vlaneseq
  %v2416 = vshrl.u32 %v2415, 7
  %v2417 = vsub.s32 1, %v2416
  %v2418 = vrot.slane %v2398, %v2417
  %v2419 = vmul.f32 %v1848, %v2414
  %v2420 = vmul.f32 %v1848, %v2418
  %v2421 = vadd.f32 %v2409, %v2419
  %v2422 = vadd.f32 %v2410, %v2420
  %v2423 = vlaneseq
  %v2424 = vshrl.u32 %v2423, 7
  %v2425 = vsub.s32 2, %v2424
  %v2426 = vrot.slane %v2397, %v2425
  %v2427 = vlaneseq
  %v2428 = vshrl.u32 %v2427, 7
  %v2429 = vsub.s32 2, %v2428
  %v2430 = vrot.slane %v2398, %v2429
  %v2431 = vmul.f32 %v1864, %v2426
  %v2432 = vmul.f32 %v1864, %v2430
  %v2433 = vadd.f32 %v2421, %v2431
  %v2434 = vadd.f32 %v2422, %v2432
  %v2435 = vlaneseq
  %v2436 = vshrl.u32 %v2435, 7
  %v2437 = vsub.s32 3, %v2436
  %v2438 = vrot.slane %v2397, %v2437
  %v2439 = vlaneseq
  %v2440 = vshrl.u32 %v2439, 7
  %v2441 = vsub.s32 3, %v2440
  %v2442 = vrot.slane %v2398, %v2441
  %v2443 = vmul.f32 %v1880, %v2438
  %v2444 = vmul.f32 %v1880, %v2442
  %v2445 = vadd.f32 %v2433, %v2443
  %v2446 = vadd.f32 %v2434, %v2444
  %2447 = vrot.lane.b32.xlu0 %v1451, 113
  %v2448 = vpop.permute.xlu0 %2447
  %2449 = vrot.lane.b32.xlu0 %v1452, 113
  %v2450 = vpop.permute.xlu0 %2449
  %v2451 = vsel %vm591, %v2448, %v2450
  %v2452 = vsel %vm591, %v2450, %v2448
  %v2453 = vmul.f32 %v2451, %v600
  %v2454 = vmul.f32 %v2452, %v604
  %v2455 = vlaneseq
  %v2456 = vshrl.u32 %v2455, 7
  %v2457 = vsub.s32 0, %v2456
  %v2458 = vrot.slane %v2453, %v2457
  %v2459 = vlaneseq
  %v2460 = vshrl.u32 %v2459, 7
  %v2461 = vsub.s32 0, %v2460
  %v2462 = vrot.slane %v2454, %v2461
  %v2463 = vmul.f32 %v1907, %v2458
  %v2464 = vmul.f32 %v1907, %v2462
  %v2465 = vadd.f32 %v2445, %v2463
  %v2466 = vadd.f32 %v2446, %v2464
  %v2467 = vlaneseq
  %v2468 = vshrl.u32 %v2467, 7
  %v2469 = vsub.s32 1, %v2468
  %v2470 = vrot.slane %v2453, %v2469
  %v2471 = vlaneseq
  %v2472 = vshrl.u32 %v2471, 7
  %v2473 = vsub.s32 1, %v2472
  %v2474 = vrot.slane %v2454, %v2473
  %v2475 = vmul.f32 %v1923, %v2470
  %v2476 = vmul.f32 %v1923, %v2474
  %v2477 = vadd.f32 %v2465, %v2475
  %v2478 = vadd.f32 %v2466, %v2476
  %v2479 = vlaneseq
  %v2480 = vshrl.u32 %v2479, 7
  %v2481 = vsub.s32 2, %v2480
  %v2482 = vrot.slane %v2453, %v2481
  %v2483 = vlaneseq
  %v2484 = vshrl.u32 %v2483, 7
  %v2485 = vsub.s32 2, %v2484
  %v2486 = vrot.slane %v2454, %v2485
  %v2487 = vmul.f32 %v1939, %v2482
  %v2488 = vmul.f32 %v1939, %v2486
  %v2489 = vadd.f32 %v2477, %v2487
  %v2490 = vadd.f32 %v2478, %v2488
  %v2491 = vlaneseq
  %v2492 = vshrl.u32 %v2491, 7
  %v2493 = vsub.s32 3, %v2492
  %v2494 = vrot.slane %v2453, %v2493
  %v2495 = vlaneseq
  %v2496 = vshrl.u32 %v2495, 7
  %v2497 = vsub.s32 3, %v2496
  %v2498 = vrot.slane %v2454, %v2497
  %v2499 = vmul.f32 %v1955, %v2494
  %v2500 = vmul.f32 %v1955, %v2498
  %v2501 = vadd.f32 %v2489, %v2499
  %v2502 = vadd.f32 %v2490, %v2500
  %2503 = vrot.lane.b32.xlu0 %v1451, 112
  %v2504 = vpop.permute.xlu0 %2503
  %2505 = vrot.lane.b32.xlu0 %v1452, 112
  %v2506 = vpop.permute.xlu0 %2505
  %v2507 = vsel %vm680, %v2504, %v2506
  %v2508 = vsel %vm680, %v2506, %v2504
  %v2509 = vmul.f32 %v2507, %v689
  %v2510 = vmul.f32 %v2508, %v693
  %v2511 = vlaneseq
  %v2512 = vshrl.u32 %v2511, 7
  %v2513 = vsub.s32 0, %v2512
  %v2514 = vrot.slane %v2509, %v2513
  %v2515 = vlaneseq
  %v2516 = vshrl.u32 %v2515, 7
  %v2517 = vsub.s32 0, %v2516
  %v2518 = vrot.slane %v2510, %v2517
  %v2519 = vmul.f32 %v1982, %v2514
  %v2520 = vmul.f32 %v1982, %v2518
  %v2521 = vadd.f32 %v2501, %v2519
  %v2522 = vadd.f32 %v2502, %v2520
  %v2523 = vlaneseq
  %v2524 = vshrl.u32 %v2523, 7
  %v2525 = vsub.s32 1, %v2524
  %v2526 = vrot.slane %v2509, %v2525
  %v2527 = vlaneseq
  %v2528 = vshrl.u32 %v2527, 7
  %v2529 = vsub.s32 1, %v2528
  %v2530 = vrot.slane %v2510, %v2529
  %v2531 = vmul.f32 %v1998, %v2526
  %v2532 = vmul.f32 %v1998, %v2530
  %v2533 = vadd.f32 %v2521, %v2531
  %v2534 = vadd.f32 %v2522, %v2532
  %v2535 = vlaneseq
  %v2536 = vshrl.u32 %v2535, 7
  %v2537 = vsub.s32 2, %v2536
  %v2538 = vrot.slane %v2509, %v2537
  %v2539 = vlaneseq
  %v2540 = vshrl.u32 %v2539, 7
  %v2541 = vsub.s32 2, %v2540
  %v2542 = vrot.slane %v2510, %v2541
  %v2543 = vmul.f32 %v2014, %v2538
  %v2544 = vmul.f32 %v2014, %v2542
  %v2545 = vadd.f32 %v2533, %v2543
  %v2546 = vadd.f32 %v2534, %v2544
  %v2547 = vlaneseq
  %v2548 = vshrl.u32 %v2547, 7
  %v2549 = vsub.s32 3, %v2548
  %v2550 = vrot.slane %v2509, %v2549
  %v2551 = vlaneseq
  %v2552 = vshrl.u32 %v2551, 7
  %v2553 = vsub.s32 3, %v2552
  %v2554 = vrot.slane %v2510, %v2553
  %v2555 = vmul.f32 %v2030, %v2550
  %v2556 = vmul.f32 %v2030, %v2554
  %v2557 = vadd.f32 %v2545, %v2555
  %v2558 = vadd.f32 %v2546, %v2556
  %2559 = vrot.lane.b32.xlu0 %v1451, 111
  %v2560 = vpop.permute.xlu0 %2559
  %2561 = vrot.lane.b32.xlu0 %v1452, 111
  %v2562 = vpop.permute.xlu0 %2561
  %v2563 = vsel %vm769, %v2560, %v2562
  %v2564 = vsel %vm769, %v2562, %v2560
  %v2565 = vmul.f32 %v2563, %v778
  %v2566 = vmul.f32 %v2564, %v782
  %v2567 = vlaneseq
  %v2568 = vshrl.u32 %v2567, 7
  %v2569 = vsub.s32 0, %v2568
  %v2570 = vrot.slane %v2565, %v2569
  %v2571 = vlaneseq
  %v2572 = vshrl.u32 %v2571, 7
  %v2573 = vsub.s32 0, %v2572
  %v2574 = vrot.slane %v2566, %v2573
  %v2575 = vmul.f32 %v2057, %v2570
  %v2576 = vmul.f32 %v2057, %v2574
  %v2577 = vadd.f32 %v2557, %v2575
  %v2578 = vadd.f32 %v2558, %v2576
  %v2579 = vlaneseq
  %v2580 = vshrl.u32 %v2579, 7
  %v2581 = vsub.s32 1, %v2580
  %v2582 = vrot.slane %v2565, %v2581
  %v2583 = vlaneseq
  %v2584 = vshrl.u32 %v2583, 7
  %v2585 = vsub.s32 1, %v2584
  %v2586 = vrot.slane %v2566, %v2585
  %v2587 = vmul.f32 %v2073, %v2582
  %v2588 = vmul.f32 %v2073, %v2586
  %v2589 = vadd.f32 %v2577, %v2587
  %v2590 = vadd.f32 %v2578, %v2588
  %v2591 = vlaneseq
  %v2592 = vshrl.u32 %v2591, 7
  %v2593 = vsub.s32 2, %v2592
  %v2594 = vrot.slane %v2565, %v2593
  %v2595 = vlaneseq
  %v2596 = vshrl.u32 %v2595, 7
  %v2597 = vsub.s32 2, %v2596
  %v2598 = vrot.slane %v2566, %v2597
  %v2599 = vmul.f32 %v2089, %v2594
  %v2600 = vmul.f32 %v2089, %v2598
  %v2601 = vadd.f32 %v2589, %v2599
  %v2602 = vadd.f32 %v2590, %v2600
  %v2603 = vlaneseq
  %v2604 = vshrl.u32 %v2603, 7
  %v2605 = vsub.s32 3, %v2604
  %v2606 = vrot.slane %v2565, %v2605
  %v2607 = vlaneseq
  %v2608 = vshrl.u32 %v2607, 7
  %v2609 = vsub.s32 3, %v2608
  %v2610 = vrot.slane %v2566, %v2609
  %v2611 = vmul.f32 %v2105, %v2606
  %v2612 = vmul.f32 %v2105, %v2610
  %v2613 = vadd.f32 %v2601, %v2611
  %v2614 = vadd.f32 %v2602, %v2612
  %v2615 = vsel %vm1393, %v2117, 0.0
  %v2616 = vsel %vm1393, %v2118, 0.0
  %v2617 = vadd.f32 %v2615, %v2616
  %2618 = vadd.xlane.f32.xlu0 %v2617
  %v2619 = vpop.xlane.xlu0 %2618
  %v2620 = vmul.f32 %v2117, %v2117
  %v2621 = vmul.f32 %v2118, %v2118
  %v2622 = vsel %vm1393, %v2620, 0.0
  %v2623 = vsel %vm1393, %v2621, 0.0
  %v2624 = vadd.f32 %v2622, %v2623
  %2625 = vadd.xlane.f32.xlu0 %v2624
  %v2626 = vpop.xlane.xlu0 %2625
  %v2627 = vsel %vm1393, %v2613, 0.0
  %v2628 = vsel %vm1393, %v2614, 0.0
  %v2629 = vadd.f32 %v2627, %v2628
  %2630 = vadd.xlane.f32.xlu0 %v2629
  %v2631 = vpop.xlane.xlu0 %2630
  %v2632 = vadd.f32 %v2619, %v2631
  %v2633 = vmul.f32 %v2613, %v2613
  %v2634 = vmul.f32 %v2614, %v2614
  %v2635 = vsel %vm1393, %v2633, 0.0
  %v2636 = vsel %vm1393, %v2634, 0.0
  %v2637 = vadd.f32 %v2635, %v2636
  %2638 = vadd.xlane.f32.xlu0 %v2637
  %v2639 = vpop.xlane.xlu0 %2638
  %v2640 = vadd.f32 %v2626, %v2639
  %v2641 = vmul.f32 %v2632, 0.001953125
  %v2642 = vmul.f32 %v2640, 0.001953125
  %v2643 = vmul.f32 %v2641, %v2641
  %v2644 = vsub.f32 %v2642, %v2643
  %v2645 = vadd.f32 %v2644, 1e-05
  %v2646 = vrsqrt.pop %v2645
  %v2647 = vld [vmem:[%s6] sm:$0xf]
  %v2648 = vmul.f32 %v2647, %v2646
  %v2649 = vld [vmem:[%s7] sm:$0xf]
  %v2650 = vmul.f32 %v2641, %v2648
  %v2651 = vsub.f32 %v2649, %v2650
  %2653 = vset.pattern.permute.xlu0 0
  %2654 = vperm.xlu0 %2653, %v2648
  %v2655 = vpop.permute.xlu0 %2654
  %v2657 = vmul.f32 %v2117, %v2655
  %v2658 = vmul.f32 %v2118, %v2655
  %2660 = vset.pattern.permute.xlu0 0
  %2661 = vperm.xlu0 %2660, %v2651
  %v2662 = vpop.permute.xlu0 %2661
  %v2664 = vadd.f32 %v2657, %v2662
  %v2665 = vadd.f32 %v2658, %v2662
  %v2666 = vadd.f32 %v2664, %v29
  %v2667 = vadd.f32 %v2665, %v33
  %v2668 = vmax.f32 %v2666, 0.0
  %v2669 = vmax.f32 %v2667, 0.0
  %v2672 = vcombine.low %v2668, %v2669
  %2674 = vst [vmem:[%s8] sm:$0xff] %v2672
  %v2675 = vmul.f32 %v2613, %v2655
  %v2676 = vmul.f32 %v2614, %v2655
  %v2677 = vadd.f32 %v2675, %v2662
  %v2678 = vadd.f32 %v2676, %v2662
  %v2679 = vadd.f32 %v2677, %v31
  %v2680 = vadd.f32 %v2678, %v855
  %v2681 = vmax.f32 %v2679, 0.0
  %v2682 = vmax.f32 %v2680, 0.0
  %v2685 = vcombine.low %v2681, %v2682
  %s2687 = scalar_lea.vmem %s8, 8
  %2688 = vst [vmem:[%s2687] sm:$0xff] %v2685
  // Predicated region
  $region34: #{basic_block_forward.1} parent=0 // pred_check
    _
  $region35: #{basic_block_forward.1} parent=0 // pred_check_branch
    %2690 = sbr.rel (0) target = $region37
  $region36: #{basic_block_forward.1} parent=0 // pred_region
    _
  $region37: #{basic_block_forward.1} parent=0 // pred_fallthru
    _
  // Predicated region
  $region38: #{basic_block_forward.1} parent=0 // pred_check
    _
  $region39: #{basic_block_forward.1} parent=0 // pred_check_branch
    %2692 = sbr.rel (0) target = $region41
  $region40: #{basic_block_forward.1} parent=0 // pred_region
    _
  $region41: #{basic_block_forward.1} parent=0 // pred_fallthru
    _

</llo_original>
